<compile_context>
chip_gen: v7x
topology: tpu7x:2x2x1
jax: 0.10.0
libtpu: 0.0.40
codegen_flags: <defaults>
</compile_context>

<pallas_src>
import jax
import jax.numpy as jnp
import numpy as np
from jax.experimental import pallas as pl
from jax.experimental.pallas import tpu as pltpu

K = 3                 # conv kernel size everywhere
C_OUT = 48            # `connect` output channels
C_OUT_PAD = 128       # lane-dense padded output channel dim
PREC = jax.lax.Precision.HIGHEST


def _swish(v):
    return v * jax.nn.sigmoid(v)


# ----------------------------- the fused kernel -----------------------------

def _head_kernel(patches_ref, wstem_ref, shstem_ref,
                 wdw0_ref, shdw0_ref,
                 wse10_ref, bse10_ref, wse20_ref, bse20_ref,
                 wf0_ref, bf0_ref,
                 wdw1_ref, shdw1_ref, sel_ref,
                 wse11_ref, bse11_ref, wse21_ref, bse21_ref,
                 wf1_ref, bf1_ref,
                 o_ref,
                 x0p_ref, e1p_ref):
    """One grid step == one image.  Stem output, block0 output and block1's expand
    activation all stay in VMEM; the only HBM traffic is the im2col'ed input patches,
    the tiny weights and the final lane-dense (P1, 128) output slab."""
    f32 = jnp.float32
    hp, wp, c0 = x0p_ref.shape          # (10, 10, 32)
    h0, w0 = hp - 2, wp - 2             # 8, 8  (stem / block0 spatial)
    p0 = h0 * w0                        # 64
    c1 = e1p_ref.shape[-1]              # 96
    p1 = sel_ref.shape[0]               # 16   (block1 spatial positions)

    # ---- stem: im2col matmul (BN scale folded into the weight) + shift + swish ----
    x0 = jnp.dot(patches_ref[0], wstem_ref[...], preferred_element_type=f32)
    x0 = _swish(x0 + shstem_ref[...])                              # (p0, c0)

    # ---- block 0: depthwise 3x3, stride 1, pad (1,1) via shifted VMEM slices ----
    x0p_ref[...] = jnp.zeros_like(x0p_ref)
    x0p_ref[1:1 + h0, 1:1 + w0, :] = x0.reshape(h0, w0, c0)
    wdw0 = wdw0_ref[...]
    acc0 = None
    t = 0
    for dh in range(K):                                            # unrolled, 9 taps
        for dw in range(K):
            term = x0p_ref[dh:dh + h0, dw:dw + w0, :] * wdw0[t]
            acc0 = term if acc0 is None else acc0 + term
            t += 1
    y0 = _swish(acc0.reshape(p0, c0) + shdw0_ref[...])             # (p0, c0)

    # squeeze-excite 0 (global mean over this image's p0 positions)
    s0 = jnp.sum(y0, axis=0, keepdims=True) * (1.0 / p0)
    h_se0 = _swish(jnp.dot(s0, wse10_ref[...], preferred_element_type=f32)
                   + bse10_ref[...])
    g0 = jax.nn.sigmoid(jnp.dot(h_se0, wse20_ref[...], preferred_element_type=f32)
                        + bse20_ref[...])
    y0 = y0 * g0

    # project0(+BN) algebraically fused with block1's expand(+BN): one MXU pass, then swish
    e1 = _swish(jnp.dot(y0, wf0_ref[...], preferred_element_type=f32) + bf0_ref[...])

    # ---- block 1: depthwise 3x3, stride 2, TF-'same' pad (0,1)x(0,1) ----
    # Accumulate the stride-1 taps over the zero-padded activation, then pick the 4x4
    # stride-2 grid with a tiny selection matmul (MXU) instead of strided slicing.
    e1p_ref[...] = jnp.zeros_like(e1p_ref)
    e1p_ref[0:h0, 0:w0, :] = e1.reshape(h0, w0, c1)
    wdw1 = wdw1_ref[...]
    acc1 = None
    t = 0
    for dh in range(K):
        for dw in range(K):
            term = e1p_ref[dh:dh + h0, dw:dw + w0, :] * wdw1[t]
            acc1 = term if acc1 is None else acc1 + term
            t += 1
    y1 = jnp.dot(sel_ref[...], acc1.reshape(p0, c1), preferred_element_type=f32)
    y1 = _swish(y1 + shdw1_ref[...])                               # (p1, c1)

    # squeeze-excite 1
    s1 = jnp.sum(y1, axis=0, keepdims=True) * (1.0 / p1)
    h_se1 = _swish(jnp.dot(s1, wse11_ref[...], preferred_element_type=f32)
                   + bse11_ref[...])
    g1 = jax.nn.sigmoid(jnp.dot(h_se1, wse21_ref[...], preferred_element_type=f32)
                        + bse21_ref[...])
    y1 = y1 * g1

    # project1(+BN) fused with `connect` (+bias); output lane-padded to 128 for dense stores
    out = jnp.dot(y1, wf1_ref[...], preferred_element_type=f32) + bf1_ref[...]
    o_ref[0] = out.astype(o_ref.dtype)                             # (p1, 128)


# ----------------------------- wrapper glue -----------------------------

def _full(shape):
    zeros = (0,) * len(shape)
    return pl.BlockSpec(shape, lambda n: zeros)


def _pad_se(w1, b1, w2):
    # Zero-pad the SE hidden dim up to a multiple of 8 (exact: swish(0) == 0).
    pad = (-w1.shape[1]) % 8
    if pad:
        w1 = jnp.pad(w1, ((0, 0), (0, pad)))
        b1 = jnp.pad(b1, ((0, pad),))
        w2 = jnp.pad(w2, ((0, pad), (0, 0)))
    return w1, b1, w2


def _stride2_select(h_in, w_in):
    # (h_in//2 * w_in//2, h_in*w_in) one-hot matrix picking the stride-2 grid.
    h_out, w_out = h_in // 2, w_in // 2
    sel = np.zeros((h_out * w_out, h_in * w_in), np.float32)
    for i in range(h_out):
        for j in range(w_out):
            sel[i * w_out + j, (2 * i) * w_in + 2 * j] = 1.0
    return jnp.asarray(sel)


@jax.jit
def headmodel_forward(x_nchw, p):
    x = jnp.transpose(x_nchw, (0, 2, 3, 1)).astype(jnp.float32)        # NCHW -> NHWC
    N, H, W, Cin = x.shape
    Ho, Wo = H // 2, W // 2                                             # stem/block0 spatial
    H1, W1 = Ho // 2, Wo // 2                                           # block1/connect spatial
    P0, P1 = Ho * Wo, H1 * W1

    # ---- stem im2col (input-side XLA prep only; everything downstream stays in VMEM) ----
    xp = jnp.pad(x, ((0, 0), (0, 1), (0, 1), (0, 0)))                   # TF-'same' for k3 s2
    cols = [xp[:, dh:dh + 2 * (Ho - 1) + 1:2, dw:dw + 2 * (Wo - 1) + 1:2, :]
            for dh in range(K) for dw in range(K)]
    patches = jnp.concatenate(cols, axis=-1).reshape(N, P0, K * K * Cin)
    kpad = (-patches.shape[-1]) % 8                                      # 27 -> 32 contraction
    patches = jnp.pad(patches, ((0, 0), (0, 0), (0, kpad)))
    ck = patches.shape[-1]

    c0 = p['w_stem'].shape[-1]                                           # 32
    w_stem = (p['w_stem'] * p['s_stem']).reshape(K * K * Cin, c0)        # fold BN scale
    w_stem = jnp.pad(w_stem, ((0, kpad), (0, 0)))

    # folded depthwise weights
    wdw0 = (p['w_dw0'] * p['s_dw0']).reshape(K * K, c0)
    c1 = p['w_exp1'].shape[-1]                                           # 96
    wdw1 = (p['w_dw1'] * p['s_dw1']).reshape(K * K, c1)

    # SE weights (hidden dim zero-padded to a multiple of 8)
    w1a, b1a, w2a = _pad_se(p['w_se1_0'], p['b_se1_0'], p['w_se2_0'])
    w1b, b1b, w2b = _pad_se(p['w_se1_1'], p['b_se1_1'], p['w_se2_1'])
    cse0, cse1 = w1a.shape[-1], w1b.shape[-1]

    # project-1x1 algebraically fused with the next 1x1 (no nonlinearity in between)
    we1 = p['w_exp1'] * p['s_exp1']
    wf0 = jnp.matmul(p['w_proj0'] * p['s_proj0'], we1, precision=PREC)          # (32, 96)
    bf0 = jnp.matmul(p['sh_proj0'], we1, precision=PREC) + p['sh_exp1']         # (96,)
    wf1 = jnp.matmul(p['w_proj1'] * p['s_proj1'], p['w_conn'], precision=PREC)  # (96, 48)
    bf1 = jnp.matmul(p['sh_proj1'], p['w_conn'], precision=PREC) + p['b_conn']  # (48,)
    c_conn = wf1.shape[-1]
    wf1 = jnp.pad(wf1, ((0, 0), (0, C_OUT_PAD - c_conn)))               # lane-dense output
    bf1 = jnp.pad(bf1, ((0, C_OUT_PAD - c_conn),))

    sel = _stride2_select(Ho, Wo)                                        # (16, 64)

    out = pl.pallas_call(
        _head_kernel,
        out_shape=jax.ShapeDtypeStruct((N, P1, C_OUT_PAD), jnp.float32),
        grid=(N,),                                   # one image per step; parallel for v7x megacore
        in_specs=[
            pl.BlockSpec((1, P0, ck), lambda n: (n, 0, 0)),
            _full((ck, c0)), _full((1, c0)),
            _full((K * K, c0)), _full((1, c0)),
            _full((c0, cse0)), _full((1, cse0)), _full((cse0, c0)), _full((1, c0)),
            _full((c0, c1)), _full((1, c1)),
            _full((K * K, c1)), _full((1, c1)), _full((P1, P0)),
            _full((c1, cse1)), _full((1, cse1)), _full((cse1, c1)), _full((1, c1)),
            _full((c1, C_OUT_PAD)), _full((1, C_OUT_PAD)),
        ],
        out_specs=pl.BlockSpec((1, P1, C_OUT_PAD), lambda n: (n, 0, 0)),
        scratch_shapes=[pltpu.VMEM((Ho + 2, Wo + 2, c0), jnp.float32),
                        pltpu.VMEM((Ho + 2, Wo + 2, c1), jnp.float32)],
        compiler_params=pltpu.CompilerParams(dimension_semantics=("parallel",)),
    )(patches, w_stem, p['sh_stem'].reshape(1, c0),
      wdw0, p['sh_dw0'].reshape(1, c0),
      w1a, b1a.reshape(1, cse0), w2a, p['b_se2_0'].reshape(1, c0),
      wf0, bf0.reshape(1, c1),
      wdw1, p['sh_dw1'].reshape(1, c1), sel,
      w1b, b1b.reshape(1, cse1), w2b, p['b_se2_1'].reshape(1, c1),
      wf1, bf1.reshape(1, C_OUT_PAD))

    out = out[:, :, :c_conn].reshape(N, H1, W1, c_conn)
    return jnp.transpose(out, (0, 3, 1, 2))                              # NHWC -> NCHW


# ----------------------------- parameters -----------------------------

def _bn_fold(key, c, eps=1e-3):
    kg, kb, km, kv = jax.random.split(key, 4)
    gamma = 1.0 + 0.1 * jax.random.normal(kg, (c,), jnp.float32)
    beta = 0.1 * jax.random.normal(kb, (c,), jnp.float32)
    mean = 0.1 * jax.random.normal(km, (c,), jnp.float32)
    var = 0.9 + 0.1 * jnp.abs(jax.random.normal(kv, (c,), jnp.float32))
    scale = gamma / jnp.sqrt(var + eps)
    shift = beta - mean * scale
    return scale, shift


def init_params(key):
    # Synthetic deterministic params with the exact b0 head shapes (no checkpoint).
    keys = iter(jax.random.split(key, 24))
    nk = lambda: next(keys)
    p = {}
    p['w_stem'] = 0.3 * jax.random.normal(nk(), (3, 3, 3, 32), jnp.float32)
    p['s_stem'], p['sh_stem'] = _bn_fold(nk(), 32)
    # block 0: expand_ratio=1 (no expand conv), dw3x3 s1, SE 32->8->32, project 32->16
    p['w_dw0'] = 0.3 * jax.random.normal(nk(), (3, 3, 32), jnp.float32)
    p['s_dw0'], p['sh_dw0'] = _bn_fold(nk(), 32)
    p['w_se1_0'] = 0.2 * jax.random.normal(nk(), (32, 8), jnp.float32)
    p['b_se1_0'] = 0.1 * jax.random.normal(nk(), (8,), jnp.float32)
    p['w_se2_0'] = 0.2 * jax.random.normal(nk(), (8, 32), jnp.float32)
    p['b_se2_0'] = 0.1 * jax.random.normal(nk(), (32,), jnp.float32)
    p['w_proj0'] = 0.2 * jax.random.normal(nk(), (32, 16), jnp.float32)
    p['s_proj0'], p['sh_proj0'] = _bn_fold(nk(), 16)
    # block 1: expand_ratio=6, dw3x3 s2, SE 96->4->96, project 96->24
    p['w_exp1'] = 0.2 * jax.random.normal(nk(), (16, 96), jnp.float32)
    p['s_exp1'], p['sh_exp1'] = _bn_fold(nk(), 96)
    p['w_dw1'] = 0.3 * jax.random.normal(nk(), (3, 3, 96), jnp.float32)
    p['s_dw1'], p['sh_dw1'] = _bn_fold(nk(), 96)
    p['w_se1_1'] = 0.2 * jax.random.normal(nk(), (96, 4), jnp.float32)
    p['b_se1_1'] = 0.1 * jax.random.normal(nk(), (4,), jnp.float32)
    p['w_se2_1'] = 0.2 * jax.random.normal(nk(), (4, 96), jnp.float32)
    p['b_se2_1'] = 0.1 * jax.random.normal(nk(), (96,), jnp.float32)
    p['w_proj1'] = 0.2 * jax.random.normal(nk(), (96, 24), jnp.float32)
    p['s_proj1'], p['sh_proj1'] = _bn_fold(nk(), 24)
    # connect: 1x1 conv 24 -> 48 with bias
    p['w_conn'] = 0.2 * jax.random.normal(nk(), (24, 48), jnp.float32)
    p['b_conn'] = 0.1 * jax.random.normal(nk(), (48,), jnp.float32)
    return p


# ----------------------------- pure-JAX reference (sanity check) -----------------------------

@jax.jit
def _ref_forward(x_nchw, p):
    x = jnp.transpose(x_nchw, (0, 2, 3, 1)).astype(jnp.float32)

    def swish(v):
        return v * jax.nn.sigmoid(v)

    def conv(v, w, stride, padding):
        return jax.lax.conv_general_dilated(
            v, w, window_strides=(stride, stride), padding=padding,
            dimension_numbers=('NHWC', 'HWIO', 'NHWC'), precision=PREC)

    def dwconv(v, w, stride, padding):
        c = v.shape[-1]
        return jax.lax.conv_general_dilated(
            v, w[:, :, None, :], window_strides=(stride, stride), padding=padding,
            dimension_numbers=('NHWC', 'HWIO', 'NHWC'), feature_group_count=c,
            precision=PREC)

    def dense(a, b):
        return jnp.matmul(a, b, precision=PREC)

    # stem
    x = swish(conv(x, p['w_stem'], 2, [(0, 1), (0, 1)]) * p['s_stem'] + p['sh_stem'])
    # block 0
    y = swish(dwconv(x, p['w_dw0'], 1, [(1, 1), (1, 1)]) * p['s_dw0'] + p['sh_dw0'])
    s = jnp.mean(y, axis=(1, 2))
    h = swish(dense(s, p['w_se1_0']) + p['b_se1_0'])
    g = jax.nn.sigmoid(dense(h, p['w_se2_0']) + p['b_se2_0'])
    y = y * g[:, None, None, :]
    x = jnp.einsum('nhwc,cd->nhwd', y, p['w_proj0'], precision=PREC) * p['s_proj0'] + p['sh_proj0']
    # block 1
    e = swish(jnp.einsum('nhwc,cd->nhwd', x, p['w_exp1'], precision=PREC) * p['s_exp1'] + p['sh_exp1'])
    y = swish(dwconv(e, p['w_dw1'], 2, [(0, 1), (0, 1)]) * p['s_dw1'] + p['sh_dw1'])
    s = jnp.mean(y, axis=(1, 2))
    h = swish(dense(s, p['w_se1_1']) + p['b_se1_1'])
    g = jax.nn.sigmoid(dense(h, p['w_se2_1']) + p['b_se2_1'])
    y = y * g[:, None, None, :]
    x = jnp.einsum('nhwc,cd->nhwd', y, p['w_proj1'], precision=PREC) * p['s_proj1'] + p['sh_proj1']
    # connect
    x = jnp.einsum('nhwc,cd->nhwd', x, p['w_conn'], precision=PREC) + p['b_conn']
    return jnp.transpose(x, (0, 3, 1, 2))


# ----------------------------- main -----------------------------

if __name__ == "__main__":
    key = jax.random.PRNGKey(0)
    k_x, k_p = jax.random.split(key)

    N, C_IN, H, W = 2, 3, 16, 16
    x_nchw = jax.random.normal(k_x, (N, C_IN, H, W), jnp.float32)
    params = init_params(k_p)

    out = jax.block_until_ready(headmodel_forward(x_nchw, params))
    ref = jax.block_until_ready(_ref_forward(x_nchw, params))

    assert out.shape == (N, 48, H // 4, W // 4), out.shape
    # Tolerance leaves headroom for MXU pass-count / accumulation-order differences between
    # the fused Pallas matmuls and the HIGHEST-precision XLA reference; any structural bug
    # (wrong tap offset, stride selection, fused weights) would be orders of magnitude larger.
    np.testing.assert_allclose(np.asarray(out), np.asarray(ref), rtol=2e-2, atol=2e-2)
    print("KERNEL_OK")
</pallas_src>

<mosaic_0001>
module attributes {stable_mosaic.version = 11 : i64} {
  func.func @_head_kernel(%arg0: i32, %arg1: memref<1x64x32xf32, #tpu.memory_space<vmem>>, %arg2: memref<32x32xf32, #tpu.memory_space<vmem>>, %arg3: memref<1x32xf32, #tpu.memory_space<vmem>>, %arg4: memref<9x32xf32, #tpu.memory_space<vmem>>, %arg5: memref<1x32xf32, #tpu.memory_space<vmem>>, %arg6: memref<32x8xf32, #tpu.memory_space<vmem>>, %arg7: memref<1x8xf32, #tpu.memory_space<vmem>>, %arg8: memref<8x32xf32, #tpu.memory_space<vmem>>, %arg9: memref<1x32xf32, #tpu.memory_space<vmem>>, %arg10: memref<32x96xf32, #tpu.memory_space<vmem>>, %arg11: memref<1x96xf32, #tpu.memory_space<vmem>>, %arg12: memref<9x96xf32, #tpu.memory_space<vmem>>, %arg13: memref<1x96xf32, #tpu.memory_space<vmem>>, %arg14: memref<16x64xf32, #tpu.memory_space<vmem>>, %arg15: memref<96x8xf32, #tpu.memory_space<vmem>>, %arg16: memref<1x8xf32, #tpu.memory_space<vmem>>, %arg17: memref<8x96xf32, #tpu.memory_space<vmem>>, %arg18: memref<1x96xf32, #tpu.memory_space<vmem>>, %arg19: memref<96x128xf32, #tpu.memory_space<vmem>>, %arg20: memref<1x128xf32, #tpu.memory_space<vmem>>, %arg21: memref<1x16x128xf32, #tpu.memory_space<vmem>>, %arg22: memref<10x10x32xf32, #tpu.memory_space<vmem>>, %arg23: memref<10x10x96xf32, #tpu.memory_space<vmem>>) attributes {dimension_semantics = [#tpu.dimension_semantics<parallel>], iteration_bounds = array<i64: 2>, scalar_prefetch = 0 : i64, scratch_operands = 2 : i64, tpu.core_type = #tpu.core_type<tc>, window_params = [{transform_indices = @transform_0, window_bounds = array<i64: 1, 64, 32>}, {pipeline_mode = #tpu.pipeline_mode<synchronous>, transform_indices = @transform_1, window_bounds = array<i64: 32, 32>}, {pipeline_mode = #tpu.pipeline_mode<synchronous>, transform_indices = @transform_2, window_bounds = array<i64: 1, 32>}, {pipeline_mode = #tpu.pipeline_mode<synchronous>, transform_indices = @transform_3, window_bounds = array<i64: 9, 32>}, {pipeline_mode = #tpu.pipeline_mode<synchronous>, transform_indices = @transform_4, window_bounds = array<i64: 1, 32>}, {pipeline_mode = #tpu.pipeline_mode<synchronous>, transform_indices = @transform_5, window_bounds = array<i64: 32, 8>}, {pipeline_mode = #tpu.pipeline_mode<synchronous>, transform_indices = @transform_6, window_bounds = array<i64: 1, 8>}, {pipeline_mode = #tpu.pipeline_mode<synchronous>, transform_indices = @transform_7, window_bounds = array<i64: 8, 32>}, {pipeline_mode = #tpu.pipeline_mode<synchronous>, transform_indices = @transform_8, window_bounds = array<i64: 1, 32>}, {pipeline_mode = #tpu.pipeline_mode<synchronous>, transform_indices = @transform_9, window_bounds = array<i64: 32, 96>}, {pipeline_mode = #tpu.pipeline_mode<synchronous>, transform_indices = @transform_10, window_bounds = array<i64: 1, 96>}, {pipeline_mode = #tpu.pipeline_mode<synchronous>, transform_indices = @transform_11, window_bounds = array<i64: 9, 96>}, {pipeline_mode = #tpu.pipeline_mode<synchronous>, transform_indices = @transform_12, window_bounds = array<i64: 1, 96>}, {pipeline_mode = #tpu.pipeline_mode<synchronous>, transform_indices = @transform_13, window_bounds = array<i64: 16, 64>}, {pipeline_mode = #tpu.pipeline_mode<synchronous>, transform_indices = @transform_14, window_bounds = array<i64: 96, 8>}, {pipeline_mode = #tpu.pipeline_mode<synchronous>, transform_indices = @transform_15, window_bounds = array<i64: 1, 8>}, {pipeline_mode = #tpu.pipeline_mode<synchronous>, transform_indices = @transform_16, window_bounds = array<i64: 8, 96>}, {pipeline_mode = #tpu.pipeline_mode<synchronous>, transform_indices = @transform_17, window_bounds = array<i64: 1, 96>}, {pipeline_mode = #tpu.pipeline_mode<synchronous>, transform_indices = @transform_18, window_bounds = array<i64: 96, 128>}, {pipeline_mode = #tpu.pipeline_mode<synchronous>, transform_indices = @transform_19, window_bounds = array<i64: 1, 128>}, {transform_indices = @transform_20, window_bounds = array<i64: 1, 16, 128>}]} {
    %c0 = arith.constant 0 : index
    %c0_0 = arith.constant 0 : index
    %c0_1 = arith.constant 0 : index
    %0 = vector.load %arg1[%c0, %c0_0, %c0_1] : memref<1x64x32xf32, #tpu.memory_space<vmem>>, vector<1x64x32xf32>
    %1 = vector.shape_cast %0 : vector<1x64x32xf32> to vector<64x32xf32>
    %c0_2 = arith.constant 0 : index
    %c0_3 = arith.constant 0 : index
    %2 = vector.load %arg2[%c0_2, %c0_3] : memref<32x32xf32, #tpu.memory_space<vmem>>, vector<32x32xf32>
    %cst = arith.constant dense<0.000000e+00> : vector<64x32xf32>
    %3 = tpu.matmul %1, %2, %cst {dimension_numbers = #tpu.dot_dimension_numbers<[1], [0], [0], [1], [0, 0, 1, 1], [], []>} : vector<64x32xf32>, vector<32x32xf32>, vector<64x32xf32> -> vector<64x32xf32>
    %c0_4 = arith.constant 0 : index
    %c0_5 = arith.constant 0 : index
    %4 = vector.load %arg3[%c0_4, %c0_5] : memref<1x32xf32, #tpu.memory_space<vmem>>, vector<1x32xf32>
    %5 = vector.broadcast %4 : vector<1x32xf32> to vector<64x32xf32>
    %6 = arith.addf %3, %5 : vector<64x32xf32>
    %7 = arith.negf %6 : vector<64x32xf32>
    %8 = math.exp %7 : vector<64x32xf32>
    %cst_6 = arith.constant 1.000000e+00 : f32
    %9 = vector.broadcast %cst_6 : f32 to vector<64x32xf32>
    %10 = arith.addf %9, %8 : vector<64x32xf32>
    %11 = arith.divf %9, %10 : vector<64x32xf32>
    %12 = arith.mulf %6, %11 : vector<64x32xf32>
    %cst_7 = arith.constant 0.000000e+00 : f32
    %13 = vector.broadcast %cst_7 : f32 to vector<10x10x32xf32>
    %c0_8 = arith.constant 0 : index
    %c0_9 = arith.constant 0 : index
    %c0_10 = arith.constant 0 : index
    %14 = vector.load %arg22[%c0_8, %c0_9, %c0_10] : memref<10x10x32xf32, #tpu.memory_space<vmem>>, vector<10x10x32xf32>
    tpu.vector_store %arg22[%c0_8, %c0_9, %c0_10], %13 {strides = array<i32>} : memref<10x10x32xf32, #tpu.memory_space<vmem>>, vector<10x10x32xf32>,
    %15 = vector.shape_cast %12 : vector<64x32xf32> to vector<8x8x32xf32>
    %c1 = arith.constant 1 : index
    %c1_11 = arith.constant 1 : index
    %c0_12 = arith.constant 0 : index
    %16 = vector.load %arg22[%c1, %c1_11, %c0_12] : memref<10x10x32xf32, #tpu.memory_space<vmem>>, vector<8x8x32xf32>
    tpu.vector_store %arg22[%c1, %c1_11, %c0_12], %15 {strides = array<i32>} : memref<10x10x32xf32, #tpu.memory_space<vmem>>, vector<8x8x32xf32>,
    %c0_13 = arith.constant 0 : index
    %c0_14 = arith.constant 0 : index
    %17 = vector.load %arg4[%c0_13, %c0_14] : memref<9x32xf32, #tpu.memory_space<vmem>>, vector<9x32xf32>
    %c0_15 = arith.constant 0 : index
    %c0_16 = arith.constant 0 : index
    %c0_17 = arith.constant 0 : index
    %18 = vector.load %arg22[%c0_15, %c0_16, %c0_17] : memref<10x10x32xf32, #tpu.memory_space<vmem>>, vector<8x8x32xf32>
    %19 = vector.extract_strided_slice %17 {offsets = [0, 0], sizes = [1, 32], strides = [1, 1]} : vector<9x32xf32> to vector<1x32xf32>
    %20 = vector.shape_cast %19 : vector<1x32xf32> to vector<32xf32>
    %21 = vector.shape_cast %20 : vector<32xf32> to vector<1x1x32xf32>
    %22 = vector.broadcast %21 : vector<1x1x32xf32> to vector<8x8x32xf32>
    %23 = arith.mulf %18, %22 : vector<8x8x32xf32>
    %c0_18 = arith.constant 0 : index
    %c1_19 = arith.constant 1 : index
    %c0_20 = arith.constant 0 : index
    %24 = vector.load %arg22[%c0_18, %c1_19, %c0_20] : memref<10x10x32xf32, #tpu.memory_space<vmem>>, vector<8x8x32xf32>
    %25 = vector.extract_strided_slice %17 {offsets = [1, 0], sizes = [1, 32], strides = [1, 1]} : vector<9x32xf32> to vector<1x32xf32>
    %26 = vector.shape_cast %25 : vector<1x32xf32> to vector<32xf32>
    %27 = vector.shape_cast %26 : vector<32xf32> to vector<1x1x32xf32>
    %28 = vector.broadcast %27 : vector<1x1x32xf32> to vector<8x8x32xf32>
    %29 = arith.mulf %24, %28 : vector<8x8x32xf32>
    %30 = arith.addf %23, %29 : vector<8x8x32xf32>
    %c0_21 = arith.constant 0 : index
    %c2 = arith.constant 2 : index
    %c0_22 = arith.constant 0 : index
    %31 = vector.load %arg22[%c0_21, %c2, %c0_22] : memref<10x10x32xf32, #tpu.memory_space<vmem>>, vector<8x8x32xf32>
    %32 = vector.extract_strided_slice %17 {offsets = [2, 0], sizes = [1, 32], strides = [1, 1]} : vector<9x32xf32> to vector<1x32xf32>
    %33 = vector.shape_cast %32 : vector<1x32xf32> to vector<32xf32>
    %34 = vector.shape_cast %33 : vector<32xf32> to vector<1x1x32xf32>
    %35 = vector.broadcast %34 : vector<1x1x32xf32> to vector<8x8x32xf32>
    %36 = arith.mulf %31, %35 : vector<8x8x32xf32>
    %37 = arith.addf %30, %36 : vector<8x8x32xf32>
    %c1_23 = arith.constant 1 : index
    %c0_24 = arith.constant 0 : index
    %c0_25 = arith.constant 0 : index
    %38 = vector.load %arg22[%c1_23, %c0_24, %c0_25] : memref<10x10x32xf32, #tpu.memory_space<vmem>>, vector<8x8x32xf32>
    %39 = vector.extract_strided_slice %17 {offsets = [3, 0], sizes = [1, 32], strides = [1, 1]} : vector<9x32xf32> to vector<1x32xf32>
    %40 = vector.shape_cast %39 : vector<1x32xf32> to vector<32xf32>
    %41 = vector.shape_cast %40 : vector<32xf32> to vector<1x1x32xf32>
    %42 = vector.broadcast %41 : vector<1x1x32xf32> to vector<8x8x32xf32>
    %43 = arith.mulf %38, %42 : vector<8x8x32xf32>
    %44 = arith.addf %37, %43 : vector<8x8x32xf32>
    %c1_26 = arith.constant 1 : index
    %c1_27 = arith.constant 1 : index
    %c0_28 = arith.constant 0 : index
    %45 = vector.load %arg22[%c1_26, %c1_27, %c0_28] : memref<10x10x32xf32, #tpu.memory_space<vmem>>, vector<8x8x32xf32>
    %46 = vector.extract_strided_slice %17 {offsets = [4, 0], sizes = [1, 32], strides = [1, 1]} : vector<9x32xf32> to vector<1x32xf32>
    %47 = vector.shape_cast %46 : vector<1x32xf32> to vector<32xf32>
    %48 = vector.shape_cast %47 : vector<32xf32> to vector<1x1x32xf32>
    %49 = vector.broadcast %48 : vector<1x1x32xf32> to vector<8x8x32xf32>
    %50 = arith.mulf %45, %49 : vector<8x8x32xf32>
    %51 = arith.addf %44, %50 : vector<8x8x32xf32>
    %c1_29 = arith.constant 1 : index
    %c2_30 = arith.constant 2 : index
    %c0_31 = arith.constant 0 : index
    %52 = vector.load %arg22[%c1_29, %c2_30, %c0_31] : memref<10x10x32xf32, #tpu.memory_space<vmem>>, vector<8x8x32xf32>
    %53 = vector.extract_strided_slice %17 {offsets = [5, 0], sizes = [1, 32], strides = [1, 1]} : vector<9x32xf32> to vector<1x32xf32>
    %54 = vector.shape_cast %53 : vector<1x32xf32> to vector<32xf32>
    %55 = vector.shape_cast %54 : vector<32xf32> to vector<1x1x32xf32>
    %56 = vector.broadcast %55 : vector<1x1x32xf32> to vector<8x8x32xf32>
    %57 = arith.mulf %52, %56 : vector<8x8x32xf32>
    %58 = arith.addf %51, %57 : vector<8x8x32xf32>
    %c2_32 = arith.constant 2 : index
    %c0_33 = arith.constant 0 : index
    %c0_34 = arith.constant 0 : index
    %59 = vector.load %arg22[%c2_32, %c0_33, %c0_34] : memref<10x10x32xf32, #tpu.memory_space<vmem>>, vector<8x8x32xf32>
    %60 = vector.extract_strided_slice %17 {offsets = [6, 0], sizes = [1, 32], strides = [1, 1]} : vector<9x32xf32> to vector<1x32xf32>
    %61 = vector.shape_cast %60 : vector<1x32xf32> to vector<32xf32>
    %62 = vector.shape_cast %61 : vector<32xf32> to vector<1x1x32xf32>
    %63 = vector.broadcast %62 : vector<1x1x32xf32> to vector<8x8x32xf32>
    %64 = arith.mulf %59, %63 : vector<8x8x32xf32>
    %65 = arith.addf %58, %64 : vector<8x8x32xf32>
    %c2_35 = arith.constant 2 : index
    %c1_36 = arith.constant 1 : index
    %c0_37 = arith.constant 0 : index
    %66 = vector.load %arg22[%c2_35, %c1_36, %c0_37] : memref<10x10x32xf32, #tpu.memory_space<vmem>>, vector<8x8x32xf32>
    %67 = vector.extract_strided_slice %17 {offsets = [7, 0], sizes = [1, 32], strides = [1, 1]} : vector<9x32xf32> to vector<1x32xf32>
    %68 = vector.shape_cast %67 : vector<1x32xf32> to vector<32xf32>
    %69 = vector.shape_cast %68 : vector<32xf32> to vector<1x1x32xf32>
    %70 = vector.broadcast %69 : vector<1x1x32xf32> to vector<8x8x32xf32>
    %71 = arith.mulf %66, %70 : vector<8x8x32xf32>
    %72 = arith.addf %65, %71 : vector<8x8x32xf32>
    %c2_38 = arith.constant 2 : index
    %c2_39 = arith.constant 2 : index
    %c0_40 = arith.constant 0 : index
    %73 = vector.load %arg22[%c2_38, %c2_39, %c0_40] : memref<10x10x32xf32, #tpu.memory_space<vmem>>, vector<8x8x32xf32>
    %74 = vector.extract_strided_slice %17 {offsets = [8, 0], sizes = [1, 32], strides = [1, 1]} : vector<9x32xf32> to vector<1x32xf32>
    %75 = vector.shape_cast %74 : vector<1x32xf32> to vector<32xf32>
    %76 = vector.shape_cast %75 : vector<32xf32> to vector<1x1x32xf32>
    %77 = vector.broadcast %76 : vector<1x1x32xf32> to vector<8x8x32xf32>
    %78 = arith.mulf %73, %77 : vector<8x8x32xf32>
    %79 = arith.addf %72, %78 : vector<8x8x32xf32>
    %80 = vector.shape_cast %79 : vector<8x8x32xf32> to vector<64x32xf32>
    %c0_41 = arith.constant 0 : index
    %c0_42 = arith.constant 0 : index
    %81 = vector.load %arg5[%c0_41, %c0_42] : memref<1x32xf32, #tpu.memory_space<vmem>>, vector<1x32xf32>
    %82 = vector.broadcast %81 : vector<1x32xf32> to vector<64x32xf32>
    %83 = arith.addf %80, %82 : vector<64x32xf32>
    %84 = arith.negf %83 : vector<64x32xf32>
    %85 = math.exp %84 : vector<64x32xf32>
    %cst_43 = arith.constant 1.000000e+00 : f32
    %86 = vector.broadcast %cst_43 : f32 to vector<64x32xf32>
    %87 = arith.addf %86, %85 : vector<64x32xf32>
    %88 = arith.divf %86, %87 : vector<64x32xf32>
    %89 = arith.mulf %83, %88 : vector<64x32xf32>
    %cst_44 = arith.constant dense<0.000000e+00> : vector<32xf32>
    %90 = vector.multi_reduction <add>, %89, %cst_44 [0] : vector<64x32xf32> to vector<32xf32>
    %91 = vector.shape_cast %90 : vector<32xf32> to vector<1x32xf32>
    %cst_45 = arith.constant 1.562500e-02 : f32
    %92 = vector.broadcast %cst_45 : f32 to vector<1x32xf32>
    %93 = arith.mulf %91, %92 : vector<1x32xf32>
    %c0_46 = arith.constant 0 : index
    %c0_47 = arith.constant 0 : index
    %94 = vector.load %arg6[%c0_46, %c0_47] : memref<32x8xf32, #tpu.memory_space<vmem>>, vector<32x8xf32>
    %cst_48 = arith.constant dense<0.000000e+00> : vector<1x8xf32>
    %95 = tpu.matmul %93, %94, %cst_48 {dimension_numbers = #tpu.dot_dimension_numbers<[1], [0], [0], [1], [0, 0, 1, 1], [], []>} : vector<1x32xf32>, vector<32x8xf32>, vector<1x8xf32> -> vector<1x8xf32>
    %c0_49 = arith.constant 0 : index
    %c0_50 = arith.constant 0 : index
    %96 = vector.load %arg7[%c0_49, %c0_50] : memref<1x8xf32, #tpu.memory_space<vmem>>, vector<1x8xf32>
    %97 = arith.addf %95, %96 : vector<1x8xf32>
    %98 = arith.negf %97 : vector<1x8xf32>
    %99 = math.exp %98 : vector<1x8xf32>
    %cst_51 = arith.constant 1.000000e+00 : f32
    %100 = vector.broadcast %cst_51 : f32 to vector<1x8xf32>
    %101 = arith.addf %100, %99 : vector<1x8xf32>
    %102 = arith.divf %100, %101 : vector<1x8xf32>
    %103 = arith.mulf %97, %102 : vector<1x8xf32>
    %c0_52 = arith.constant 0 : index
    %c0_53 = arith.constant 0 : index
    %104 = vector.load %arg8[%c0_52, %c0_53] : memref<8x32xf32, #tpu.memory_space<vmem>>, vector<8x32xf32>
    %cst_54 = arith.constant dense<0.000000e+00> : vector<1x32xf32>
    %105 = tpu.matmul %103, %104, %cst_54 {dimension_numbers = #tpu.dot_dimension_numbers<[1], [0], [0], [1], [0, 0, 1, 1], [], []>} : vector<1x8xf32>, vector<8x32xf32>, vector<1x32xf32> -> vector<1x32xf32>
    %c0_55 = arith.constant 0 : index
    %c0_56 = arith.constant 0 : index
    %106 = vector.load %arg9[%c0_55, %c0_56] : memref<1x32xf32, #tpu.memory_space<vmem>>, vector<1x32xf32>
    %107 = arith.addf %105, %106 : vector<1x32xf32>
    %108 = arith.negf %107 : vector<1x32xf32>
    %109 = math.exp %108 : vector<1x32xf32>
    %cst_57 = arith.constant 1.000000e+00 : f32
    %110 = vector.broadcast %cst_57 : f32 to vector<1x32xf32>
    %111 = arith.addf %110, %109 : vector<1x32xf32>
    %112 = arith.divf %110, %111 : vector<1x32xf32>
    %113 = vector.broadcast %112 : vector<1x32xf32> to vector<64x32xf32>
    %114 = arith.mulf %89, %113 : vector<64x32xf32>
    %c0_58 = arith.constant 0 : index
    %c0_59 = arith.constant 0 : index
    %115 = vector.load %arg10[%c0_58, %c0_59] : memref<32x96xf32, #tpu.memory_space<vmem>>, vector<32x96xf32>
    %cst_60 = arith.constant dense<0.000000e+00> : vector<64x96xf32>
    %116 = tpu.matmul %114, %115, %cst_60 {dimension_numbers = #tpu.dot_dimension_numbers<[1], [0], [0], [1], [0, 0, 1, 1], [], []>} : vector<64x32xf32>, vector<32x96xf32>, vector<64x96xf32> -> vector<64x96xf32>
    %c0_61 = arith.constant 0 : index
    %c0_62 = arith.constant 0 : index
    %117 = vector.load %arg11[%c0_61, %c0_62] : memref<1x96xf32, #tpu.memory_space<vmem>>, vector<1x96xf32>
    %118 = vector.broadcast %117 : vector<1x96xf32> to vector<64x96xf32>
    %119 = arith.addf %116, %118 : vector<64x96xf32>
    %120 = arith.negf %119 : vector<64x96xf32>
    %121 = math.exp %120 : vector<64x96xf32>
    %cst_63 = arith.constant 1.000000e+00 : f32
    %122 = vector.broadcast %cst_63 : f32 to vector<64x96xf32>
    %123 = arith.addf %122, %121 : vector<64x96xf32>
    %124 = arith.divf %122, %123 : vector<64x96xf32>
    %125 = arith.mulf %119, %124 : vector<64x96xf32>
    %cst_64 = arith.constant 0.000000e+00 : f32
    %126 = vector.broadcast %cst_64 : f32 to vector<10x10x96xf32>
    %c0_65 = arith.constant 0 : index
    %c0_66 = arith.constant 0 : index
    %c0_67 = arith.constant 0 : index
    %127 = vector.load %arg23[%c0_65, %c0_66, %c0_67] : memref<10x10x96xf32, #tpu.memory_space<vmem>>, vector<10x10x96xf32>
    tpu.vector_store %arg23[%c0_65, %c0_66, %c0_67], %126 {strides = array<i32>} : memref<10x10x96xf32, #tpu.memory_space<vmem>>, vector<10x10x96xf32>,
    %128 = vector.shape_cast %125 : vector<64x96xf32> to vector<8x8x96xf32>
    %c0_68 = arith.constant 0 : index
    %c0_69 = arith.constant 0 : index
    %c0_70 = arith.constant 0 : index
    %129 = vector.load %arg23[%c0_68, %c0_69, %c0_70] : memref<10x10x96xf32, #tpu.memory_space<vmem>>, vector<8x8x96xf32>
    tpu.vector_store %arg23[%c0_68, %c0_69, %c0_70], %128 {strides = array<i32>} : memref<10x10x96xf32, #tpu.memory_space<vmem>>, vector<8x8x96xf32>,
    %c0_71 = arith.constant 0 : index
    %c0_72 = arith.constant 0 : index
    %130 = vector.load %arg12[%c0_71, %c0_72] : memref<9x96xf32, #tpu.memory_space<vmem>>, vector<9x96xf32>
    %c0_73 = arith.constant 0 : index
    %c0_74 = arith.constant 0 : index
    %c0_75 = arith.constant 0 : index
    %131 = vector.load %arg23[%c0_73, %c0_74, %c0_75] : memref<10x10x96xf32, #tpu.memory_space<vmem>>, vector<8x8x96xf32>
    %132 = vector.extract_strided_slice %130 {offsets = [0, 0], sizes = [1, 96], strides = [1, 1]} : vector<9x96xf32> to vector<1x96xf32>
    %133 = vector.shape_cast %132 : vector<1x96xf32> to vector<96xf32>
    %134 = vector.shape_cast %133 : vector<96xf32> to vector<1x1x96xf32>
    %135 = vector.broadcast %134 : vector<1x1x96xf32> to vector<8x8x96xf32>
    %136 = arith.mulf %131, %135 : vector<8x8x96xf32>
    %c0_76 = arith.constant 0 : index
    %c1_77 = arith.constant 1 : index
    %c0_78 = arith.constant 0 : index
    %137 = vector.load %arg23[%c0_76, %c1_77, %c0_78] : memref<10x10x96xf32, #tpu.memory_space<vmem>>, vector<8x8x96xf32>
    %138 = vector.extract_strided_slice %130 {offsets = [1, 0], sizes = [1, 96], strides = [1, 1]} : vector<9x96xf32> to vector<1x96xf32>
    %139 = vector.shape_cast %138 : vector<1x96xf32> to vector<96xf32>
    %140 = vector.shape_cast %139 : vector<96xf32> to vector<1x1x96xf32>
    %141 = vector.broadcast %140 : vector<1x1x96xf32> to vector<8x8x96xf32>
    %142 = arith.mulf %137, %141 : vector<8x8x96xf32>
    %143 = arith.addf %136, %142 : vector<8x8x96xf32>
    %c0_79 = arith.constant 0 : index
    %c2_80 = arith.constant 2 : index
    %c0_81 = arith.constant 0 : index
    %144 = vector.load %arg23[%c0_79, %c2_80, %c0_81] : memref<10x10x96xf32, #tpu.memory_space<vmem>>, vector<8x8x96xf32>
    %145 = vector.extract_strided_slice %130 {offsets = [2, 0], sizes = [1, 96], strides = [1, 1]} : vector<9x96xf32> to vector<1x96xf32>
    %146 = vector.shape_cast %145 : vector<1x96xf32> to vector<96xf32>
    %147 = vector.shape_cast %146 : vector<96xf32> to vector<1x1x96xf32>
    %148 = vector.broadcast %147 : vector<1x1x96xf32> to vector<8x8x96xf32>
    %149 = arith.mulf %144, %148 : vector<8x8x96xf32>
    %150 = arith.addf %143, %149 : vector<8x8x96xf32>
    %c1_82 = arith.constant 1 : index
    %c0_83 = arith.constant 0 : index
    %c0_84 = arith.constant 0 : index
    %151 = vector.load %arg23[%c1_82, %c0_83, %c0_84] : memref<10x10x96xf32, #tpu.memory_space<vmem>>, vector<8x8x96xf32>
    %152 = vector.extract_strided_slice %130 {offsets = [3, 0], sizes = [1, 96], strides = [1, 1]} : vector<9x96xf32> to vector<1x96xf32>
    %153 = vector.shape_cast %152 : vector<1x96xf32> to vector<96xf32>
    %154 = vector.shape_cast %153 : vector<96xf32> to vector<1x1x96xf32>
    %155 = vector.broadcast %154 : vector<1x1x96xf32> to vector<8x8x96xf32>
    %156 = arith.mulf %151, %155 : vector<8x8x96xf32>
    %157 = arith.addf %150, %156 : vector<8x8x96xf32>
    %c1_85 = arith.constant 1 : index
    %c1_86 = arith.constant 1 : index
    %c0_87 = arith.constant 0 : index
    %158 = vector.load %arg23[%c1_85, %c1_86, %c0_87] : memref<10x10x96xf32, #tpu.memory_space<vmem>>, vector<8x8x96xf32>
    %159 = vector.extract_strided_slice %130 {offsets = [4, 0], sizes = [1, 96], strides = [1, 1]} : vector<9x96xf32> to vector<1x96xf32>
    %160 = vector.shape_cast %159 : vector<1x96xf32> to vector<96xf32>
    %161 = vector.shape_cast %160 : vector<96xf32> to vector<1x1x96xf32>
    %162 = vector.broadcast %161 : vector<1x1x96xf32> to vector<8x8x96xf32>
    %163 = arith.mulf %158, %162 : vector<8x8x96xf32>
    %164 = arith.addf %157, %163 : vector<8x8x96xf32>
    %c1_88 = arith.constant 1 : index
    %c2_89 = arith.constant 2 : index
    %c0_90 = arith.constant 0 : index
    %165 = vector.load %arg23[%c1_88, %c2_89, %c0_90] : memref<10x10x96xf32, #tpu.memory_space<vmem>>, vector<8x8x96xf32>
    %166 = vector.extract_strided_slice %130 {offsets = [5, 0], sizes = [1, 96], strides = [1, 1]} : vector<9x96xf32> to vector<1x96xf32>
    %167 = vector.shape_cast %166 : vector<1x96xf32> to vector<96xf32>
    %168 = vector.shape_cast %167 : vector<96xf32> to vector<1x1x96xf32>
    %169 = vector.broadcast %168 : vector<1x1x96xf32> to vector<8x8x96xf32>
    %170 = arith.mulf %165, %169 : vector<8x8x96xf32>
    %171 = arith.addf %164, %170 : vector<8x8x96xf32>
    %c2_91 = arith.constant 2 : index
    %c0_92 = arith.constant 0 : index
    %c0_93 = arith.constant 0 : index
    %172 = vector.load %arg23[%c2_91, %c0_92, %c0_93] : memref<10x10x96xf32, #tpu.memory_space<vmem>>, vector<8x8x96xf32>
    %173 = vector.extract_strided_slice %130 {offsets = [6, 0], sizes = [1, 96], strides = [1, 1]} : vector<9x96xf32> to vector<1x96xf32>
    %174 = vector.shape_cast %173 : vector<1x96xf32> to vector<96xf32>
    %175 = vector.shape_cast %174 : vector<96xf32> to vector<1x1x96xf32>
    %176 = vector.broadcast %175 : vector<1x1x96xf32> to vector<8x8x96xf32>
    %177 = arith.mulf %172, %176 : vector<8x8x96xf32>
    %178 = arith.addf %171, %177 : vector<8x8x96xf32>
    %c2_94 = arith.constant 2 : index
    %c1_95 = arith.constant 1 : index
    %c0_96 = arith.constant 0 : index
    %179 = vector.load %arg23[%c2_94, %c1_95, %c0_96] : memref<10x10x96xf32, #tpu.memory_space<vmem>>, vector<8x8x96xf32>
    %180 = vector.extract_strided_slice %130 {offsets = [7, 0], sizes = [1, 96], strides = [1, 1]} : vector<9x96xf32> to vector<1x96xf32>
    %181 = vector.shape_cast %180 : vector<1x96xf32> to vector<96xf32>
    %182 = vector.shape_cast %181 : vector<96xf32> to vector<1x1x96xf32>
    %183 = vector.broadcast %182 : vector<1x1x96xf32> to vector<8x8x96xf32>
    %184 = arith.mulf %179, %183 : vector<8x8x96xf32>
    %185 = arith.addf %178, %184 : vector<8x8x96xf32>
    %c2_97 = arith.constant 2 : index
    %c2_98 = arith.constant 2 : index
    %c0_99 = arith.constant 0 : index
    %186 = vector.load %arg23[%c2_97, %c2_98, %c0_99] : memref<10x10x96xf32, #tpu.memory_space<vmem>>, vector<8x8x96xf32>
    %187 = vector.extract_strided_slice %130 {offsets = [8, 0], sizes = [1, 96], strides = [1, 1]} : vector<9x96xf32> to vector<1x96xf32>
    %188 = vector.shape_cast %187 : vector<1x96xf32> to vector<96xf32>
    %189 = vector.shape_cast %188 : vector<96xf32> to vector<1x1x96xf32>
    %190 = vector.broadcast %189 : vector<1x1x96xf32> to vector<8x8x96xf32>
    %191 = arith.mulf %186, %190 : vector<8x8x96xf32>
    %192 = arith.addf %185, %191 : vector<8x8x96xf32>
    %c0_100 = arith.constant 0 : index
    %c0_101 = arith.constant 0 : index
    %193 = vector.load %arg14[%c0_100, %c0_101] : memref<16x64xf32, #tpu.memory_space<vmem>>, vector<16x64xf32>
    %194 = vector.shape_cast %192 : vector<8x8x96xf32> to vector<64x96xf32>
    %cst_102 = arith.constant dense<0.000000e+00> : vector<16x96xf32>
    %195 = tpu.matmul %193, %194, %cst_102 {dimension_numbers = #tpu.dot_dimension_numbers<[1], [0], [0], [1], [0, 0, 1, 1], [], []>} : vector<16x64xf32>, vector<64x96xf32>, vector<16x96xf32> -> vector<16x96xf32>
    %c0_103 = arith.constant 0 : index
    %c0_104 = arith.constant 0 : index
    %196 = vector.load %arg13[%c0_103, %c0_104] : memref<1x96xf32, #tpu.memory_space<vmem>>, vector<1x96xf32>
    %197 = vector.broadcast %196 : vector<1x96xf32> to vector<16x96xf32>
    %198 = arith.addf %195, %197 : vector<16x96xf32>
    %199 = arith.negf %198 : vector<16x96xf32>
    %200 = math.exp %199 : vector<16x96xf32>
    %cst_105 = arith.constant 1.000000e+00 : f32
    %201 = vector.broadcast %cst_105 : f32 to vector<16x96xf32>
    %202 = arith.addf %201, %200 : vector<16x96xf32>
    %203 = arith.divf %201, %202 : vector<16x96xf32>
    %204 = arith.mulf %198, %203 : vector<16x96xf32>
    %cst_106 = arith.constant dense<0.000000e+00> : vector<96xf32>
    %205 = vector.multi_reduction <add>, %204, %cst_106 [0] : vector<16x96xf32> to vector<96xf32>
    %206 = vector.shape_cast %205 : vector<96xf32> to vector<1x96xf32>
    %cst_107 = arith.constant 6.250000e-02 : f32
    %207 = vector.broadcast %cst_107 : f32 to vector<1x96xf32>
    %208 = arith.mulf %206, %207 : vector<1x96xf32>
    %c0_108 = arith.constant 0 : index
    %c0_109 = arith.constant 0 : index
    %209 = vector.load %arg15[%c0_108, %c0_109] : memref<96x8xf32, #tpu.memory_space<vmem>>, vector<96x8xf32>
    %cst_110 = arith.constant dense<0.000000e+00> : vector<1x8xf32>
    %210 = tpu.matmul %208, %209, %cst_110 {dimension_numbers = #tpu.dot_dimension_numbers<[1], [0], [0], [1], [0, 0, 1, 1], [], []>} : vector<1x96xf32>, vector<96x8xf32>, vector<1x8xf32> -> vector<1x8xf32>
    %c0_111 = arith.constant 0 : index
    %c0_112 = arith.constant 0 : index
    %211 = vector.load %arg16[%c0_111, %c0_112] : memref<1x8xf32, #tpu.memory_space<vmem>>, vector<1x8xf32>
    %212 = arith.addf %210, %211 : vector<1x8xf32>
    %213 = arith.negf %212 : vector<1x8xf32>
    %214 = math.exp %213 : vector<1x8xf32>
    %cst_113 = arith.constant 1.000000e+00 : f32
    %215 = vector.broadcast %cst_113 : f32 to vector<1x8xf32>
    %216 = arith.addf %215, %214 : vector<1x8xf32>
    %217 = arith.divf %215, %216 : vector<1x8xf32>
    %218 = arith.mulf %212, %217 : vector<1x8xf32>
    %c0_114 = arith.constant 0 : index
    %c0_115 = arith.constant 0 : index
    %219 = vector.load %arg17[%c0_114, %c0_115] : memref<8x96xf32, #tpu.memory_space<vmem>>, vector<8x96xf32>
    %cst_116 = arith.constant dense<0.000000e+00> : vector<1x96xf32>
    %220 = tpu.matmul %218, %219, %cst_116 {dimension_numbers = #tpu.dot_dimension_numbers<[1], [0], [0], [1], [0, 0, 1, 1], [], []>} : vector<1x8xf32>, vector<8x96xf32>, vector<1x96xf32> -> vector<1x96xf32>
    %c0_117 = arith.constant 0 : index
    %c0_118 = arith.constant 0 : index
    %221 = vector.load %arg18[%c0_117, %c0_118] : memref<1x96xf32, #tpu.memory_space<vmem>>, vector<1x96xf32>
    %222 = arith.addf %220, %221 : vector<1x96xf32>
    %223 = arith.negf %222 : vector<1x96xf32>
    %224 = math.exp %223 : vector<1x96xf32>
    %cst_119 = arith.constant 1.000000e+00 : f32
    %225 = vector.broadcast %cst_119 : f32 to vector<1x96xf32>
    %226 = arith.addf %225, %224 : vector<1x96xf32>
    %227 = arith.divf %225, %226 : vector<1x96xf32>
    %228 = vector.broadcast %227 : vector<1x96xf32> to vector<16x96xf32>
    %229 = arith.mulf %204, %228 : vector<16x96xf32>
    %c0_120 = arith.constant 0 : index
    %c0_121 = arith.constant 0 : index
    %230 = vector.load %arg19[%c0_120, %c0_121] : memref<96x128xf32, #tpu.memory_space<vmem>>, vector<96x128xf32>
    %cst_122 = arith.constant dense<0.000000e+00> : vector<16x128xf32>
    %231 = tpu.matmul %229, %230, %cst_122 {dimension_numbers = #tpu.dot_dimension_numbers<[1], [0], [0], [1], [0, 0, 1, 1], [], []>} : vector<16x96xf32>, vector<96x128xf32>, vector<16x128xf32> -> vector<16x128xf32>
    %c0_123 = arith.constant 0 : index
    %c0_124 = arith.constant 0 : index
    %232 = vector.load %arg20[%c0_123, %c0_124] : memref<1x128xf32, #tpu.memory_space<vmem>>, vector<1x128xf32>
    %233 = vector.broadcast %232 : vector<1x128xf32> to vector<16x128xf32>
    %234 = arith.addf %231, %233 : vector<16x128xf32>
    %c0_125 = arith.constant 0 : index
    %c0_126 = arith.constant 0 : index
    %c0_127 = arith.constant 0 : index
    %235 = vector.load %arg21[%c0_125, %c0_126, %c0_127] : memref<1x16x128xf32, #tpu.memory_space<vmem>>, vector<1x16x128xf32>
    %236 = vector.shape_cast %235 : vector<1x16x128xf32> to vector<16x128xf32>
    %237 = vector.shape_cast %234 : vector<16x128xf32> to vector<1x16x128xf32>
    tpu.vector_store %arg21[%c0_125, %c0_126, %c0_127], %237 {strides = array<i32>} : memref<1x16x128xf32, #tpu.memory_space<vmem>>, vector<1x16x128xf32>,
    return
  }
  func.func @transform_0(%arg0: i32) -> (i32, i32, i32) {
    %c0_i32 = arith.constant 0 : i32
    %c0_i32_0 = arith.constant 0 : i32
    %c0_i32_1 = arith.constant 0 : i32
    return %arg0, %c0_i32, %c0_i32_0 : i32, i32, i32
  }
  func.func @transform_1(%arg0: i32) -> (i32, i32) {
    %c0_i32 = arith.constant 0 : i32
    %c0_i32_0 = arith.constant 0 : i32
    %c0_i32_1 = arith.constant 0 : i32
    return %c0_i32, %c0_i32_0 : i32, i32
  }
  func.func @transform_2(%arg0: i32) -> (i32, i32) {
    %c0_i32 = arith.constant 0 : i32
    %c0_i32_0 = arith.constant 0 : i32
    %c0_i32_1 = arith.constant 0 : i32
    return %c0_i32, %c0_i32_0 : i32, i32
  }
  func.func @transform_3(%arg0: i32) -> (i32, i32) {
    %c0_i32 = arith.constant 0 : i32
    %c0_i32_0 = arith.constant 0 : i32
    %c0_i32_1 = arith.constant 0 : i32
    return %c0_i32, %c0_i32_0 : i32, i32
  }
  func.func @transform_4(%arg0: i32) -> (i32, i32) {
    %c0_i32 = arith.constant 0 : i32
    %c0_i32_0 = arith.constant 0 : i32
    %c0_i32_1 = arith.constant 0 : i32
    return %c0_i32, %c0_i32_0 : i32, i32
  }
  func.func @transform_5(%arg0: i32) -> (i32, i32) {
    %c0_i32 = arith.constant 0 : i32
    %c0_i32_0 = arith.constant 0 : i32
    %c0_i32_1 = arith.constant 0 : i32
    return %c0_i32, %c0_i32_0 : i32, i32
  }
  func.func @transform_6(%arg0: i32) -> (i32, i32) {
    %c0_i32 = arith.constant 0 : i32
    %c0_i32_0 = arith.constant 0 : i32
    %c0_i32_1 = arith.constant 0 : i32
    return %c0_i32, %c0_i32_0 : i32, i32
  }
  func.func @transform_7(%arg0: i32) -> (i32, i32) {
    %c0_i32 = arith.constant 0 : i32
    %c0_i32_0 = arith.constant 0 : i32
    %c0_i32_1 = arith.constant 0 : i32
    return %c0_i32, %c0_i32_0 : i32, i32
  }
  func.func @transform_8(%arg0: i32) -> (i32, i32) {
    %c0_i32 = arith.constant 0 : i32
    %c0_i32_0 = arith.constant 0 : i32
    %c0_i32_1 = arith.constant 0 : i32
    return %c0_i32, %c0_i32_0 : i32, i32
  }
  func.func @transform_9(%arg0: i32) -> (i32, i32) {
    %c0_i32 = arith.constant 0 : i32
    %c0_i32_0 = arith.constant 0 : i32
    %c0_i32_1 = arith.constant 0 : i32
    return %c0_i32, %c0_i32_0 : i32, i32
  }
  func.func @transform_10(%arg0: i32) -> (i32, i32) {
    %c0_i32 = arith.constant 0 : i32
    %c0_i32_0 = arith.constant 0 : i32
    %c0_i32_1 = arith.constant 0 : i32
    return %c0_i32, %c0_i32_0 : i32, i32
  }
  func.func @transform_11(%arg0: i32) -> (i32, i32) {
    %c0_i32 = arith.constant 0 : i32
    %c0_i32_0 = arith.constant 0 : i32
    %c0_i32_1 = arith.constant 0 : i32
    return %c0_i32, %c0_i32_0 : i32, i32
  }
  func.func @transform_12(%arg0: i32) -> (i32, i32) {
    %c0_i32 = arith.constant 0 : i32
    %c0_i32_0 = arith.constant 0 : i32
    %c0_i32_1 = arith.constant 0 : i32
    return %c0_i32, %c0_i32_0 : i32, i32
  }
  func.func @transform_13(%arg0: i32) -> (i32, i32) {
    %c0_i32 = arith.constant 0 : i32
    %c0_i32_0 = arith.constant 0 : i32
    %c0_i32_1 = arith.constant 0 : i32
    return %c0_i32, %c0_i32_0 : i32, i32
  }
  func.func @transform_14(%arg0: i32) -> (i32, i32) {
    %c0_i32 = arith.constant 0 : i32
    %c0_i32_0 = arith.constant 0 : i32
    %c0_i32_1 = arith.constant 0 : i32
    return %c0_i32, %c0_i32_0 : i32, i32
  }
  func.func @transform_15(%arg0: i32) -> (i32, i32) {
    %c0_i32 = arith.constant 0 : i32
    %c0_i32_0 = arith.constant 0 : i32
    %c0_i32_1 = arith.constant 0 : i32
    return %c0_i32, %c0_i32_0 : i32, i32
  }
  func.func @transform_16(%arg0: i32) -> (i32, i32) {
    %c0_i32 = arith.constant 0 : i32
    %c0_i32_0 = arith.constant 0 : i32
    %c0_i32_1 = arith.constant 0 : i32
    return %c0_i32, %c0_i32_0 : i32, i32
  }
  func.func @transform_17(%arg0: i32) -> (i32, i32) {
    %c0_i32 = arith.constant 0 : i32
    %c0_i32_0 = arith.constant 0 : i32
    %c0_i32_1 = arith.constant 0 : i32
    return %c0_i32, %c0_i32_0 : i32, i32
  }
  func.func @transform_18(%arg0: i32) -> (i32, i32) {
    %c0_i32 = arith.constant 0 : i32
    %c0_i32_0 = arith.constant 0 : i32
    %c0_i32_1 = arith.constant 0 : i32
    return %c0_i32, %c0_i32_0 : i32, i32
  }
  func.func @transform_19(%arg0: i32) -> (i32, i32) {
    %c0_i32 = arith.constant 0 : i32
    %c0_i32_0 = arith.constant 0 : i32
    %c0_i32_1 = arith.constant 0 : i32
    return %c0_i32, %c0_i32_0 : i32, i32
  }
  func.func @transform_20(%arg0: i32) -> (i32, i32, i32) {
    %c0_i32 = arith.constant 0 : i32
    %c0_i32_0 = arith.constant 0 : i32
    %c0_i32_1 = arith.constant 0 : i32
    return %arg0, %c0_i32, %c0_i32_0 : i32, i32, i32
  }
}

</mosaic_0001>

<llo_original>
// kernel: headmodel_forward.1
$region0: #{headmodel_forward.1}
  #allocation0 [shape = 'u32[]', space=smem, size = 0x4, offset = 0x4, fixed_abs, tag = 'smem constant byte address 0x4 - core index']
  #allocation1 [shape = 'u32[144,128]{1,0:T(1,128)}', space=vmem, size = 0x12000, scoped, tag = 'internal scratch']
  #allocation2 [shape = 'f32[10,10,32]{2,1,0:T(8,128)}', space=vmem, size = 0x14000, scoped, tag = 'scratch operand']
  #allocation3 [shape = 'f32[10,10,96]{2,1,0:T(8,128)}', space=vmem, size = 0x14000, scoped, tag = 'scratch operand']
  %s0 = inlined_call_operand.vmem [shape: f32[2,64,32], index: 0, kind: input, shape index: {}]
  %s1 = inlined_call_operand.vmem [shape: f32[32,32], index: 1, kind: input, shape index: {}]
  %s2 = inlined_call_operand.vmem [shape: f32[1,32], index: 2, kind: input, shape index: {}]
  %s3 = inlined_call_operand.vmem [shape: f32[9,32], index: 3, kind: input, shape index: {}]
  %s4 = inlined_call_operand.vmem [shape: f32[1,32], index: 4, kind: input, shape index: {}]
  %s5 = inlined_call_operand.vmem [shape: f32[32,8], index: 5, kind: input, shape index: {}]
  %s6 = inlined_call_operand.vmem [shape: f32[1,8], index: 6, kind: input, shape index: {}]
  %s7 = inlined_call_operand.vmem [shape: f32[8,32], index: 7, kind: input, shape index: {}]
  %s8 = inlined_call_operand.vmem [shape: f32[1,32], index: 8, kind: input, shape index: {}]
  %s9 = inlined_call_operand.vmem [shape: f32[32,96], index: 9, kind: input, shape index: {}]
  %s10 = inlined_call_operand.vmem [shape: f32[1,96], index: 10, kind: input, shape index: {}]
  %s11 = inlined_call_operand.vmem [shape: f32[9,96], index: 11, kind: input, shape index: {}]
  %s12 = inlined_call_operand.vmem [shape: f32[1,96], index: 12, kind: input, shape index: {}]
  %s13 = inlined_call_operand.vmem [shape: f32[16,64], index: 13, kind: input, shape index: {}]
  %s14 = inlined_call_operand.vmem [shape: f32[96,8], index: 14, kind: input, shape index: {}]
  %s15 = inlined_call_operand.vmem [shape: f32[1,8], index: 15, kind: input, shape index: {}]
  %s16 = inlined_call_operand.vmem [shape: f32[8,96], index: 16, kind: input, shape index: {}]
  %s17 = inlined_call_operand.vmem [shape: f32[1,96], index: 17, kind: input, shape index: {}]
  %s18 = inlined_call_operand.vmem [shape: f32[96,128], index: 18, kind: input, shape index: {}]
  %s19 = inlined_call_operand.vmem [shape: f32[1,128], index: 19, kind: input, shape index: {}]
  %s20 = inlined_call_operand.hbm [shape: f32[2,16,128], index: 20, kind: output, shape index: {}]
  %s21 = sld [smem:[#allocation0]]
  $region113: #{headmodel_forward.1} parent=0
    _
  %s23 = ssub.s32 1, %s21
  %s24 = scalar_select 0, %s23, %s21
  $region1: #{headmodel_forward.1} parent=0
    #allocation4 [shape = 'u8[16384]{0}', space=vmem, size = 0x4000, scoped, tag = 'output window, operand 0']
    #allocation5 [shape = 's32[2]{0}', space=sflag, size = 0x8, scoped, tag = 'scoped memory for headmodel_forward.1']
    %25 = vsyncpa [#allocation5], 0
    %s26 = scalar_lea.sflag [#allocation5], 1
    %27 = vsyncpa %s26, 0
    loop: start=0, step=1, limit=4
    $region2: #{headmodel_forward.1} parent=1 // loop_pre_header
      _
    $region3: #{headmodel_forward.1} parent=1 // loop_header
      %s29 = sphi 0, %s33
      %p30 = scmp.ge.s32.totalorder %s29, 4
      %s39 = sphi 0, %s41
      %s42 = sphi 0, %s39
      %s43 = sphi 0, %s42
      %s59 = sphi 0, %s43
      %s63 = sphi 0, %s63
      %s65 = sphi 0, %s63
      %s66 = sphi 0, %s65
      %s80 = sphi 0, %s66
      %s84 = sphi 0, %s84
      %s86 = sphi 0, %s84
      %s87 = sphi 0, %s86
      %s101 = sphi 0, %s87
      %s105 = sphi 0, %s105
      %s107 = sphi 0, %s105
      %s108 = sphi 0, %s107
      %s122 = sphi 0, %s108
      %s126 = sphi 0, %s126
      %s128 = sphi 0, %s126
      %s129 = sphi 0, %s128
      %s143 = sphi 0, %s129
      %s147 = sphi 0, %s147
      %s149 = sphi 0, %s147
      %s150 = sphi 0, %s149
      %s164 = sphi 0, %s150
      %s168 = sphi 0, %s168
      %s170 = sphi 0, %s168
      %s171 = sphi 0, %s170
      %s185 = sphi 0, %s171
      %s189 = sphi 0, %s189
      %s191 = sphi 0, %s189
      %s192 = sphi 0, %s191
      %s206 = sphi 0, %s192
      %s210 = sphi 0, %s210
      %s212 = sphi 0, %s210
      %s213 = sphi 0, %s212
      %s227 = sphi 0, %s213
      %s231 = sphi 0, %s231
      %s233 = sphi 0, %s231
      %s234 = sphi 0, %s233
      %s248 = sphi 0, %s234
      %s252 = sphi 0, %s252
      %s254 = sphi 0, %s252
      %s255 = sphi 0, %s254
      %s269 = sphi 0, %s255
      %s273 = sphi 0, %s273
      %s275 = sphi 0, %s273
      %s276 = sphi 0, %s275
      %s290 = sphi 0, %s276
      %s294 = sphi 0, %s294
      %s296 = sphi 0, %s294
      %s297 = sphi 0, %s296
      %s311 = sphi 0, %s297
      %s315 = sphi 0, %s315
      %s317 = sphi 0, %s315
      %s318 = sphi 0, %s317
      %s332 = sphi 0, %s318
      %s336 = sphi 0, %s336
      %s338 = sphi 0, %s336
      %s339 = sphi 0, %s338
      %s353 = sphi 0, %s339
      %s357 = sphi 0, %s357
      %s359 = sphi 0, %s357
      %s360 = sphi 0, %s359
      %s374 = sphi 0, %s360
      %s378 = sphi 0, %s378
      %s380 = sphi 0, %s378
      %s381 = sphi 0, %s380
      %s395 = sphi 0, %s381
      %s399 = sphi 0, %s399
      %s401 = sphi 0, %s399
      %s402 = sphi 0, %s401
      %s416 = sphi 0, %s402
      %s420 = sphi 0, %s420
      %s422 = sphi 0, %s420
      %s423 = sphi 0, %s422
      %s437 = sphi 0, %s423
      %s441 = sphi 0, %s441
      %s443 = sphi 0, %s441
      %s444 = sphi 0, %s443
      %s458 = sphi 0, %s444
      %s464 = sphi 0, %s466
      %s467 = sphi 0, %s464
      %s468 = sphi 0, %s467
      %s484 = sphi 0, %s468
    $region4: #{headmodel_forward.1} parent=1 // loop_header_branch
      %32 = sbr.rel (%p30) target = $region8
    $region5: #{headmodel_forward.1} parent=1 // loop_body
      %s34 = ssub.s32 %s29, 1
      %s35 = ssub.s32 %s29, 2
      %s36 = sadd.s32 %s29, 1
      %s37 = ssub.s32 %s29, %s36
      %p38 = scmp.eq.s32.totalorder %s37, 0
      %s40 = sadd.s32 %s39, 1
      %s41 = scalar_select %p38, %s39, %s40
      %p44 = pneg %p38
      %p45 = scmp.eq.s32.totalorder %s29, 1
      %p46 = por %p44, %p45
      %p47 = scmp.ne.s32.totalorder %s39, %s42
      %p48 = scmp.eq.s32.totalorder %s29, 0
      %p49 = por %p47, %p48
      %p50 = scmp.ne.s32.totalorder %s39, %s42
      %p51 = scmp.eq.s32.totalorder %s34, 1
      %p52 = por %p50, %p51
      %p53 = scmp.ne.s32.totalorder %s42, %s43
      %p54 = scmp.eq.s32.totalorder %s34, 0
      %p55 = por %p53, %p54
      %p56 = scmp.ne.s32.totalorder %s42, %s43
      %p57 = scmp.eq.s32.totalorder %s35, 1
      %p58 = por %p56, %p57
      %p60 = scmp.ne.s32.totalorder %s43, %s59
      %p61 = scmp.eq.s32.totalorder %s35, 0
      %p62 = por %p60, %p61
      %s64 = sadd.s32 %s63, 1
      %p67 = scmp.eq.s32.totalorder %s29, 1
      %p68 = scmp.ne.s32.totalorder %s63, %s65
      %p69 = scmp.eq.s32.totalorder %s29, 0
      %p70 = por %p68, %p69
      %p71 = scmp.ne.s32.totalorder %s63, %s65
      %p72 = scmp.eq.s32.totalorder %s34, 1
      %p73 = por %p71, %p72
      %p74 = scmp.ne.s32.totalorder %s65, %s66
      %p75 = scmp.eq.s32.totalorder %s34, 0
      %p76 = por %p74, %p75
      %p77 = scmp.ne.s32.totalorder %s65, %s66
      %p78 = scmp.eq.s32.totalorder %s35, 1
      %p79 = por %p77, %p78
      %p81 = scmp.ne.s32.totalorder %s66, %s80
      %p82 = scmp.eq.s32.totalorder %s35, 0
      %p83 = por %p81, %p82
      %s85 = sadd.s32 %s84, 1
      %p88 = scmp.eq.s32.totalorder %s29, 1
      %p89 = scmp.ne.s32.totalorder %s84, %s86
      %p90 = scmp.eq.s32.totalorder %s29, 0
      %p91 = por %p89, %p90
      %p92 = scmp.ne.s32.totalorder %s84, %s86
      %p93 = scmp.eq.s32.totalorder %s34, 1
      %p94 = por %p92, %p93
      %p95 = scmp.ne.s32.totalorder %s86, %s87
      %p96 = scmp.eq.s32.totalorder %s34, 0
      %p97 = por %p95, %p96
      %p98 = scmp.ne.s32.totalorder %s86, %s87
      %p99 = scmp.eq.s32.totalorder %s35, 1
      %p100 = por %p98, %p99
      %p102 = scmp.ne.s32.totalorder %s87, %s101
      %p103 = scmp.eq.s32.totalorder %s35, 0
      %p104 = por %p102, %p103
      %s106 = sadd.s32 %s105, 1
      %p109 = scmp.eq.s32.totalorder %s29, 1
      %p110 = scmp.ne.s32.totalorder %s105, %s107
      %p111 = scmp.eq.s32.totalorder %s29, 0
      %p112 = por %p110, %p111
      %p113 = scmp.ne.s32.totalorder %s105, %s107
      %p114 = scmp.eq.s32.totalorder %s34, 1
      %p115 = por %p113, %p114
      %p116 = scmp.ne.s32.totalorder %s107, %s108
      %p117 = scmp.eq.s32.totalorder %s34, 0
      %p118 = por %p116, %p117
      %p119 = scmp.ne.s32.totalorder %s107, %s108
      %p120 = scmp.eq.s32.totalorder %s35, 1
      %p121 = por %p119, %p120
      %p123 = scmp.ne.s32.totalorder %s108, %s122
      %p124 = scmp.eq.s32.totalorder %s35, 0
      %p125 = por %p123, %p124
      %s127 = sadd.s32 %s126, 1
      %p130 = scmp.eq.s32.totalorder %s29, 1
      %p131 = scmp.ne.s32.totalorder %s126, %s128
      %p132 = scmp.eq.s32.totalorder %s29, 0
      %p133 = por %p131, %p132
      %p134 = scmp.ne.s32.totalorder %s126, %s128
      %p135 = scmp.eq.s32.totalorder %s34, 1
      %p136 = por %p134, %p135
      %p137 = scmp.ne.s32.totalorder %s128, %s129
      %p138 = scmp.eq.s32.totalorder %s34, 0
      %p139 = por %p137, %p138
      %p140 = scmp.ne.s32.totalorder %s128, %s129
      %p141 = scmp.eq.s32.totalorder %s35, 1
      %p142 = por %p140, %p141
      %p144 = scmp.ne.s32.totalorder %s129, %s143
      %p145 = scmp.eq.s32.totalorder %s35, 0
      %p146 = por %p144, %p145
      %s148 = sadd.s32 %s147, 1
      %p151 = scmp.eq.s32.totalorder %s29, 1
      %p152 = scmp.ne.s32.totalorder %s147, %s149
      %p153 = scmp.eq.s32.totalorder %s29, 0
      %p154 = por %p152, %p153
      %p155 = scmp.ne.s32.totalorder %s147, %s149
      %p156 = scmp.eq.s32.totalorder %s34, 1
      %p157 = por %p155, %p156
      %p158 = scmp.ne.s32.totalorder %s149, %s150
      %p159 = scmp.eq.s32.totalorder %s34, 0
      %p160 = por %p158, %p159
      %p161 = scmp.ne.s32.totalorder %s149, %s150
      %p162 = scmp.eq.s32.totalorder %s35, 1
      %p163 = por %p161, %p162
      %p165 = scmp.ne.s32.totalorder %s150, %s164
      %p166 = scmp.eq.s32.totalorder %s35, 0
      %p167 = por %p165, %p166
      %s169 = sadd.s32 %s168, 1
      %p172 = scmp.eq.s32.totalorder %s29, 1
      %p173 = scmp.ne.s32.totalorder %s168, %s170
      %p174 = scmp.eq.s32.totalorder %s29, 0
      %p175 = por %p173, %p174
      %p176 = scmp.ne.s32.totalorder %s168, %s170
      %p177 = scmp.eq.s32.totalorder %s34, 1
      %p178 = por %p176, %p177
      %p179 = scmp.ne.s32.totalorder %s170, %s171
      %p180 = scmp.eq.s32.totalorder %s34, 0
      %p181 = por %p179, %p180
      %p182 = scmp.ne.s32.totalorder %s170, %s171
      %p183 = scmp.eq.s32.totalorder %s35, 1
      %p184 = por %p182, %p183
      %p186 = scmp.ne.s32.totalorder %s171, %s185
      %p187 = scmp.eq.s32.totalorder %s35, 0
      %p188 = por %p186, %p187
      %s190 = sadd.s32 %s189, 1
      %p193 = scmp.eq.s32.totalorder %s29, 1
      %p194 = scmp.ne.s32.totalorder %s189, %s191
      %p195 = scmp.eq.s32.totalorder %s29, 0
      %p196 = por %p194, %p195
      %p197 = scmp.ne.s32.totalorder %s189, %s191
      %p198 = scmp.eq.s32.totalorder %s34, 1
      %p199 = por %p197, %p198
      %p200 = scmp.ne.s32.totalorder %s191, %s192
      %p201 = scmp.eq.s32.totalorder %s34, 0
      %p202 = por %p200, %p201
      %p203 = scmp.ne.s32.totalorder %s191, %s192
      %p204 = scmp.eq.s32.totalorder %s35, 1
      %p205 = por %p203, %p204
      %p207 = scmp.ne.s32.totalorder %s192, %s206
      %p208 = scmp.eq.s32.totalorder %s35, 0
      %p209 = por %p207, %p208
      %s211 = sadd.s32 %s210, 1
      %p214 = scmp.eq.s32.totalorder %s29, 1
      %p215 = scmp.ne.s32.totalorder %s210, %s212
      %p216 = scmp.eq.s32.totalorder %s29, 0
      %p217 = por %p215, %p216
      %p218 = scmp.ne.s32.totalorder %s210, %s212
      %p219 = scmp.eq.s32.totalorder %s34, 1
      %p220 = por %p218, %p219
      %p221 = scmp.ne.s32.totalorder %s212, %s213
      %p222 = scmp.eq.s32.totalorder %s34, 0
      %p223 = por %p221, %p222
      %p224 = scmp.ne.s32.totalorder %s212, %s213
      %p225 = scmp.eq.s32.totalorder %s35, 1
      %p226 = por %p224, %p225
      %p228 = scmp.ne.s32.totalorder %s213, %s227
      %p229 = scmp.eq.s32.totalorder %s35, 0
      %p230 = por %p228, %p229
      %s232 = sadd.s32 %s231, 1
      %p235 = scmp.eq.s32.totalorder %s29, 1
      %p236 = scmp.ne.s32.totalorder %s231, %s233
      %p237 = scmp.eq.s32.totalorder %s29, 0
      %p238 = por %p236, %p237
      %p239 = scmp.ne.s32.totalorder %s231, %s233
      %p240 = scmp.eq.s32.totalorder %s34, 1
      %p241 = por %p239, %p240
      %p242 = scmp.ne.s32.totalorder %s233, %s234
      %p243 = scmp.eq.s32.totalorder %s34, 0
      %p244 = por %p242, %p243
      %p245 = scmp.ne.s32.totalorder %s233, %s234
      %p246 = scmp.eq.s32.totalorder %s35, 1
      %p247 = por %p245, %p246
      %p249 = scmp.ne.s32.totalorder %s234, %s248
      %p250 = scmp.eq.s32.totalorder %s35, 0
      %p251 = por %p249, %p250
      %s253 = sadd.s32 %s252, 1
      %p256 = scmp.eq.s32.totalorder %s29, 1
      %p257 = scmp.ne.s32.totalorder %s252, %s254
      %p258 = scmp.eq.s32.totalorder %s29, 0
      %p259 = por %p257, %p258
      %p260 = scmp.ne.s32.totalorder %s252, %s254
      %p261 = scmp.eq.s32.totalorder %s34, 1
      %p262 = por %p260, %p261
      %p263 = scmp.ne.s32.totalorder %s254, %s255
      %p264 = scmp.eq.s32.totalorder %s34, 0
      %p265 = por %p263, %p264
      %p266 = scmp.ne.s32.totalorder %s254, %s255
      %p267 = scmp.eq.s32.totalorder %s35, 1
      %p268 = por %p266, %p267
      %p270 = scmp.ne.s32.totalorder %s255, %s269
      %p271 = scmp.eq.s32.totalorder %s35, 0
      %p272 = por %p270, %p271
      %s274 = sadd.s32 %s273, 1
      %p277 = scmp.eq.s32.totalorder %s29, 1
      %p278 = scmp.ne.s32.totalorder %s273, %s275
      %p279 = scmp.eq.s32.totalorder %s29, 0
      %p280 = por %p278, %p279
      %p281 = scmp.ne.s32.totalorder %s273, %s275
      %p282 = scmp.eq.s32.totalorder %s34, 1
      %p283 = por %p281, %p282
      %p284 = scmp.ne.s32.totalorder %s275, %s276
      %p285 = scmp.eq.s32.totalorder %s34, 0
      %p286 = por %p284, %p285
      %p287 = scmp.ne.s32.totalorder %s275, %s276
      %p288 = scmp.eq.s32.totalorder %s35, 1
      %p289 = por %p287, %p288
      %p291 = scmp.ne.s32.totalorder %s276, %s290
      %p292 = scmp.eq.s32.totalorder %s35, 0
      %p293 = por %p291, %p292
      %s295 = sadd.s32 %s294, 1
      %p298 = scmp.eq.s32.totalorder %s29, 1
      %p299 = scmp.ne.s32.totalorder %s294, %s296
      %p300 = scmp.eq.s32.totalorder %s29, 0
      %p301 = por %p299, %p300
      %p302 = scmp.ne.s32.totalorder %s294, %s296
      %p303 = scmp.eq.s32.totalorder %s34, 1
      %p304 = por %p302, %p303
      %p305 = scmp.ne.s32.totalorder %s296, %s297
      %p306 = scmp.eq.s32.totalorder %s34, 0
      %p307 = por %p305, %p306
      %p308 = scmp.ne.s32.totalorder %s296, %s297
      %p309 = scmp.eq.s32.totalorder %s35, 1
      %p310 = por %p308, %p309
      %p312 = scmp.ne.s32.totalorder %s297, %s311
      %p313 = scmp.eq.s32.totalorder %s35, 0
      %p314 = por %p312, %p313
      %s316 = sadd.s32 %s315, 1
      %p319 = scmp.eq.s32.totalorder %s29, 1
      %p320 = scmp.ne.s32.totalorder %s315, %s317
      %p321 = scmp.eq.s32.totalorder %s29, 0
      %p322 = por %p320, %p321
      %p323 = scmp.ne.s32.totalorder %s315, %s317
      %p324 = scmp.eq.s32.totalorder %s34, 1
      %p325 = por %p323, %p324
      %p326 = scmp.ne.s32.totalorder %s317, %s318
      %p327 = scmp.eq.s32.totalorder %s34, 0
      %p328 = por %p326, %p327
      %p329 = scmp.ne.s32.totalorder %s317, %s318
      %p330 = scmp.eq.s32.totalorder %s35, 1
      %p331 = por %p329, %p330
      %p333 = scmp.ne.s32.totalorder %s318, %s332
      %p334 = scmp.eq.s32.totalorder %s35, 0
      %p335 = por %p333, %p334
      %s337 = sadd.s32 %s336, 1
      %p340 = scmp.eq.s32.totalorder %s29, 1
      %p341 = scmp.ne.s32.totalorder %s336, %s338
      %p342 = scmp.eq.s32.totalorder %s29, 0
      %p343 = por %p341, %p342
      %p344 = scmp.ne.s32.totalorder %s336, %s338
      %p345 = scmp.eq.s32.totalorder %s34, 1
      %p346 = por %p344, %p345
      %p347 = scmp.ne.s32.totalorder %s338, %s339
      %p348 = scmp.eq.s32.totalorder %s34, 0
      %p349 = por %p347, %p348
      %p350 = scmp.ne.s32.totalorder %s338, %s339
      %p351 = scmp.eq.s32.totalorder %s35, 1
      %p352 = por %p350, %p351
      %p354 = scmp.ne.s32.totalorder %s339, %s353
      %p355 = scmp.eq.s32.totalorder %s35, 0
      %p356 = por %p354, %p355
      %s358 = sadd.s32 %s357, 1
      %p361 = scmp.eq.s32.totalorder %s29, 1
      %p362 = scmp.ne.s32.totalorder %s357, %s359
      %p363 = scmp.eq.s32.totalorder %s29, 0
      %p364 = por %p362, %p363
      %p365 = scmp.ne.s32.totalorder %s357, %s359
      %p366 = scmp.eq.s32.totalorder %s34, 1
      %p367 = por %p365, %p366
      %p368 = scmp.ne.s32.totalorder %s359, %s360
      %p369 = scmp.eq.s32.totalorder %s34, 0
      %p370 = por %p368, %p369
      %p371 = scmp.ne.s32.totalorder %s359, %s360
      %p372 = scmp.eq.s32.totalorder %s35, 1
      %p373 = por %p371, %p372
      %p375 = scmp.ne.s32.totalorder %s360, %s374
      %p376 = scmp.eq.s32.totalorder %s35, 0
      %p377 = por %p375, %p376
      %s379 = sadd.s32 %s378, 1
      %p382 = scmp.eq.s32.totalorder %s29, 1
      %p383 = scmp.ne.s32.totalorder %s378, %s380
      %p384 = scmp.eq.s32.totalorder %s29, 0
      %p385 = por %p383, %p384
      %p386 = scmp.ne.s32.totalorder %s378, %s380
      %p387 = scmp.eq.s32.totalorder %s34, 1
      %p388 = por %p386, %p387
      %p389 = scmp.ne.s32.totalorder %s380, %s381
      %p390 = scmp.eq.s32.totalorder %s34, 0
      %p391 = por %p389, %p390
      %p392 = scmp.ne.s32.totalorder %s380, %s381
      %p393 = scmp.eq.s32.totalorder %s35, 1
      %p394 = por %p392, %p393
      %p396 = scmp.ne.s32.totalorder %s381, %s395
      %p397 = scmp.eq.s32.totalorder %s35, 0
      %p398 = por %p396, %p397
      %s400 = sadd.s32 %s399, 1
      %p403 = scmp.eq.s32.totalorder %s29, 1
      %p404 = scmp.ne.s32.totalorder %s399, %s401
      %p405 = scmp.eq.s32.totalorder %s29, 0
      %p406 = por %p404, %p405
      %p407 = scmp.ne.s32.totalorder %s399, %s401
      %p408 = scmp.eq.s32.totalorder %s34, 1
      %p409 = por %p407, %p408
      %p410 = scmp.ne.s32.totalorder %s401, %s402
      %p411 = scmp.eq.s32.totalorder %s34, 0
      %p412 = por %p410, %p411
      %p413 = scmp.ne.s32.totalorder %s401, %s402
      %p414 = scmp.eq.s32.totalorder %s35, 1
      %p415 = por %p413, %p414
      %p417 = scmp.ne.s32.totalorder %s402, %s416
      %p418 = scmp.eq.s32.totalorder %s35, 0
      %p419 = por %p417, %p418
      %s421 = sadd.s32 %s420, 1
      %p424 = scmp.eq.s32.totalorder %s29, 1
      %p425 = scmp.ne.s32.totalorder %s420, %s422
      %p426 = scmp.eq.s32.totalorder %s29, 0
      %p427 = por %p425, %p426
      %p428 = scmp.ne.s32.totalorder %s420, %s422
      %p429 = scmp.eq.s32.totalorder %s34, 1
      %p430 = por %p428, %p429
      %p431 = scmp.ne.s32.totalorder %s422, %s423
      %p432 = scmp.eq.s32.totalorder %s34, 0
      %p433 = por %p431, %p432
      %p434 = scmp.ne.s32.totalorder %s422, %s423
      %p435 = scmp.eq.s32.totalorder %s35, 1
      %p436 = por %p434, %p435
      %p438 = scmp.ne.s32.totalorder %s423, %s437
      %p439 = scmp.eq.s32.totalorder %s35, 0
      %p440 = por %p438, %p439
      %s442 = sadd.s32 %s441, 1
      %p445 = scmp.eq.s32.totalorder %s29, 1
      %p446 = scmp.ne.s32.totalorder %s441, %s443
      %p447 = scmp.eq.s32.totalorder %s29, 0
      %p448 = por %p446, %p447
      %p449 = scmp.ne.s32.totalorder %s441, %s443
      %p450 = scmp.eq.s32.totalorder %s34, 1
      %p451 = por %p449, %p450
      %p452 = scmp.ne.s32.totalorder %s443, %s444
      %p453 = scmp.eq.s32.totalorder %s34, 0
      %p454 = por %p452, %p453
      %p455 = scmp.ne.s32.totalorder %s443, %s444
      %p456 = scmp.eq.s32.totalorder %s35, 1
      %p457 = por %p455, %p456
      %p459 = scmp.ne.s32.totalorder %s444, %s458
      %p460 = scmp.eq.s32.totalorder %s35, 0
      %p461 = por %p459, %p460
      %s462 = ssub.s32 %s29, %s36
      %p463 = scmp.eq.s32.totalorder %s462, 0
      %s465 = sadd.s32 %s464, 1
      %s466 = scalar_select %p463, %s464, %s465
      %p469 = pneg %p463
      %p470 = scmp.eq.s32.totalorder %s29, 1
      %p471 = por %p469, %p470
      %p472 = scmp.ne.s32.totalorder %s464, %s467
      %p473 = scmp.eq.s32.totalorder %s29, 0
      %p474 = por %p472, %p473
      %p475 = scmp.ne.s32.totalorder %s464, %s467
      %p476 = scmp.eq.s32.totalorder %s34, 1
      %p477 = por %p475, %p476
      %p478 = scmp.ne.s32.totalorder %s467, %s468
      %p479 = scmp.eq.s32.totalorder %s34, 0
      %p480 = por %p478, %p479
      %p481 = scmp.ne.s32.totalorder %s467, %s468
      %p482 = scmp.eq.s32.totalorder %s35, 1
      %p483 = por %p481, %p482
      %p485 = scmp.ne.s32.totalorder %s468, %s484
      %p486 = scmp.eq.s32.totalorder %s35, 0
      %p487 = por %p485, %p486
      %p488 = scmp.le.s32.totalorder 1, %s29
      %p489 = scmp.lt.s32.totalorder %s29, 3
      %p490 = pnand %p488, %p489
      %p491 = pneg %p490
      // Predicated region
      $region9: #{headmodel_forward.1} parent=5 // pred_check
        _
      $region10: #{headmodel_forward.1} parent=5 // pred_check_branch
        %493 = sbr.rel (%p490) target = $region12
      $region11: #{headmodel_forward.1} parent=5 // pred_region
        %s494 = ssub.s32 %s29, 1
        // Predicated region
        $region13: #{headmodel_forward.1} parent=11 // pred_check
          %p495 = pneg %p76
        $region14: #{headmodel_forward.1} parent=11 // pred_check_branch
          %497 = sbr.rel (%p495) target = $region16
        $region15: #{headmodel_forward.1} parent=11 // pred_region
          _
        $region16: #{headmodel_forward.1} parent=11 // pred_fallthru
          _
        // Predicated region
        $region17: #{headmodel_forward.1} parent=11 // pred_check
          %p498 = pneg %p97
        $region18: #{headmodel_forward.1} parent=11 // pred_check_branch
          %500 = sbr.rel (%p498) target = $region20
        $region19: #{headmodel_forward.1} parent=11 // pred_region
          _
        $region20: #{headmodel_forward.1} parent=11 // pred_fallthru
          _
        // Predicated region
        $region21: #{headmodel_forward.1} parent=11 // pred_check
          %p501 = pneg %p118
        $region22: #{headmodel_forward.1} parent=11 // pred_check_branch
          %503 = sbr.rel (%p501) target = $region24
        $region23: #{headmodel_forward.1} parent=11 // pred_region
          _
        $region24: #{headmodel_forward.1} parent=11 // pred_fallthru
          _
        // Predicated region
        $region25: #{headmodel_forward.1} parent=11 // pred_check
          %p504 = pneg %p139
        $region26: #{headmodel_forward.1} parent=11 // pred_check_branch
          %506 = sbr.rel (%p504) target = $region28
        $region27: #{headmodel_forward.1} parent=11 // pred_region
          _
        $region28: #{headmodel_forward.1} parent=11 // pred_fallthru
          _
        // Predicated region
        $region29: #{headmodel_forward.1} parent=11 // pred_check
          %p507 = pneg %p160
        $region30: #{headmodel_forward.1} parent=11 // pred_check_branch
          %509 = sbr.rel (%p507) target = $region32
        $region31: #{headmodel_forward.1} parent=11 // pred_region
          _
        $region32: #{headmodel_forward.1} parent=11 // pred_fallthru
          _
        // Predicated region
        $region33: #{headmodel_forward.1} parent=11 // pred_check
          %p510 = pneg %p181
        $region34: #{headmodel_forward.1} parent=11 // pred_check_branch
          %512 = sbr.rel (%p510) target = $region36
        $region35: #{headmodel_forward.1} parent=11 // pred_region
          _
        $region36: #{headmodel_forward.1} parent=11 // pred_fallthru
          _
        // Predicated region
        $region37: #{headmodel_forward.1} parent=11 // pred_check
          %p513 = pneg %p202
        $region38: #{headmodel_forward.1} parent=11 // pred_check_branch
          %515 = sbr.rel (%p513) target = $region40
        $region39: #{headmodel_forward.1} parent=11 // pred_region
          _
        $region40: #{headmodel_forward.1} parent=11 // pred_fallthru
          _
        // Predicated region
        $region41: #{headmodel_forward.1} parent=11 // pred_check
          %p516 = pneg %p223
        $region42: #{headmodel_forward.1} parent=11 // pred_check_branch
          %518 = sbr.rel (%p516) target = $region44
        $region43: #{headmodel_forward.1} parent=11 // pred_region
          _
        $region44: #{headmodel_forward.1} parent=11 // pred_fallthru
          _
        // Predicated region
        $region45: #{headmodel_forward.1} parent=11 // pred_check
          %p519 = pneg %p244
        $region46: #{headmodel_forward.1} parent=11 // pred_check_branch
          %521 = sbr.rel (%p519) target = $region48
        $region47: #{headmodel_forward.1} parent=11 // pred_region
          _
        $region48: #{headmodel_forward.1} parent=11 // pred_fallthru
          _
        // Predicated region
        $region49: #{headmodel_forward.1} parent=11 // pred_check
          %p522 = pneg %p265
        $region50: #{headmodel_forward.1} parent=11 // pred_check_branch
          %524 = sbr.rel (%p522) target = $region52
        $region51: #{headmodel_forward.1} parent=11 // pred_region
          _
        $region52: #{headmodel_forward.1} parent=11 // pred_fallthru
          _
        // Predicated region
        $region53: #{headmodel_forward.1} parent=11 // pred_check
          %p525 = pneg %p286
        $region54: #{headmodel_forward.1} parent=11 // pred_check_branch
          %527 = sbr.rel (%p525) target = $region56
        $region55: #{headmodel_forward.1} parent=11 // pred_region
          _
        $region56: #{headmodel_forward.1} parent=11 // pred_fallthru
          _
        // Predicated region
        $region57: #{headmodel_forward.1} parent=11 // pred_check
          %p528 = pneg %p307
        $region58: #{headmodel_forward.1} parent=11 // pred_check_branch
          %530 = sbr.rel (%p528) target = $region60
        $region59: #{headmodel_forward.1} parent=11 // pred_region
          _
        $region60: #{headmodel_forward.1} parent=11 // pred_fallthru
          _
        // Predicated region
        $region61: #{headmodel_forward.1} parent=11 // pred_check
          %p531 = pneg %p328
        $region62: #{headmodel_forward.1} parent=11 // pred_check_branch
          %533 = sbr.rel (%p531) target = $region64
        $region63: #{headmodel_forward.1} parent=11 // pred_region
          _
        $region64: #{headmodel_forward.1} parent=11 // pred_fallthru
          _
        // Predicated region
        $region65: #{headmodel_forward.1} parent=11 // pred_check
          %p534 = pneg %p349
        $region66: #{headmodel_forward.1} parent=11 // pred_check_branch
          %536 = sbr.rel (%p534) target = $region68
        $region67: #{headmodel_forward.1} parent=11 // pred_region
          _
        $region68: #{headmodel_forward.1} parent=11 // pred_fallthru
          _
        // Predicated region
        $region69: #{headmodel_forward.1} parent=11 // pred_check
          %p537 = pneg %p370
        $region70: #{headmodel_forward.1} parent=11 // pred_check_branch
          %539 = sbr.rel (%p537) target = $region72
        $region71: #{headmodel_forward.1} parent=11 // pred_region
          _
        $region72: #{headmodel_forward.1} parent=11 // pred_fallthru
          _
        // Predicated region
        $region73: #{headmodel_forward.1} parent=11 // pred_check
          %p540 = pneg %p391
        $region74: #{headmodel_forward.1} parent=11 // pred_check_branch
          %542 = sbr.rel (%p540) target = $region76
        $region75: #{headmodel_forward.1} parent=11 // pred_region
          _
        $region76: #{headmodel_forward.1} parent=11 // pred_fallthru
          _
        // Predicated region
        $region77: #{headmodel_forward.1} parent=11 // pred_check
          %p543 = pneg %p412
        $region78: #{headmodel_forward.1} parent=11 // pred_check_branch
          %545 = sbr.rel (%p543) target = $region80
        $region79: #{headmodel_forward.1} parent=11 // pred_region
          _
        $region80: #{headmodel_forward.1} parent=11 // pred_fallthru
          _
        // Predicated region
        $region81: #{headmodel_forward.1} parent=11 // pred_check
          %p546 = pneg %p433
        $region82: #{headmodel_forward.1} parent=11 // pred_check_branch
          %548 = sbr.rel (%p546) target = $region84
        $region83: #{headmodel_forward.1} parent=11 // pred_region
          _
        $region84: #{headmodel_forward.1} parent=11 // pred_fallthru
          _
        // Predicated region
        $region85: #{headmodel_forward.1} parent=11 // pred_check
          %p549 = pneg %p454
        $region86: #{headmodel_forward.1} parent=11 // pred_check_branch
          %551 = sbr.rel (%p549) target = $region88
        $region87: #{headmodel_forward.1} parent=11 // pred_region
          _
        $region88: #{headmodel_forward.1} parent=11 // pred_fallthru
          _
      $region12: #{headmodel_forward.1} parent=5 // pred_fallthru
        _
      %p552 = scmp.lt.s32.totalorder %s29, 2
      // Predicated region
      $region89: #{headmodel_forward.1} parent=5 // pred_check
        %p553 = pneg %p552
      $region90: #{headmodel_forward.1} parent=5 // pred_check_branch
        %555 = sbr.rel (%p553) target = $region92
      $region91: #{headmodel_forward.1} parent=5 // pred_region
        // Predicated region
        $region93: #{headmodel_forward.1} parent=91 // pred_check
          %p556 = pneg %p49
        $region94: #{headmodel_forward.1} parent=91 // pred_check_branch
          %558 = sbr.rel (%p556) target = $region96
        $region95: #{headmodel_forward.1} parent=91 // pred_region
          %p559 = scmp.lt.s32.totalorder %s29, 1
          %s560 = scalar_select %p559, %s29, 1
          %s561 = smul.addr %s560, 8
          %s562 = smul.addr %s561, 8
          %s563 = scalar_lea.vmem %s0, %s562
        $region96: #{headmodel_forward.1} parent=91 // pred_fallthru
          _
      $region92: #{headmodel_forward.1} parent=5 // pred_fallthru
        _
      %p564 = scmp.le.s32.totalorder 1, %s29
      %p565 = scmp.lt.s32.totalorder %s29, 3
      %p566 = pnand %p564, %p565
      %p567 = pneg %p566
      // Predicated region
      $region97: #{headmodel_forward.1} parent=5 // pred_check
        _
      $region98: #{headmodel_forward.1} parent=5 // pred_check_branch
        %569 = sbr.rel (%p566) target = $region100
      $region99: #{headmodel_forward.1} parent=5 // pred_region
        %s570 = ssub.s32 %s29, 1
        %p571 = scmp.lt.s32.totalorder %s34, 1
        %s572 = scalar_select %p571, %s34, 1
        %s573 = smul.addr %s572, 8
        %s574 = smul.addr %s573, 8
        %s575 = scalar_lea.vmem %s0, %s574
        %p576 = pneg %p55
        %p577 = pneg %p52
        %p578 = pneg %p76
        %p579 = pneg %p73
        %p580 = pneg %p97
        %p581 = pneg %p94
        %p582 = pneg %p118
        %p583 = pneg %p115
        %p584 = pneg %p139
        %p585 = pneg %p136
        %p586 = pneg %p160
        %p587 = pneg %p157
        %p588 = pneg %p181
        %p589 = pneg %p178
        %p590 = pneg %p202
        %p591 = pneg %p199
        %p592 = pneg %p223
        %p593 = pneg %p220
        %p594 = pneg %p244
        %p595 = pneg %p241
        %p596 = pneg %p265
        %p597 = pneg %p262
        %p598 = pneg %p286
        %p599 = pneg %p283
        %p600 = pneg %p307
        %p601 = pneg %p304
        %p602 = pneg %p328
        %p603 = pneg %p325
        %p604 = pneg %p349
        %p605 = pneg %p346
        %p606 = pneg %p370
        %p607 = pneg %p367
        %p608 = pneg %p391
        %p609 = pneg %p388
        %p610 = pneg %p412
        %p611 = pneg %p409
        %p612 = pneg %p433
        %p613 = pneg %p430
        %p614 = pneg %p454
        %p615 = pneg %p451
        %p616 = pneg %p480
        %p617 = pneg %p477
        %s618 = sand.u32 %s467, 1
        %s619 = scalar_lea.sflag [#allocation5], %s618
        %s620 = sand.u32 %s467, 1
        %s621 = smul.addr %s620, 16
        %s622 = scalar_lea.vmem [#allocation4], %s621
        %p623 = scmp.lt.s32.totalorder %s34, 1
        %s624 = scalar_select %p623, %s34, 1
        %s625 = smul.addr %s624, 8
        %s626 = smul.addr %s625, 8
        %s627 = scalar_lea.vmem %s0, %s626
        %v628 = vld [vmem:[%s627] sm:$0xff]
        %v629 = vld [vmem:[%s627 + $0x8] sm:$0xff]
        %v630 = vld [vmem:[%s627 + $0x10] sm:$0xff]
        %v631 = vld [vmem:[%s627 + $0x18] sm:$0xff]
        %v632 = vld [vmem:[%s627 + $0x20] sm:$0xff]
        %v633 = vld [vmem:[%s627 + $0x28] sm:$0xff]
        %v634 = vld [vmem:[%s627 + $0x30] sm:$0xff]
        %v635 = vld [vmem:[%s627 + $0x38] sm:$0xff]
        %v636 = vld [vmem:[%s1] sm:$0xff]
        %v637 = vld [vmem:[%s1 + $0x8] sm:$0xff]
        %v638 = vld [vmem:[%s1 + $0x10] sm:$0xff]
        %v639 = vld [vmem:[%s1 + $0x18] sm:$0xff]
        %v640 = vld [vmem:[%s2] sm:$0x1]
        %v642 = vlaneseq
        %v643 = vshrl.u32 %v642, 7
        %v644 = vsub.s32 0, %v643
        %v645 = vrot.slane %v640, %v644
        %vm647 = vcmask 261120
        %v649 = vsel %vm647, %v628, 0
        %v652 = vsel %vm647, %v629, 0
        %v655 = vsel %vm647, %v630, 0
        %v658 = vsel %vm647, %v631, 0
        %v661 = vsel %vm647, %v632, 0
        %v664 = vsel %vm647, %v633, 0
        %v667 = vsel %vm647, %v634, 0
        %v670 = vsel %vm647, %v635, 0
        %672 = vmatprep.subr.mxu0 0.0
        %673 = vmatpush1.msra.mxu0 %v636
        %674 = vmatprep.subr.mxu0 0.0
        %675 = vmatpush1.msra.mxu0 %v637
        %676 = vmatprep.subr.mxu0 0.0
        %677 = vmatpush1.msra.mxu0 %v638
        %678 = vmatprep.subr.mxu0 0.0
        %679 = vmatpush1.msra.mxu0 %v639
        %680 = vmatprep.subr.mxu0 0.0
        %681 = vmatpush1.msra.mxu0 0.0
        %682 = vmatprep.subr.mxu0 0.0
        %683 = vmatpush1.msra.mxu0 0.0
        %684 = vmatprep.subr.mxu0 0.0
        %685 = vmatpush1.msra.mxu0 0.0
        %686 = vmatprep.subr.mxu0 0.0
        %687 = vmatpush1.msra.mxu0 0.0
        %688 = vmatprep.subr.mxu0 0.0
        %689 = vmatpush1.msra.mxu0 0.0
        %690 = vmatprep.subr.mxu0 0.0
        %691 = vmatpush1.msra.mxu0 0.0
        %692 = vmatprep.subr.mxu0 0.0
        %693 = vmatpush1.msra.mxu0 0.0
        %694 = vmatprep.subr.mxu0 0.0
        %695 = vmatpush1.msra.mxu0 0.0
        %696 = vmatprep.subr.mxu0 0.0
        %697 = vmatpush1.msra.mxu0 0.0
        %698 = vmatprep.subr.mxu0 0.0
        %699 = vmatpush1.msra.mxu0 0.0
        %700 = vmatprep.subr.mxu0 0.0
        %701 = vmatpush1.msra.mxu0 0.0
        %702 = vmatprep.subr.mxu0 0.0
        %703 = vmatpush1.msra.mxu0 0.0
        %704 = vmatprep.subr.mxu0 0.0
        %705 = vmatpush1.msra.mxu0 0.0
        %706 = vmatprep.subr.mxu0 0.0
        %707 = vmatpush1.msra.mxu0 0.0
        %708 = vmatprep.subr.mxu0 0.0
        %709 = vmatpush1.msra.mxu0 0.0
        %710 = vmatprep.subr.mxu0 0.0
        %711 = vmatpush1.msra.mxu0 0.0
        %712 = vmatprep.subr.mxu0 0.0
        %713 = vmatpush1.msra.mxu0 0.0
        %714 = vmatprep.subr.mxu0 0.0
        %715 = vmatpush1.msra.mxu0 0.0
        %716 = vmatprep.subr.mxu0 0.0
        %717 = vmatpush1.msra.mxu0 0.0
        %718 = vmatprep.subr.mxu0 0.0
        %719 = vmatpush1.msra.mxu0 0.0
        %720 = vmatprep.subr.mxu0 0.0
        %721 = vmatpush1.msra.mxu0 0.0
        %722 = vmatprep.subr.mxu0 0.0
        %723 = vmatpush1.msra.mxu0 0.0
        %724 = vmatprep.subr.mxu0 0.0
        %725 = vmatpush1.msra.mxu0 0.0
        %726 = vmatprep.subr.mxu0 0.0
        %727 = vmatpush1.msra.mxu0 0.0
        %728 = vmatprep.subr.mxu0 0.0
        %729 = vmatpush1.msra.mxu0 0.0
        %730 = vmatprep.subr.mxu0 0.0
        %731 = vmatpush1.msra.mxu0 0.0
        %732 = vmatprep.subr.mxu0 0.0
        %733 = vmatpush1.msra.mxu0 0.0
        %734 = vmatprep.subr.mxu0 0.0
        %735 = vmatpush1.msra.mxu0 0.0
        %736 = vmatprep.mubr.f32.mxu0 0.0
        %737 = vmatmul.mubr.f32.gmra.mrb[0].mxu0 %v649
        %v738 = vpop.f32.mrb[0].mxu0
        %v739 = vadd.f32 %v645, %v738
        %v740 = vpop.f32.mrb[0].mxu0
        %741 = vmatprep.mubr.f32.mxu0 0.0
        %742 = vmatmul.mubr.f32.gmra.mrb[0].mxu0 %v652
        %v743 = vpop.f32.mrb[0].mxu0
        %v744 = vadd.f32 %v645, %v743
        %v745 = vpop.f32.mrb[0].mxu0
        %746 = vmatprep.mubr.f32.mxu0 0.0
        %747 = vmatmul.mubr.f32.gmra.mrb[0].mxu0 %v655
        %v748 = vpop.f32.mrb[0].mxu0
        %v749 = vadd.f32 %v645, %v748
        %v750 = vpop.f32.mrb[0].mxu0
        %751 = vmatprep.mubr.f32.mxu0 0.0
        %752 = vmatmul.mubr.f32.gmra.mrb[0].mxu0 %v658
        %v753 = vpop.f32.mrb[0].mxu0
        %v754 = vadd.f32 %v645, %v753
        %v755 = vpop.f32.mrb[0].mxu0
        %756 = vmatprep.mubr.f32.mxu0 0.0
        %757 = vmatmul.mubr.f32.gmra.mrb[0].mxu0 %v661
        %v758 = vpop.f32.mrb[0].mxu0
        %v759 = vadd.f32 %v645, %v758
        %v760 = vpop.f32.mrb[0].mxu0
        %761 = vmatprep.mubr.f32.mxu0 0.0
        %762 = vmatmul.mubr.f32.gmra.mrb[0].mxu0 %v664
        %v763 = vpop.f32.mrb[0].mxu0
        %v764 = vadd.f32 %v645, %v763
        %v765 = vpop.f32.mrb[0].mxu0
        %766 = vmatprep.mubr.f32.mxu0 0.0
        %767 = vmatmul.mubr.f32.gmra.mrb[0].mxu0 %v667
        %v768 = vpop.f32.mrb[0].mxu0
        %v769 = vadd.f32 %v645, %v768
        %v770 = vpop.f32.mrb[0].mxu0
        %771 = vmatprep.mubr.f32.mxu0 0.0
        %772 = vmatmul.mubr.f32.gmra.mrb[0].mxu0 %v670
        %v773 = vpop.f32.mrb[0].mxu0
        %v774 = vadd.f32 %v645, %v773
        %v775 = vpop.f32.mrb[0].mxu0
        %776 = vdwg.mxu0
        %v777 = vxor.u32 %v739, 2147483648
        %v778 = vxor.u32 %v744, 2147483648
        %v779 = vxor.u32 %v749, 2147483648
        %v780 = vxor.u32 %v754, 2147483648
        %v781 = vxor.u32 %v759, 2147483648
        %v782 = vxor.u32 %v764, 2147483648
        %v783 = vxor.u32 %v769, 2147483648
        %v784 = vxor.u32 %v774, 2147483648
        %v785 = vmul.f32 %v777, 1.442695
        %v786 = vpow.pop %v785
        %v787 = vmul.f32 %v778, 1.442695
        %v788 = vpow.pop %v787
        %v789 = vmul.f32 %v779, 1.442695
        %v790 = vpow.pop %v789
        %v791 = vmul.f32 %v780, 1.442695
        %v792 = vpow.pop %v791
        %v793 = vmul.f32 %v781, 1.442695
        %v794 = vpow.pop %v793
        %v795 = vmul.f32 %v782, 1.442695
        %v796 = vpow.pop %v795
        %v797 = vmul.f32 %v783, 1.442695
        %v798 = vpow.pop %v797
        %v799 = vmul.f32 %v784, 1.442695
        %v800 = vpow.pop %v799
        %v801 = vadd.f32 %v786, 1.0
        %v802 = vadd.f32 %v788, 1.0
        %v803 = vadd.f32 %v790, 1.0
        %v804 = vadd.f32 %v792, 1.0
        %v805 = vadd.f32 %v794, 1.0
        %v806 = vadd.f32 %v796, 1.0
        %v807 = vadd.f32 %v798, 1.0
        %v808 = vadd.f32 %v800, 1.0
        %v809 = vrcp.pop %v801
        %v810 = vmul.f32 1.0, %v809
        %v811 = vrcp.pop %v802
        %v812 = vmul.f32 1.0, %v811
        %v813 = vrcp.pop %v803
        %v814 = vmul.f32 1.0, %v813
        %v815 = vrcp.pop %v804
        %v816 = vmul.f32 1.0, %v815
        %v817 = vrcp.pop %v805
        %v818 = vmul.f32 1.0, %v817
        %v819 = vrcp.pop %v806
        %v820 = vmul.f32 1.0, %v819
        %v821 = vrcp.pop %v807
        %v822 = vmul.f32 1.0, %v821
        %v823 = vrcp.pop %v808
        %v824 = vmul.f32 1.0, %v823
        %v825 = vmul.f32 %v739, %v810
        %v826 = vmul.f32 %v744, %v812
        %v827 = vmul.f32 %v749, %v814
        %v828 = vmul.f32 %v754, %v816
        %v829 = vmul.f32 %v759, %v818
        %v830 = vmul.f32 %v764, %v820
        %v831 = vmul.f32 %v769, %v822
        %v832 = vmul.f32 %v774, %v824
        %833 = vst.msk [vmem:[#allocation2] sm:$0xff] %vm647, 0.0
        %vm834 = vcmask 254976
        %835 = vst.msk [vmem:[#allocation2 + $0x8] sm:$0x3] %vm834, 0.0
        %836 = vst.msk [vmem:[#allocation2 + $0x10] sm:$0xff] %vm647, 0.0
        %837 = vst.msk [vmem:[#allocation2 + $0x18] sm:$0x3] %vm834, 0.0
        %838 = vst.msk [vmem:[#allocation2 + $0x20] sm:$0xff] %vm647, 0.0
        %839 = vst.msk [vmem:[#allocation2 + $0x28] sm:$0x3] %vm834, 0.0
        %840 = vst.msk [vmem:[#allocation2 + $0x30] sm:$0xff] %vm647, 0.0
        %841 = vst.msk [vmem:[#allocation2 + $0x38] sm:$0x3] %vm834, 0.0
        %842 = vst.msk [vmem:[#allocation2 + $0x40] sm:$0xff] %vm647, 0.0
        %843 = vst.msk [vmem:[#allocation2 + $0x48] sm:$0x3] %vm834, 0.0
        %844 = vst.msk [vmem:[#allocation2 + $0x50] sm:$0xff] %vm647, 0.0
        %845 = vst.msk [vmem:[#allocation2 + $0x58] sm:$0x3] %vm834, 0.0
        %846 = vst.msk [vmem:[#allocation2 + $0x60] sm:$0xff] %vm647, 0.0
        %847 = vst.msk [vmem:[#allocation2 + $0x68] sm:$0x3] %vm834, 0.0
        %848 = vst.msk [vmem:[#allocation2 + $0x70] sm:$0xff] %vm647, 0.0
        %849 = vst.msk [vmem:[#allocation2 + $0x78] sm:$0x3] %vm834, 0.0
        %850 = vst.msk [vmem:[#allocation2 + $0x80] sm:$0xff] %vm647, 0.0
        %851 = vst.msk [vmem:[#allocation2 + $0x88] sm:$0x3] %vm834, 0.0
        %852 = vst.msk [vmem:[#allocation2 + $0x90] sm:$0xff] %vm647, 0.0
        %853 = vst.msk [vmem:[#allocation2 + $0x98] sm:$0x3] %vm834, 0.0
        %s854 = scalar_lea.vmem [#allocation2], 16
        %855 = vst.msk [vmem:[%s854 + $0x1] sm:$0xff] %vm647, %v825
        %856 = vst.msk [vmem:[%s854 + $0x11] sm:$0xff] %vm647, %v826
        %857 = vst.msk [vmem:[%s854 + $0x21] sm:$0xff] %vm647, %v827
        %858 = vst.msk [vmem:[%s854 + $0x31] sm:$0xff] %vm647, %v828
        %859 = vst.msk [vmem:[%s854 + $0x41] sm:$0xff] %vm647, %v829
        %860 = vst.msk [vmem:[%s854 + $0x51] sm:$0xff] %vm647, %v830
        %861 = vst.msk [vmem:[%s854 + $0x61] sm:$0xff] %vm647, %v831
        %862 = vst.msk [vmem:[%s854 + $0x71] sm:$0xff] %vm647, %v832
        %v863 = vld [vmem:[%s3] sm:$0xff]
        %v864 = vld [vmem:[%s3 + $0x8] sm:$0x1]
        %v865 = vld [vmem:[#allocation2] sm:$0xff]
        %v866 = vld [vmem:[#allocation2 + $0x10] sm:$0xff]
        %v867 = vld [vmem:[#allocation2 + $0x20] sm:$0xff]
        %v868 = vld [vmem:[#allocation2 + $0x30] sm:$0xff]
        %v869 = vld [vmem:[#allocation2 + $0x40] sm:$0xff]
        %v870 = vld [vmem:[#allocation2 + $0x50] sm:$0xff]
        %v871 = vld [vmem:[#allocation2 + $0x60] sm:$0xff]
        %v872 = vld [vmem:[#allocation2 + $0x70] sm:$0xff]
        %v873 = vlaneseq
        %v874 = vshrl.u32 %v873, 7
        %v875 = vsub.s32 0, %v874
        %v876 = vrot.slane %v863, %v875
        %v877 = vmul.f32 %v865, %v876
        %v878 = vmul.f32 %v866, %v876
        %v879 = vmul.f32 %v867, %v876
        %v880 = vmul.f32 %v868, %v876
        %v881 = vmul.f32 %v869, %v876
        %v882 = vmul.f32 %v870, %v876
        %v883 = vmul.f32 %v871, %v876
        %v884 = vmul.f32 %v872, %v876
        %v885 = vld [vmem:[#allocation2 + $0x1] sm:$0xff]
        %v886 = vld [vmem:[#allocation2 + $0x11] sm:$0xff]
        %v887 = vld [vmem:[#allocation2 + $0x21] sm:$0xff]
        %v888 = vld [vmem:[#allocation2 + $0x31] sm:$0xff]
        %v889 = vld [vmem:[#allocation2 + $0x41] sm:$0xff]
        %v890 = vld [vmem:[#allocation2 + $0x51] sm:$0xff]
        %v891 = vld [vmem:[#allocation2 + $0x61] sm:$0xff]
        %v892 = vld [vmem:[#allocation2 + $0x71] sm:$0xff]
        %v893 = vlaneseq
        %v894 = vshrl.u32 %v893, 7
        %v895 = vsub.s32 1, %v894
        %v896 = vrot.slane %v863, %v895
        %v897 = vmul.f32 %v885, %v896
        %v898 = vmul.f32 %v886, %v896
        %v899 = vmul.f32 %v887, %v896
        %v900 = vmul.f32 %v888, %v896
        %v901 = vmul.f32 %v889, %v896
        %v902 = vmul.f32 %v890, %v896
        %v903 = vmul.f32 %v891, %v896
        %v904 = vmul.f32 %v892, %v896
        %v905 = vadd.f32 %v877, %v897
        %v906 = vadd.f32 %v878, %v898
        %v907 = vadd.f32 %v879, %v899
        %v908 = vadd.f32 %v880, %v900
        %v909 = vadd.f32 %v881, %v901
        %v910 = vadd.f32 %v882, %v902
        %v911 = vadd.f32 %v883, %v903
        %v912 = vadd.f32 %v884, %v904
        %v913 = vld [vmem:[#allocation2 + $0x2] sm:$0xff]
        %v914 = vld [vmem:[#allocation2 + $0x12] sm:$0xff]
        %v915 = vld [vmem:[#allocation2 + $0x22] sm:$0xff]
        %v916 = vld [vmem:[#allocation2 + $0x32] sm:$0xff]
        %v917 = vld [vmem:[#allocation2 + $0x42] sm:$0xff]
        %v918 = vld [vmem:[#allocation2 + $0x52] sm:$0xff]
        %v919 = vld [vmem:[#allocation2 + $0x62] sm:$0xff]
        %v920 = vld [vmem:[#allocation2 + $0x72] sm:$0xff]
        %v921 = vlaneseq
        %v922 = vshrl.u32 %v921, 7
        %v923 = vsub.s32 2, %v922
        %v924 = vrot.slane %v863, %v923
        %v925 = vmul.f32 %v913, %v924
        %v926 = vmul.f32 %v914, %v924
        %v927 = vmul.f32 %v915, %v924
        %v928 = vmul.f32 %v916, %v924
        %v929 = vmul.f32 %v917, %v924
        %v930 = vmul.f32 %v918, %v924
        %v931 = vmul.f32 %v919, %v924
        %v932 = vmul.f32 %v920, %v924
        %v933 = vadd.f32 %v905, %v925
        %v934 = vadd.f32 %v906, %v926
        %v935 = vadd.f32 %v907, %v927
        %v936 = vadd.f32 %v908, %v928
        %v937 = vadd.f32 %v909, %v929
        %v938 = vadd.f32 %v910, %v930
        %v939 = vadd.f32 %v911, %v931
        %v940 = vadd.f32 %v912, %v932
        %v941 = vld [vmem:[%s854] sm:$0xff]
        %v942 = vld [vmem:[%s854 + $0x10] sm:$0xff]
        %v943 = vld [vmem:[%s854 + $0x20] sm:$0xff]
        %v944 = vld [vmem:[%s854 + $0x30] sm:$0xff]
        %v945 = vld [vmem:[%s854 + $0x40] sm:$0xff]
        %v946 = vld [vmem:[%s854 + $0x50] sm:$0xff]
        %v947 = vld [vmem:[%s854 + $0x60] sm:$0xff]
        %v948 = vld [vmem:[%s854 + $0x70] sm:$0xff]
        %v949 = vlaneseq
        %v950 = vshrl.u32 %v949, 7
        %v951 = vsub.s32 3, %v950
        %v952 = vrot.slane %v863, %v951
        %v953 = vmul.f32 %v941, %v952
        %v954 = vmul.f32 %v942, %v952
        %v955 = vmul.f32 %v943, %v952
        %v956 = vmul.f32 %v944, %v952
        %v957 = vmul.f32 %v945, %v952
        %v958 = vmul.f32 %v946, %v952
        %v959 = vmul.f32 %v947, %v952
        %v960 = vmul.f32 %v948, %v952
        %v961 = vadd.f32 %v933, %v953
        %v962 = vadd.f32 %v934, %v954
        %v963 = vadd.f32 %v935, %v955
        %v964 = vadd.f32 %v936, %v956
        %v965 = vadd.f32 %v937, %v957
        %v966 = vadd.f32 %v938, %v958
        %v967 = vadd.f32 %v939, %v959
        %v968 = vadd.f32 %v940, %v960
        %v969 = vld [vmem:[%s854 + $0x1] sm:$0xff]
        %v970 = vld [vmem:[%s854 + $0x11] sm:$0xff]
        %v971 = vld [vmem:[%s854 + $0x21] sm:$0xff]
        %v972 = vld [vmem:[%s854 + $0x31] sm:$0xff]
        %v973 = vld [vmem:[%s854 + $0x41] sm:$0xff]
        %v974 = vld [vmem:[%s854 + $0x51] sm:$0xff]
        %v975 = vld [vmem:[%s854 + $0x61] sm:$0xff]
        %v976 = vld [vmem:[%s854 + $0x71] sm:$0xff]
        %v977 = vlaneseq
        %v978 = vshrl.u32 %v977, 7
        %v979 = vsub.s32 4, %v978
        %v980 = vrot.slane %v863, %v979
        %v981 = vmul.f32 %v969, %v980
        %v982 = vmul.f32 %v970, %v980
        %v983 = vmul.f32 %v971, %v980
        %v984 = vmul.f32 %v972, %v980
        %v985 = vmul.f32 %v973, %v980
        %v986 = vmul.f32 %v974, %v980
        %v987 = vmul.f32 %v975, %v980
        %v988 = vmul.f32 %v976, %v980
        %v989 = vadd.f32 %v961, %v981
        %v990 = vadd.f32 %v962, %v982
        %v991 = vadd.f32 %v963, %v983
        %v992 = vadd.f32 %v964, %v984
        %v993 = vadd.f32 %v965, %v985
        %v994 = vadd.f32 %v966, %v986
        %v995 = vadd.f32 %v967, %v987
        %v996 = vadd.f32 %v968, %v988
        %v997 = vld [vmem:[%s854 + $0x2] sm:$0xff]
        %v998 = vld [vmem:[%s854 + $0x12] sm:$0xff]
        %v999 = vld [vmem:[%s854 + $0x22] sm:$0xff]
        %v1000 = vld [vmem:[%s854 + $0x32] sm:$0xff]
        %v1001 = vld [vmem:[%s854 + $0x42] sm:$0xff]
        %v1002 = vld [vmem:[%s854 + $0x52] sm:$0xff]
        %v1003 = vld [vmem:[%s854 + $0x62] sm:$0xff]
        %v1004 = vld [vmem:[%s854 + $0x72] sm:$0xff]
        %v1005 = vlaneseq
        %v1006 = vshrl.u32 %v1005, 7
        %v1007 = vsub.s32 5, %v1006
        %v1008 = vrot.slane %v863, %v1007
        %v1009 = vmul.f32 %v997, %v1008
        %v1010 = vmul.f32 %v998, %v1008
        %v1011 = vmul.f32 %v999, %v1008
        %v1012 = vmul.f32 %v1000, %v1008
        %v1013 = vmul.f32 %v1001, %v1008
        %v1014 = vmul.f32 %v1002, %v1008
        %v1015 = vmul.f32 %v1003, %v1008
        %v1016 = vmul.f32 %v1004, %v1008
        %v1017 = vadd.f32 %v989, %v1009
        %v1018 = vadd.f32 %v990, %v1010
        %v1019 = vadd.f32 %v991, %v1011
        %v1020 = vadd.f32 %v992, %v1012
        %v1021 = vadd.f32 %v993, %v1013
        %v1022 = vadd.f32 %v994, %v1014
        %v1023 = vadd.f32 %v995, %v1015
        %v1024 = vadd.f32 %v996, %v1016
        %s1025 = scalar_lea.vmem [#allocation2], 32
        %v1026 = vld [vmem:[%s1025] sm:$0xff]
        %v1027 = vld [vmem:[%s1025 + $0x10] sm:$0xff]
        %v1028 = vld [vmem:[%s1025 + $0x20] sm:$0xff]
        %v1029 = vld [vmem:[%s1025 + $0x30] sm:$0xff]
        %v1030 = vld [vmem:[%s1025 + $0x40] sm:$0xff]
        %v1031 = vld [vmem:[%s1025 + $0x50] sm:$0xff]
        %v1032 = vld [vmem:[%s1025 + $0x60] sm:$0xff]
        %v1033 = vld [vmem:[%s1025 + $0x70] sm:$0xff]
        %v1034 = vlaneseq
        %v1035 = vshrl.u32 %v1034, 7
        %v1036 = vsub.s32 6, %v1035
        %v1037 = vrot.slane %v863, %v1036
        %v1038 = vmul.f32 %v1026, %v1037
        %v1039 = vmul.f32 %v1027, %v1037
        %v1040 = vmul.f32 %v1028, %v1037
        %v1041 = vmul.f32 %v1029, %v1037
        %v1042 = vmul.f32 %v1030, %v1037
        %v1043 = vmul.f32 %v1031, %v1037
        %v1044 = vmul.f32 %v1032, %v1037
        %v1045 = vmul.f32 %v1033, %v1037
        %v1046 = vadd.f32 %v1017, %v1038
        %v1047 = vadd.f32 %v1018, %v1039
        %v1048 = vadd.f32 %v1019, %v1040
        %v1049 = vadd.f32 %v1020, %v1041
        %v1050 = vadd.f32 %v1021, %v1042
        %v1051 = vadd.f32 %v1022, %v1043
        %v1052 = vadd.f32 %v1023, %v1044
        %v1053 = vadd.f32 %v1024, %v1045
        %v1054 = vld [vmem:[%s1025 + $0x1] sm:$0xff]
        %v1055 = vld [vmem:[%s1025 + $0x11] sm:$0xff]
        %v1056 = vld [vmem:[%s1025 + $0x21] sm:$0xff]
        %v1057 = vld [vmem:[%s1025 + $0x31] sm:$0xff]
        %v1058 = vld [vmem:[%s1025 + $0x41] sm:$0xff]
        %v1059 = vld [vmem:[%s1025 + $0x51] sm:$0xff]
        %v1060 = vld [vmem:[%s1025 + $0x61] sm:$0xff]
        %v1061 = vld [vmem:[%s1025 + $0x71] sm:$0xff]
        %v1062 = vlaneseq
        %v1063 = vshrl.u32 %v1062, 7
        %v1064 = vsub.s32 7, %v1063
        %v1065 = vrot.slane %v863, %v1064
        %v1066 = vmul.f32 %v1054, %v1065
        %v1067 = vmul.f32 %v1055, %v1065
        %v1068 = vmul.f32 %v1056, %v1065
        %v1069 = vmul.f32 %v1057, %v1065
        %v1070 = vmul.f32 %v1058, %v1065
        %v1071 = vmul.f32 %v1059, %v1065
        %v1072 = vmul.f32 %v1060, %v1065
        %v1073 = vmul.f32 %v1061, %v1065
        %v1074 = vadd.f32 %v1046, %v1066
        %v1075 = vadd.f32 %v1047, %v1067
        %v1076 = vadd.f32 %v1048, %v1068
        %v1077 = vadd.f32 %v1049, %v1069
        %v1078 = vadd.f32 %v1050, %v1070
        %v1079 = vadd.f32 %v1051, %v1071
        %v1080 = vadd.f32 %v1052, %v1072
        %v1081 = vadd.f32 %v1053, %v1073
        %v1082 = vld [vmem:[%s1025 + $0x2] sm:$0xff]
        %v1083 = vld [vmem:[%s1025 + $0x12] sm:$0xff]
        %v1084 = vld [vmem:[%s1025 + $0x22] sm:$0xff]
        %v1085 = vld [vmem:[%s1025 + $0x32] sm:$0xff]
        %v1086 = vld [vmem:[%s1025 + $0x42] sm:$0xff]
        %v1087 = vld [vmem:[%s1025 + $0x52] sm:$0xff]
        %v1088 = vld [vmem:[%s1025 + $0x62] sm:$0xff]
        %v1089 = vld [vmem:[%s1025 + $0x72] sm:$0xff]
        %v1090 = vlaneseq
        %v1091 = vshrl.u32 %v1090, 7
        %v1092 = vsub.s32 0, %v1091
        %v1093 = vrot.slane %v864, %v1092
        %v1094 = vmul.f32 %v1082, %v1093
        %v1095 = vmul.f32 %v1083, %v1093
        %v1096 = vmul.f32 %v1084, %v1093
        %v1097 = vmul.f32 %v1085, %v1093
        %v1098 = vmul.f32 %v1086, %v1093
        %v1099 = vmul.f32 %v1087, %v1093
        %v1100 = vmul.f32 %v1088, %v1093
        %v1101 = vmul.f32 %v1089, %v1093
        %v1102 = vadd.f32 %v1074, %v1094
        %v1103 = vadd.f32 %v1075, %v1095
        %v1104 = vadd.f32 %v1076, %v1096
        %v1105 = vadd.f32 %v1077, %v1097
        %v1106 = vadd.f32 %v1078, %v1098
        %v1107 = vadd.f32 %v1079, %v1099
        %v1108 = vadd.f32 %v1080, %v1100
        %v1109 = vadd.f32 %v1081, %v1101
        %v1110 = vld [vmem:[%s4] sm:$0x1]
        %v1112 = vlaneseq
        %v1113 = vshrl.u32 %v1112, 7
        %v1114 = vsub.s32 0, %v1113
        %v1115 = vrot.slane %v1110, %v1114
        %v1117 = vadd.f32 %v1102, %v1115
        %v1118 = vadd.f32 %v1103, %v1115
        %v1119 = vadd.f32 %v1104, %v1115
        %v1120 = vadd.f32 %v1105, %v1115
        %v1121 = vadd.f32 %v1106, %v1115
        %v1122 = vadd.f32 %v1107, %v1115
        %v1123 = vadd.f32 %v1108, %v1115
        %v1124 = vadd.f32 %v1109, %v1115
        %v1125 = vxor.u32 %v1117, 2147483648
        %v1126 = vxor.u32 %v1118, 2147483648
        %v1127 = vxor.u32 %v1119, 2147483648
        %v1128 = vxor.u32 %v1120, 2147483648
        %v1129 = vxor.u32 %v1121, 2147483648
        %v1130 = vxor.u32 %v1122, 2147483648
        %v1131 = vxor.u32 %v1123, 2147483648
        %v1132 = vxor.u32 %v1124, 2147483648
        %v1133 = vmul.f32 %v1125, 1.442695
        %v1134 = vpow.pop %v1133
        %v1135 = vmul.f32 %v1126, 1.442695
        %v1136 = vpow.pop %v1135
        %v1137 = vmul.f32 %v1127, 1.442695
        %v1138 = vpow.pop %v1137
        %v1139 = vmul.f32 %v1128, 1.442695
        %v1140 = vpow.pop %v1139
        %v1141 = vmul.f32 %v1129, 1.442695
        %v1142 = vpow.pop %v1141
        %v1143 = vmul.f32 %v1130, 1.442695
        %v1144 = vpow.pop %v1143
        %v1145 = vmul.f32 %v1131, 1.442695
        %v1146 = vpow.pop %v1145
        %v1147 = vmul.f32 %v1132, 1.442695
        %v1148 = vpow.pop %v1147
        %v1149 = vadd.f32 %v1134, 1.0
        %v1150 = vadd.f32 %v1136, 1.0
        %v1151 = vadd.f32 %v1138, 1.0
        %v1152 = vadd.f32 %v1140, 1.0
        %v1153 = vadd.f32 %v1142, 1.0
        %v1154 = vadd.f32 %v1144, 1.0
        %v1155 = vadd.f32 %v1146, 1.0
        %v1156 = vadd.f32 %v1148, 1.0
        %v1157 = vrcp.pop %v1149
        %v1158 = vmul.f32 1.0, %v1157
        %v1159 = vrcp.pop %v1150
        %v1160 = vmul.f32 1.0, %v1159
        %v1161 = vrcp.pop %v1151
        %v1162 = vmul.f32 1.0, %v1161
        %v1163 = vrcp.pop %v1152
        %v1164 = vmul.f32 1.0, %v1163
        %v1165 = vrcp.pop %v1153
        %v1166 = vmul.f32 1.0, %v1165
        %v1167 = vrcp.pop %v1154
        %v1168 = vmul.f32 1.0, %v1167
        %v1169 = vrcp.pop %v1155
        %v1170 = vmul.f32 1.0, %v1169
        %v1171 = vrcp.pop %v1156
        %v1172 = vmul.f32 1.0, %v1171
        %v1173 = vmul.f32 %v1117, %v1158
        %v1174 = vmul.f32 %v1118, %v1160
        %v1175 = vmul.f32 %v1119, %v1162
        %v1176 = vmul.f32 %v1120, %v1164
        %v1177 = vmul.f32 %v1121, %v1166
        %v1178 = vmul.f32 %v1122, %v1168
        %v1179 = vmul.f32 %v1123, %v1170
        %v1180 = vmul.f32 %v1124, %v1172
        %v1181 = vsel %vm647, %v1173, 0.0
        %v1182 = vsel %vm647, %v1174, 0.0
        %v1183 = vadd.f32 %v1181, %v1182
        %v1184 = vsel %vm647, %v1175, 0.0
        %v1185 = vadd.f32 %v1183, %v1184
        %v1186 = vsel %vm647, %v1176, 0.0
        %v1187 = vadd.f32 %v1185, %v1186
        %v1188 = vsel %vm647, %v1177, 0.0
        %v1189 = vadd.f32 %v1187, %v1188
        %v1190 = vsel %vm647, %v1178, 0.0
        %v1191 = vadd.f32 %v1189, %v1190
        %v1192 = vsel %vm647, %v1179, 0.0
        %v1193 = vadd.f32 %v1191, %v1192
        %v1194 = vsel %vm647, %v1180, 0.0
        %v1195 = vadd.f32 %v1193, %v1194
        %v1196 = vrot.slane %v1195, 4
        %v1197 = vadd.f32 %v1195, %v1196
        %v1198 = vrot.slane %v1197, 2
        %v1199 = vadd.f32 %v1197, %v1198
        %v1200 = vrot.slane %v1199, 1
        %v1201 = vadd.f32 %v1199, %v1200
        %v1202 = vmul.f32 %v1201, 0.015625
        %v1203 = vld [vmem:[%s5] sm:$0xff]
        %v1204 = vld [vmem:[%s5 + $0x8] sm:$0xff]
        %v1205 = vld [vmem:[%s5 + $0x10] sm:$0xff]
        %v1206 = vld [vmem:[%s5 + $0x18] sm:$0xff]
        %v1207 = vld [vmem:[%s6] sm:$0x1]
        %v1209 = vsel %vm647, %v1202, 0
        %1211 = vmatprep.subr.mxu0 0.0
        %1212 = vmatpush1.msra.mxu0 %v1203
        %1213 = vmatprep.subr.mxu0 0.0
        %1214 = vmatpush1.msra.mxu0 %v1204
        %1215 = vmatprep.subr.mxu0 0.0
        %1216 = vmatpush1.msra.mxu0 %v1205
        %1217 = vmatprep.subr.mxu0 0.0
        %1218 = vmatpush1.msra.mxu0 %v1206
        %1219 = vmatprep.subr.mxu0 0.0
        %1220 = vmatpush1.msra.mxu0 0.0
        %1221 = vmatprep.subr.mxu0 0.0
        %1222 = vmatpush1.msra.mxu0 0.0
        %1223 = vmatprep.subr.mxu0 0.0
        %1224 = vmatpush1.msra.mxu0 0.0
        %1225 = vmatprep.subr.mxu0 0.0
        %1226 = vmatpush1.msra.mxu0 0.0
        %1227 = vmatprep.subr.mxu0 0.0
        %1228 = vmatpush1.msra.mxu0 0.0
        %1229 = vmatprep.subr.mxu0 0.0
        %1230 = vmatpush1.msra.mxu0 0.0
        %1231 = vmatprep.subr.mxu0 0.0
        %1232 = vmatpush1.msra.mxu0 0.0
        %1233 = vmatprep.subr.mxu0 0.0
        %1234 = vmatpush1.msra.mxu0 0.0
        %1235 = vmatprep.subr.mxu0 0.0
        %1236 = vmatpush1.msra.mxu0 0.0
        %1237 = vmatprep.subr.mxu0 0.0
        %1238 = vmatpush1.msra.mxu0 0.0
        %1239 = vmatprep.subr.mxu0 0.0
        %1240 = vmatpush1.msra.mxu0 0.0
        %1241 = vmatprep.subr.mxu0 0.0
        %1242 = vmatpush1.msra.mxu0 0.0
        %1243 = vmatprep.subr.mxu0 0.0
        %1244 = vmatpush1.msra.mxu0 0.0
        %1245 = vmatprep.subr.mxu0 0.0
        %1246 = vmatpush1.msra.mxu0 0.0
        %1247 = vmatprep.subr.mxu0 0.0
        %1248 = vmatpush1.msra.mxu0 0.0
        %1249 = vmatprep.subr.mxu0 0.0
        %1250 = vmatpush1.msra.mxu0 0.0
        %1251 = vmatprep.subr.mxu0 0.0
        %1252 = vmatpush1.msra.mxu0 0.0
        %1253 = vmatprep.subr.mxu0 0.0
        %1254 = vmatpush1.msra.mxu0 0.0
        %1255 = vmatprep.subr.mxu0 0.0
        %1256 = vmatpush1.msra.mxu0 0.0
        %1257 = vmatprep.subr.mxu0 0.0
        %1258 = vmatpush1.msra.mxu0 0.0
        %1259 = vmatprep.subr.mxu0 0.0
        %1260 = vmatpush1.msra.mxu0 0.0
        %1261 = vmatprep.subr.mxu0 0.0
        %1262 = vmatpush1.msra.mxu0 0.0
        %1263 = vmatprep.subr.mxu0 0.0
        %1264 = vmatpush1.msra.mxu0 0.0
        %1265 = vmatprep.subr.mxu0 0.0
        %1266 = vmatpush1.msra.mxu0 0.0
        %1267 = vmatprep.subr.mxu0 0.0
        %1268 = vmatpush1.msra.mxu0 0.0
        %1269 = vmatprep.subr.mxu0 0.0
        %1270 = vmatpush1.msra.mxu0 0.0
        %1271 = vmatprep.subr.mxu0 0.0
        %1272 = vmatpush1.msra.mxu0 0.0
        %1273 = vmatprep.subr.mxu0 0.0
        %1274 = vmatpush1.msra.mxu0 0.0
        %1275 = vmatprep.mubr.f32.mxu0 0.0
        %1276 = vmatmul.mubr.f32.gmra.mrb[0].mxu0 %v1209
        %v1277 = vpop.f32.mrb[0].mxu0
        %v1278 = vadd.f32 %v1207, %v1277
        %v1279 = vpop.f32.mrb[0].mxu0
        %1280 = vdwg.mxu0
        %v1281 = vxor.u32 %v1278, 2147483648
        %v1282 = vmul.f32 %v1281, 1.442695
        %v1283 = vpow.pop %v1282
        %v1284 = vadd.f32 %v1283, 1.0
        %v1285 = vrcp.pop %v1284
        %v1286 = vmul.f32 1.0, %v1285
        %v1287 = vmul.f32 %v1278, %v1286
        %v1288 = vld [vmem:[%s7] sm:$0xff]
        %v1289 = vld [vmem:[%s8] sm:$0x1]
        %vm1290 = vcmask 64512
        %v1292 = vsel %vm1290, %v1287, 0
        %1294 = vmatprep.subr.mxu0 0.0
        %1295 = vmatpush1.msra.mxu0 %v1288
        %1296 = vmatprep.subr.mxu0 0.0
        %1297 = vmatpush1.msra.mxu0 0.0
        %1298 = vmatprep.subr.mxu0 0.0
        %1299 = vmatpush1.msra.mxu0 0.0
        %1300 = vmatprep.subr.mxu0 0.0
        %1301 = vmatpush1.msra.mxu0 0.0
        %1302 = vmatprep.subr.mxu0 0.0
        %1303 = vmatpush1.msra.mxu0 0.0
        %1304 = vmatprep.subr.mxu0 0.0
        %1305 = vmatpush1.msra.mxu0 0.0
        %1306 = vmatprep.subr.mxu0 0.0
        %1307 = vmatpush1.msra.mxu0 0.0
        %1308 = vmatprep.subr.mxu0 0.0
        %1309 = vmatpush1.msra.mxu0 0.0
        %1310 = vmatprep.subr.mxu0 0.0
        %1311 = vmatpush1.msra.mxu0 0.0
        %1312 = vmatprep.subr.mxu0 0.0
        %1313 = vmatpush1.msra.mxu0 0.0
        %1314 = vmatprep.subr.mxu0 0.0
        %1315 = vmatpush1.msra.mxu0 0.0
        %1316 = vmatprep.subr.mxu0 0.0
        %1317 = vmatpush1.msra.mxu0 0.0
        %1318 = vmatprep.subr.mxu0 0.0
        %1319 = vmatpush1.msra.mxu0 0.0
        %1320 = vmatprep.subr.mxu0 0.0
        %1321 = vmatpush1.msra.mxu0 0.0
        %1322 = vmatprep.subr.mxu0 0.0
        %1323 = vmatpush1.msra.mxu0 0.0
        %1324 = vmatprep.subr.mxu0 0.0
        %1325 = vmatpush1.msra.mxu0 0.0
        %1326 = vmatprep.subr.mxu0 0.0
        %1327 = vmatpush1.msra.mxu0 0.0
        %1328 = vmatprep.subr.mxu0 0.0
        %1329 = vmatpush1.msra.mxu0 0.0
        %1330 = vmatprep.subr.mxu0 0.0
        %1331 = vmatpush1.msra.mxu0 0.0
        %1332 = vmatprep.subr.mxu0 0.0
        %1333 = vmatpush1.msra.mxu0 0.0
        %1334 = vmatprep.subr.mxu0 0.0
        %1335 = vmatpush1.msra.mxu0 0.0
        %1336 = vmatprep.subr.mxu0 0.0
        %1337 = vmatpush1.msra.mxu0 0.0
        %1338 = vmatprep.subr.mxu0 0.0
        %1339 = vmatpush1.msra.mxu0 0.0
        %1340 = vmatprep.subr.mxu0 0.0
        %1341 = vmatpush1.msra.mxu0 0.0
        %1342 = vmatprep.subr.mxu0 0.0
        %1343 = vmatpush1.msra.mxu0 0.0
        %1344 = vmatprep.subr.mxu0 0.0
        %1345 = vmatpush1.msra.mxu0 0.0
        %1346 = vmatprep.subr.mxu0 0.0
        %1347 = vmatpush1.msra.mxu0 0.0
        %1348 = vmatprep.subr.mxu0 0.0
        %1349 = vmatpush1.msra.mxu0 0.0
        %1350 = vmatprep.subr.mxu0 0.0
        %1351 = vmatpush1.msra.mxu0 0.0
        %1352 = vmatprep.subr.mxu0 0.0
        %1353 = vmatpush1.msra.mxu0 0.0
        %1354 = vmatprep.subr.mxu0 0.0
        %1355 = vmatpush1.msra.mxu0 0.0
        %1356 = vmatprep.subr.mxu0 0.0
        %1357 = vmatpush1.msra.mxu0 0.0
        %1358 = vmatprep.mubr.f32.mxu0 0.0
        %1359 = vmatmul.mubr.f32.gmra.mrb[0].mxu0 %v1292
        %v1360 = vpop.f32.mrb[0].mxu0
        %v1361 = vadd.f32 %v1289, %v1360
        %v1362 = vpop.f32.mrb[0].mxu0
        %1363 = vdwg.mxu0
        %v1364 = vxor.u32 %v1361, 2147483648
        %v1365 = vmul.f32 %v1364, 1.442695
        %v1366 = vpow.pop %v1365
        %v1367 = vadd.f32 %v1366, 1.0
        %v1368 = vrcp.pop %v1367
        %v1369 = vmul.f32 1.0, %v1368
        %v1370 = vlaneseq
        %v1371 = vshrl.u32 %v1370, 7
        %v1372 = vsub.s32 0, %v1371
        %v1373 = vrot.slane %v1369, %v1372
        %v1374 = vmul.f32 %v1173, %v1373
        %v1375 = vmul.f32 %v1174, %v1373
        %v1376 = vmul.f32 %v1175, %v1373
        %v1377 = vmul.f32 %v1176, %v1373
        %v1378 = vmul.f32 %v1177, %v1373
        %v1379 = vmul.f32 %v1178, %v1373
        %v1380 = vmul.f32 %v1179, %v1373
        %v1381 = vmul.f32 %v1180, %v1373
        %v1382 = vld [vmem:[%s9] sm:$0xff]
        %v1383 = vld [vmem:[%s9 + $0x8] sm:$0xff]
        %v1384 = vld [vmem:[%s9 + $0x10] sm:$0xff]
        %v1385 = vld [vmem:[%s9 + $0x18] sm:$0xff]
        %v1386 = vld [vmem:[%s10] sm:$0x1]
        %v1388 = vlaneseq
        %v1389 = vshrl.u32 %v1388, 7
        %v1390 = vsub.s32 0, %v1389
        %v1391 = vrot.slane %v1386, %v1390
        %v1394 = vsel %vm647, %v1374, 0
        %v1397 = vsel %vm647, %v1375, 0
        %v1400 = vsel %vm647, %v1376, 0
        %v1403 = vsel %vm647, %v1377, 0
        %v1406 = vsel %vm647, %v1378, 0
        %v1409 = vsel %vm647, %v1379, 0
        %v1412 = vsel %vm647, %v1380, 0
        %v1415 = vsel %vm647, %v1381, 0
        %1417 = vmatprep.subr.mxu0 0.0
        %1418 = vmatpush1.msra.mxu0 %v1382
        %1419 = vmatprep.subr.mxu0 0.0
        %1420 = vmatpush1.msra.mxu0 %v1383
        %1421 = vmatprep.subr.mxu0 0.0
        %1422 = vmatpush1.msra.mxu0 %v1384
        %1423 = vmatprep.subr.mxu0 0.0
        %1424 = vmatpush1.msra.mxu0 %v1385
        %1425 = vmatprep.subr.mxu0 0.0
        %1426 = vmatpush1.msra.mxu0 0.0
        %1427 = vmatprep.subr.mxu0 0.0
        %1428 = vmatpush1.msra.mxu0 0.0
        %1429 = vmatprep.subr.mxu0 0.0
        %1430 = vmatpush1.msra.mxu0 0.0
        %1431 = vmatprep.subr.mxu0 0.0
        %1432 = vmatpush1.msra.mxu0 0.0
        %1433 = vmatprep.subr.mxu0 0.0
        %1434 = vmatpush1.msra.mxu0 0.0
        %1435 = vmatprep.subr.mxu0 0.0
        %1436 = vmatpush1.msra.mxu0 0.0
        %1437 = vmatprep.subr.mxu0 0.0
        %1438 = vmatpush1.msra.mxu0 0.0
        %1439 = vmatprep.subr.mxu0 0.0
        %1440 = vmatpush1.msra.mxu0 0.0
        %1441 = vmatprep.subr.mxu0 0.0
        %1442 = vmatpush1.msra.mxu0 0.0
        %1443 = vmatprep.subr.mxu0 0.0
        %1444 = vmatpush1.msra.mxu0 0.0
        %1445 = vmatprep.subr.mxu0 0.0
        %1446 = vmatpush1.msra.mxu0 0.0
        %1447 = vmatprep.subr.mxu0 0.0
        %1448 = vmatpush1.msra.mxu0 0.0
        %1449 = vmatprep.subr.mxu0 0.0
        %1450 = vmatpush1.msra.mxu0 0.0
        %1451 = vmatprep.subr.mxu0 0.0
        %1452 = vmatpush1.msra.mxu0 0.0
        %1453 = vmatprep.subr.mxu0 0.0
        %1454 = vmatpush1.msra.mxu0 0.0
        %1455 = vmatprep.subr.mxu0 0.0
        %1456 = vmatpush1.msra.mxu0 0.0
        %1457 = vmatprep.subr.mxu0 0.0
        %1458 = vmatpush1.msra.mxu0 0.0
        %1459 = vmatprep.subr.mxu0 0.0
        %1460 = vmatpush1.msra.mxu0 0.0
        %1461 = vmatprep.subr.mxu0 0.0
        %1462 = vmatpush1.msra.mxu0 0.0
        %1463 = vmatprep.subr.mxu0 0.0
        %1464 = vmatpush1.msra.mxu0 0.0
        %1465 = vmatprep.subr.mxu0 0.0
        %1466 = vmatpush1.msra.mxu0 0.0
        %1467 = vmatprep.subr.mxu0 0.0
        %1468 = vmatpush1.msra.mxu0 0.0
        %1469 = vmatprep.subr.mxu0 0.0
        %1470 = vmatpush1.msra.mxu0 0.0
        %1471 = vmatprep.subr.mxu0 0.0
        %1472 = vmatpush1.msra.mxu0 0.0
        %1473 = vmatprep.subr.mxu0 0.0
        %1474 = vmatpush1.msra.mxu0 0.0
        %1475 = vmatprep.subr.mxu0 0.0
        %1476 = vmatpush1.msra.mxu0 0.0
        %1477 = vmatprep.subr.mxu0 0.0
        %1478 = vmatpush1.msra.mxu0 0.0
        %1479 = vmatprep.subr.mxu0 0.0
        %1480 = vmatpush1.msra.mxu0 0.0
        %1481 = vmatprep.mubr.f32.mxu0 0.0
        %1482 = vmatmul.mubr.f32.gmra.mrb[0].mxu0 %v1394
        %v1483 = vpop.f32.mrb[0].mxu0
        %v1484 = vadd.f32 %v1391, %v1483
        %v1485 = vpop.f32.mrb[0].mxu0
        %1486 = vmatprep.mubr.f32.mxu0 0.0
        %1487 = vmatmul.mubr.f32.gmra.mrb[0].mxu0 %v1397
        %v1488 = vpop.f32.mrb[0].mxu0
        %v1489 = vadd.f32 %v1391, %v1488
        %v1490 = vpop.f32.mrb[0].mxu0
        %1491 = vmatprep.mubr.f32.mxu0 0.0
        %1492 = vmatmul.mubr.f32.gmra.mrb[0].mxu0 %v1400
        %v1493 = vpop.f32.mrb[0].mxu0
        %v1494 = vadd.f32 %v1391, %v1493
        %v1495 = vpop.f32.mrb[0].mxu0
        %1496 = vmatprep.mubr.f32.mxu0 0.0
        %1497 = vmatmul.mubr.f32.gmra.mrb[0].mxu0 %v1403
        %v1498 = vpop.f32.mrb[0].mxu0
        %v1499 = vadd.f32 %v1391, %v1498
        %v1500 = vpop.f32.mrb[0].mxu0
        %1501 = vmatprep.mubr.f32.mxu0 0.0
        %1502 = vmatmul.mubr.f32.gmra.mrb[0].mxu0 %v1406
        %v1503 = vpop.f32.mrb[0].mxu0
        %v1504 = vadd.f32 %v1391, %v1503
        %v1505 = vpop.f32.mrb[0].mxu0
        %1506 = vmatprep.mubr.f32.mxu0 0.0
        %1507 = vmatmul.mubr.f32.gmra.mrb[0].mxu0 %v1409
        %v1508 = vpop.f32.mrb[0].mxu0
        %v1509 = vadd.f32 %v1391, %v1508
        %v1510 = vpop.f32.mrb[0].mxu0
        %1511 = vmatprep.mubr.f32.mxu0 0.0
        %1512 = vmatmul.mubr.f32.gmra.mrb[0].mxu0 %v1412
        %v1513 = vpop.f32.mrb[0].mxu0
        %v1514 = vadd.f32 %v1391, %v1513
        %v1515 = vpop.f32.mrb[0].mxu0
        %1516 = vmatprep.mubr.f32.mxu0 0.0
        %1517 = vmatmul.mubr.f32.gmra.mrb[0].mxu0 %v1415
        %v1518 = vpop.f32.mrb[0].mxu0
        %v1519 = vadd.f32 %v1391, %v1518
        %v1520 = vpop.f32.mrb[0].mxu0
        %1521 = vdwg.mxu0
        %v1522 = vxor.u32 %v1484, 2147483648
        %v1523 = vxor.u32 %v1489, 2147483648
        %v1524 = vxor.u32 %v1494, 2147483648
        %v1525 = vxor.u32 %v1499, 2147483648
        %v1526 = vxor.u32 %v1504, 2147483648
        %v1527 = vxor.u32 %v1509, 2147483648
        %v1528 = vxor.u32 %v1514, 2147483648
        %v1529 = vxor.u32 %v1519, 2147483648
        %v1530 = vmul.f32 %v1522, 1.442695
        %v1531 = vpow.pop %v1530
        %v1532 = vmul.f32 %v1523, 1.442695
        %v1533 = vpow.pop %v1532
        %v1534 = vmul.f32 %v1524, 1.442695
        %v1535 = vpow.pop %v1534
        %v1536 = vmul.f32 %v1525, 1.442695
        %v1537 = vpow.pop %v1536
        %v1538 = vmul.f32 %v1526, 1.442695
        %v1539 = vpow.pop %v1538
        %v1540 = vmul.f32 %v1527, 1.442695
        %v1541 = vpow.pop %v1540
        %v1542 = vmul.f32 %v1528, 1.442695
        %v1543 = vpow.pop %v1542
        %v1544 = vmul.f32 %v1529, 1.442695
        %v1545 = vpow.pop %v1544
        %v1546 = vadd.f32 %v1531, 1.0
        %v1547 = vadd.f32 %v1533, 1.0
        %v1548 = vadd.f32 %v1535, 1.0
        %v1549 = vadd.f32 %v1537, 1.0
        %v1550 = vadd.f32 %v1539, 1.0
        %v1551 = vadd.f32 %v1541, 1.0
        %v1552 = vadd.f32 %v1543, 1.0
        %v1553 = vadd.f32 %v1545, 1.0
        %v1554 = vrcp.pop %v1546
        %v1555 = vmul.f32 1.0, %v1554
        %v1556 = vrcp.pop %v1547
        %v1557 = vmul.f32 1.0, %v1556
        %v1558 = vrcp.pop %v1548
        %v1559 = vmul.f32 1.0, %v1558
        %v1560 = vrcp.pop %v1549
        %v1561 = vmul.f32 1.0, %v1560
        %v1562 = vrcp.pop %v1550
        %v1563 = vmul.f32 1.0, %v1562
        %v1564 = vrcp.pop %v1551
        %v1565 = vmul.f32 1.0, %v1564
        %v1566 = vrcp.pop %v1552
        %v1567 = vmul.f32 1.0, %v1566
        %v1568 = vrcp.pop %v1553
        %v1569 = vmul.f32 1.0, %v1568
        %v1570 = vmul.f32 %v1484, %v1555
        %v1571 = vmul.f32 %v1489, %v1557
        %v1572 = vmul.f32 %v1494, %v1559
        %v1573 = vmul.f32 %v1499, %v1561
        %v1574 = vmul.f32 %v1504, %v1563
        %v1575 = vmul.f32 %v1509, %v1565
        %v1576 = vmul.f32 %v1514, %v1567
        %v1577 = vmul.f32 %v1519, %v1569
        %vm1578 = vcmask 785408
        %1579 = vst.msk [vmem:[#allocation3] sm:$0xff] %vm1578, 0.0
        %vm1580 = vcmask 779264
        %1581 = vst.msk [vmem:[#allocation3 + $0x8] sm:$0x3] %vm1580, 0.0
        %1582 = vst.msk [vmem:[#allocation3 + $0x10] sm:$0xff] %vm1578, 0.0
        %1583 = vst.msk [vmem:[#allocation3 + $0x18] sm:$0x3] %vm1580, 0.0
        %1584 = vst.msk [vmem:[#allocation3 + $0x20] sm:$0xff] %vm1578, 0.0
        %1585 = vst.msk [vmem:[#allocation3 + $0x28] sm:$0x3] %vm1580, 0.0
        %1586 = vst.msk [vmem:[#allocation3 + $0x30] sm:$0xff] %vm1578, 0.0
        %1587 = vst.msk [vmem:[#allocation3 + $0x38] sm:$0x3] %vm1580, 0.0
        %1588 = vst.msk [vmem:[#allocation3 + $0x40] sm:$0xff] %vm1578, 0.0
        %1589 = vst.msk [vmem:[#allocation3 + $0x48] sm:$0x3] %vm1580, 0.0
        %1590 = vst.msk [vmem:[#allocation3 + $0x50] sm:$0xff] %vm1578, 0.0
        %1591 = vst.msk [vmem:[#allocation3 + $0x58] sm:$0x3] %vm1580, 0.0
        %1592 = vst.msk [vmem:[#allocation3 + $0x60] sm:$0xff] %vm1578, 0.0
        %1593 = vst.msk [vmem:[#allocation3 + $0x68] sm:$0x3] %vm1580, 0.0
        %1594 = vst.msk [vmem:[#allocation3 + $0x70] sm:$0xff] %vm1578, 0.0
        %1595 = vst.msk [vmem:[#allocation3 + $0x78] sm:$0x3] %vm1580, 0.0
        %1596 = vst.msk [vmem:[#allocation3 + $0x80] sm:$0xff] %vm1578, 0.0
        %1597 = vst.msk [vmem:[#allocation3 + $0x88] sm:$0x3] %vm1580, 0.0
        %1598 = vst.msk [vmem:[#allocation3 + $0x90] sm:$0xff] %vm1578, 0.0
        %1599 = vst.msk [vmem:[#allocation3 + $0x98] sm:$0x3] %vm1580, 0.0
        %1600 = vst.msk [vmem:[#allocation3] sm:$0xff] %vm1578, %v1570
        %1601 = vst.msk [vmem:[#allocation3 + $0x10] sm:$0xff] %vm1578, %v1571
        %1602 = vst.msk [vmem:[#allocation3 + $0x20] sm:$0xff] %vm1578, %v1572
        %1603 = vst.msk [vmem:[#allocation3 + $0x30] sm:$0xff] %vm1578, %v1573
        %1604 = vst.msk [vmem:[#allocation3 + $0x40] sm:$0xff] %vm1578, %v1574
        %1605 = vst.msk [vmem:[#allocation3 + $0x50] sm:$0xff] %vm1578, %v1575
        %1606 = vst.msk [vmem:[#allocation3 + $0x60] sm:$0xff] %vm1578, %v1576
        %1607 = vst.msk [vmem:[#allocation3 + $0x70] sm:$0xff] %vm1578, %v1577
        %v1608 = vld [vmem:[%s11] sm:$0xff]
        %v1609 = vld [vmem:[%s11 + $0x8] sm:$0x1]
        %v1610 = vld [vmem:[#allocation3] sm:$0xff]
        %v1611 = vld [vmem:[#allocation3 + $0x10] sm:$0xff]
        %v1612 = vld [vmem:[#allocation3 + $0x20] sm:$0xff]
        %v1613 = vld [vmem:[#allocation3 + $0x30] sm:$0xff]
        %v1614 = vld [vmem:[#allocation3 + $0x40] sm:$0xff]
        %v1615 = vld [vmem:[#allocation3 + $0x50] sm:$0xff]
        %v1616 = vld [vmem:[#allocation3 + $0x60] sm:$0xff]
        %v1617 = vld [vmem:[#allocation3 + $0x70] sm:$0xff]
        %v1618 = vlaneseq
        %v1619 = vshrl.u32 %v1618, 7
        %v1620 = vsub.s32 0, %v1619
        %v1621 = vrot.slane %v1608, %v1620
        %v1622 = vmul.f32 %v1610, %v1621
        %v1623 = vmul.f32 %v1611, %v1621
        %v1624 = vmul.f32 %v1612, %v1621
        %v1625 = vmul.f32 %v1613, %v1621
        %v1626 = vmul.f32 %v1614, %v1621
        %v1627 = vmul.f32 %v1615, %v1621
        %v1628 = vmul.f32 %v1616, %v1621
        %v1629 = vmul.f32 %v1617, %v1621
        %v1630 = vld [vmem:[#allocation3 + $0x1] sm:$0xff]
        %v1631 = vld [vmem:[#allocation3 + $0x11] sm:$0xff]
        %v1632 = vld [vmem:[#allocation3 + $0x21] sm:$0xff]
        %v1633 = vld [vmem:[#allocation3 + $0x31] sm:$0xff]
        %v1634 = vld [vmem:[#allocation3 + $0x41] sm:$0xff]
        %v1635 = vld [vmem:[#allocation3 + $0x51] sm:$0xff]
        %v1636 = vld [vmem:[#allocation3 + $0x61] sm:$0xff]
        %v1637 = vld [vmem:[#allocation3 + $0x71] sm:$0xff]
        %v1638 = vlaneseq
        %v1639 = vshrl.u32 %v1638, 7
        %v1640 = vsub.s32 1, %v1639
        %v1641 = vrot.slane %v1608, %v1640
        %v1642 = vmul.f32 %v1630, %v1641
        %v1643 = vmul.f32 %v1631, %v1641
        %v1644 = vmul.f32 %v1632, %v1641
        %v1645 = vmul.f32 %v1633, %v1641
        %v1646 = vmul.f32 %v1634, %v1641
        %v1647 = vmul.f32 %v1635, %v1641
        %v1648 = vmul.f32 %v1636, %v1641
        %v1649 = vmul.f32 %v1637, %v1641
        %v1650 = vadd.f32 %v1622, %v1642
        %v1651 = vadd.f32 %v1623, %v1643
        %v1652 = vadd.f32 %v1624, %v1644
        %v1653 = vadd.f32 %v1625, %v1645
        %v1654 = vadd.f32 %v1626, %v1646
        %v1655 = vadd.f32 %v1627, %v1647
        %v1656 = vadd.f32 %v1628, %v1648
        %v1657 = vadd.f32 %v1629, %v1649
        %v1658 = vld [vmem:[#allocation3 + $0x2] sm:$0xff]
        %v1659 = vld [vmem:[#allocation3 + $0x12] sm:$0xff]
        %v1660 = vld [vmem:[#allocation3 + $0x22] sm:$0xff]
        %v1661 = vld [vmem:[#allocation3 + $0x32] sm:$0xff]
        %v1662 = vld [vmem:[#allocation3 + $0x42] sm:$0xff]
        %v1663 = vld [vmem:[#allocation3 + $0x52] sm:$0xff]
        %v1664 = vld [vmem:[#allocation3 + $0x62] sm:$0xff]
        %v1665 = vld [vmem:[#allocation3 + $0x72] sm:$0xff]
        %v1666 = vlaneseq
        %v1667 = vshrl.u32 %v1666, 7
        %v1668 = vsub.s32 2, %v1667
        %v1669 = vrot.slane %v1608, %v1668
        %v1670 = vmul.f32 %v1658, %v1669
        %v1671 = vmul.f32 %v1659, %v1669
        %v1672 = vmul.f32 %v1660, %v1669
        %v1673 = vmul.f32 %v1661, %v1669
        %v1674 = vmul.f32 %v1662, %v1669
        %v1675 = vmul.f32 %v1663, %v1669
        %v1676 = vmul.f32 %v1664, %v1669
        %v1677 = vmul.f32 %v1665, %v1669
        %v1678 = vadd.f32 %v1650, %v1670
        %v1679 = vadd.f32 %v1651, %v1671
        %v1680 = vadd.f32 %v1652, %v1672
        %v1681 = vadd.f32 %v1653, %v1673
        %v1682 = vadd.f32 %v1654, %v1674
        %v1683 = vadd.f32 %v1655, %v1675
        %v1684 = vadd.f32 %v1656, %v1676
        %v1685 = vadd.f32 %v1657, %v1677
        %s1686 = scalar_lea.vmem [#allocation3], 16
        %v1687 = vld [vmem:[%s1686] sm:$0xff]
        %v1688 = vld [vmem:[%s1686 + $0x10] sm:$0xff]
        %v1689 = vld [vmem:[%s1686 + $0x20] sm:$0xff]
        %v1690 = vld [vmem:[%s1686 + $0x30] sm:$0xff]
        %v1691 = vld [vmem:[%s1686 + $0x40] sm:$0xff]
        %v1692 = vld [vmem:[%s1686 + $0x50] sm:$0xff]
        %v1693 = vld [vmem:[%s1686 + $0x60] sm:$0xff]
        %v1694 = vld [vmem:[%s1686 + $0x70] sm:$0xff]
        %v1695 = vlaneseq
        %v1696 = vshrl.u32 %v1695, 7
        %v1697 = vsub.s32 3, %v1696
        %v1698 = vrot.slane %v1608, %v1697
        %v1699 = vmul.f32 %v1687, %v1698
        %v1700 = vmul.f32 %v1688, %v1698
        %v1701 = vmul.f32 %v1689, %v1698
        %v1702 = vmul.f32 %v1690, %v1698
        %v1703 = vmul.f32 %v1691, %v1698
        %v1704 = vmul.f32 %v1692, %v1698
        %v1705 = vmul.f32 %v1693, %v1698
        %v1706 = vmul.f32 %v1694, %v1698
        %v1707 = vadd.f32 %v1678, %v1699
        %v1708 = vadd.f32 %v1679, %v1700
        %v1709 = vadd.f32 %v1680, %v1701
        %v1710 = vadd.f32 %v1681, %v1702
        %v1711 = vadd.f32 %v1682, %v1703
        %v1712 = vadd.f32 %v1683, %v1704
        %v1713 = vadd.f32 %v1684, %v1705
        %v1714 = vadd.f32 %v1685, %v1706
        %v1715 = vld [vmem:[%s1686 + $0x1] sm:$0xff]
        %v1716 = vld [vmem:[%s1686 + $0x11] sm:$0xff]
        %v1717 = vld [vmem:[%s1686 + $0x21] sm:$0xff]
        %v1718 = vld [vmem:[%s1686 + $0x31] sm:$0xff]
        %v1719 = vld [vmem:[%s1686 + $0x41] sm:$0xff]
        %v1720 = vld [vmem:[%s1686 + $0x51] sm:$0xff]
        %v1721 = vld [vmem:[%s1686 + $0x61] sm:$0xff]
        %v1722 = vld [vmem:[%s1686 + $0x71] sm:$0xff]
        %v1723 = vlaneseq
        %v1724 = vshrl.u32 %v1723, 7
        %v1725 = vsub.s32 4, %v1724
        %v1726 = vrot.slane %v1608, %v1725
        %v1727 = vmul.f32 %v1715, %v1726
        %v1728 = vmul.f32 %v1716, %v1726
        %v1729 = vmul.f32 %v1717, %v1726
        %v1730 = vmul.f32 %v1718, %v1726
        %v1731 = vmul.f32 %v1719, %v1726
        %v1732 = vmul.f32 %v1720, %v1726
        %v1733 = vmul.f32 %v1721, %v1726
        %v1734 = vmul.f32 %v1722, %v1726
        %v1735 = vadd.f32 %v1707, %v1727
        %v1736 = vadd.f32 %v1708, %v1728
        %v1737 = vadd.f32 %v1709, %v1729
        %v1738 = vadd.f32 %v1710, %v1730
        %v1739 = vadd.f32 %v1711, %v1731
        %v1740 = vadd.f32 %v1712, %v1732
        %v1741 = vadd.f32 %v1713, %v1733
        %v1742 = vadd.f32 %v1714, %v1734
        %v1743 = vld [vmem:[%s1686 + $0x2] sm:$0xff]
        %v1744 = vld [vmem:[%s1686 + $0x12] sm:$0xff]
        %v1745 = vld [vmem:[%s1686 + $0x22] sm:$0xff]
        %v1746 = vld [vmem:[%s1686 + $0x32] sm:$0xff]
        %v1747 = vld [vmem:[%s1686 + $0x42] sm:$0xff]
        %v1748 = vld [vmem:[%s1686 + $0x52] sm:$0xff]
        %v1749 = vld [vmem:[%s1686 + $0x62] sm:$0xff]
        %v1750 = vld [vmem:[%s1686 + $0x72] sm:$0xff]
        %v1751 = vlaneseq
        %v1752 = vshrl.u32 %v1751, 7
        %v1753 = vsub.s32 5, %v1752
        %v1754 = vrot.slane %v1608, %v1753
        %v1755 = vmul.f32 %v1743, %v1754
        %v1756 = vmul.f32 %v1744, %v1754
        %v1757 = vmul.f32 %v1745, %v1754
        %v1758 = vmul.f32 %v1746, %v1754
        %v1759 = vmul.f32 %v1747, %v1754
        %v1760 = vmul.f32 %v1748, %v1754
        %v1761 = vmul.f32 %v1749, %v1754
        %v1762 = vmul.f32 %v1750, %v1754
        %v1763 = vadd.f32 %v1735, %v1755
        %v1764 = vadd.f32 %v1736, %v1756
        %v1765 = vadd.f32 %v1737, %v1757
        %v1766 = vadd.f32 %v1738, %v1758
        %v1767 = vadd.f32 %v1739, %v1759
        %v1768 = vadd.f32 %v1740, %v1760
        %v1769 = vadd.f32 %v1741, %v1761
        %v1770 = vadd.f32 %v1742, %v1762
        %s1771 = scalar_lea.vmem [#allocation3], 32
        %v1772 = vld [vmem:[%s1771] sm:$0xff]
        %v1773 = vld [vmem:[%s1771 + $0x10] sm:$0xff]
        %v1774 = vld [vmem:[%s1771 + $0x20] sm:$0xff]
        %v1775 = vld [vmem:[%s1771 + $0x30] sm:$0xff]
        %v1776 = vld [vmem:[%s1771 + $0x40] sm:$0xff]
        %v1777 = vld [vmem:[%s1771 + $0x50] sm:$0xff]
        %v1778 = vld [vmem:[%s1771 + $0x60] sm:$0xff]
        %v1779 = vld [vmem:[%s1771 + $0x70] sm:$0xff]
        %v1780 = vlaneseq
        %v1781 = vshrl.u32 %v1780, 7
        %v1782 = vsub.s32 6, %v1781
        %v1783 = vrot.slane %v1608, %v1782
        %v1784 = vmul.f32 %v1772, %v1783
        %v1785 = vmul.f32 %v1773, %v1783
        %v1786 = vmul.f32 %v1774, %v1783
        %v1787 = vmul.f32 %v1775, %v1783
        %v1788 = vmul.f32 %v1776, %v1783
        %v1789 = vmul.f32 %v1777, %v1783
        %v1790 = vmul.f32 %v1778, %v1783
        %v1791 = vmul.f32 %v1779, %v1783
        %v1792 = vadd.f32 %v1763, %v1784
        %v1793 = vadd.f32 %v1764, %v1785
        %v1794 = vadd.f32 %v1765, %v1786
        %v1795 = vadd.f32 %v1766, %v1787
        %v1796 = vadd.f32 %v1767, %v1788
        %v1797 = vadd.f32 %v1768, %v1789
        %v1798 = vadd.f32 %v1769, %v1790
        %v1799 = vadd.f32 %v1770, %v1791
        %v1800 = vld [vmem:[%s1771 + $0x1] sm:$0xff]
        %v1801 = vld [vmem:[%s1771 + $0x11] sm:$0xff]
        %v1802 = vld [vmem:[%s1771 + $0x21] sm:$0xff]
        %v1803 = vld [vmem:[%s1771 + $0x31] sm:$0xff]
        %v1804 = vld [vmem:[%s1771 + $0x41] sm:$0xff]
        %v1805 = vld [vmem:[%s1771 + $0x51] sm:$0xff]
        %v1806 = vld [vmem:[%s1771 + $0x61] sm:$0xff]
        %v1807 = vld [vmem:[%s1771 + $0x71] sm:$0xff]
        %v1808 = vlaneseq
        %v1809 = vshrl.u32 %v1808, 7
        %v1810 = vsub.s32 7, %v1809
        %v1811 = vrot.slane %v1608, %v1810
        %v1812 = vmul.f32 %v1800, %v1811
        %v1813 = vmul.f32 %v1801, %v1811
        %v1814 = vmul.f32 %v1802, %v1811
        %v1815 = vmul.f32 %v1803, %v1811
        %v1816 = vmul.f32 %v1804, %v1811
        %v1817 = vmul.f32 %v1805, %v1811
        %v1818 = vmul.f32 %v1806, %v1811
        %v1819 = vmul.f32 %v1807, %v1811
        %v1820 = vadd.f32 %v1792, %v1812
        %v1821 = vadd.f32 %v1793, %v1813
        %v1822 = vadd.f32 %v1794, %v1814
        %v1823 = vadd.f32 %v1795, %v1815
        %v1824 = vadd.f32 %v1796, %v1816
        %v1825 = vadd.f32 %v1797, %v1817
        %v1826 = vadd.f32 %v1798, %v1818
        %v1827 = vadd.f32 %v1799, %v1819
        %v1828 = vld [vmem:[%s1771 + $0x2] sm:$0xff]
        %v1829 = vld [vmem:[%s1771 + $0x12] sm:$0xff]
        %v1830 = vld [vmem:[%s1771 + $0x22] sm:$0xff]
        %v1831 = vld [vmem:[%s1771 + $0x32] sm:$0xff]
        %v1832 = vld [vmem:[%s1771 + $0x42] sm:$0xff]
        %v1833 = vld [vmem:[%s1771 + $0x52] sm:$0xff]
        %v1834 = vld [vmem:[%s1771 + $0x62] sm:$0xff]
        %v1835 = vld [vmem:[%s1771 + $0x72] sm:$0xff]
        %v1836 = vlaneseq
        %v1837 = vshrl.u32 %v1836, 7
        %v1838 = vsub.s32 0, %v1837
        %v1839 = vrot.slane %v1609, %v1838
        %v1840 = vmul.f32 %v1828, %v1839
        %v1841 = vmul.f32 %v1829, %v1839
        %v1842 = vmul.f32 %v1830, %v1839
        %v1843 = vmul.f32 %v1831, %v1839
        %v1844 = vmul.f32 %v1832, %v1839
        %v1845 = vmul.f32 %v1833, %v1839
        %v1846 = vmul.f32 %v1834, %v1839
        %v1847 = vmul.f32 %v1835, %v1839
        %v1848 = vadd.f32 %v1820, %v1840
        %v1849 = vadd.f32 %v1821, %v1841
        %v1850 = vadd.f32 %v1822, %v1842
        %v1851 = vadd.f32 %v1823, %v1843
        %v1852 = vadd.f32 %v1824, %v1844
        %v1853 = vadd.f32 %v1825, %v1845
        %v1854 = vadd.f32 %v1826, %v1846
        %v1855 = vadd.f32 %v1827, %v1847
        %v1856 = vld [vmem:[%s13] sm:$0xff]
        %v1857 = vld [vmem:[%s13 + $0x8] sm:$0xff]
        %v1858 = vld [vmem:[%s12] sm:$0x1]
        %v1860 = vlaneseq
        %v1861 = vshrl.u32 %v1860, 7
        %v1862 = vsub.s32 0, %v1861
        %v1863 = vrot.slane %v1858, %v1862
        %vm1865 = vcmask 523264
        %v1867 = vsel %vm1865, %v1856, 0
        %v1870 = vsel %vm1865, %v1857, 0
        %1872 = vmatprep.subr.mxu0 0.0
        %1873 = vmatpush1.msra.mxu0 %v1848
        %1874 = vmatprep.subr.mxu0 0.0
        %1875 = vmatpush1.msra.mxu0 %v1849
        %1876 = vmatprep.subr.mxu0 0.0
        %1877 = vmatpush1.msra.mxu0 %v1850
        %1878 = vmatprep.subr.mxu0 0.0
        %1879 = vmatpush1.msra.mxu0 %v1851
        %1880 = vmatprep.subr.mxu0 0.0
        %1881 = vmatpush1.msra.mxu0 %v1852
        %1882 = vmatprep.subr.mxu0 0.0
        %1883 = vmatpush1.msra.mxu0 %v1853
        %1884 = vmatprep.subr.mxu0 0.0
        %1885 = vmatpush1.msra.mxu0 %v1854
        %1886 = vmatprep.subr.mxu0 0.0
        %1887 = vmatpush1.msra.mxu0 %v1855
        %1888 = vmatprep.subr.mxu0 0.0
        %1889 = vmatpush1.msra.mxu0 0.0
        %1890 = vmatprep.subr.mxu0 0.0
        %1891 = vmatpush1.msra.mxu0 0.0
        %1892 = vmatprep.subr.mxu0 0.0
        %1893 = vmatpush1.msra.mxu0 0.0
        %1894 = vmatprep.subr.mxu0 0.0
        %1895 = vmatpush1.msra.mxu0 0.0
        %1896 = vmatprep.subr.mxu0 0.0
        %1897 = vmatpush1.msra.mxu0 0.0
        %1898 = vmatprep.subr.mxu0 0.0
        %1899 = vmatpush1.msra.mxu0 0.0
        %1900 = vmatprep.subr.mxu0 0.0
        %1901 = vmatpush1.msra.mxu0 0.0
        %1902 = vmatprep.subr.mxu0 0.0
        %1903 = vmatpush1.msra.mxu0 0.0
        %1904 = vmatprep.subr.mxu0 0.0
        %1905 = vmatpush1.msra.mxu0 0.0
        %1906 = vmatprep.subr.mxu0 0.0
        %1907 = vmatpush1.msra.mxu0 0.0
        %1908 = vmatprep.subr.mxu0 0.0
        %1909 = vmatpush1.msra.mxu0 0.0
        %1910 = vmatprep.subr.mxu0 0.0
        %1911 = vmatpush1.msra.mxu0 0.0
        %1912 = vmatprep.subr.mxu0 0.0
        %1913 = vmatpush1.msra.mxu0 0.0
        %1914 = vmatprep.subr.mxu0 0.0
        %1915 = vmatpush1.msra.mxu0 0.0
        %1916 = vmatprep.subr.mxu0 0.0
        %1917 = vmatpush1.msra.mxu0 0.0
        %1918 = vmatprep.subr.mxu0 0.0
        %1919 = vmatpush1.msra.mxu0 0.0
        %1920 = vmatprep.subr.mxu0 0.0
        %1921 = vmatpush1.msra.mxu0 0.0
        %1922 = vmatprep.subr.mxu0 0.0
        %1923 = vmatpush1.msra.mxu0 0.0
        %1924 = vmatprep.subr.mxu0 0.0
        %1925 = vmatpush1.msra.mxu0 0.0
        %1926 = vmatprep.subr.mxu0 0.0
        %1927 = vmatpush1.msra.mxu0 0.0
        %1928 = vmatprep.subr.mxu0 0.0
        %1929 = vmatpush1.msra.mxu0 0.0
        %1930 = vmatprep.subr.mxu0 0.0
        %1931 = vmatpush1.msra.mxu0 0.0
        %1932 = vmatprep.subr.mxu0 0.0
        %1933 = vmatpush1.msra.mxu0 0.0
        %1934 = vmatprep.subr.mxu0 0.0
        %1935 = vmatpush1.msra.mxu0 0.0
        %1936 = vmatprep.mubr.f32.mxu0 0.0
        %1937 = vmatmul.mubr.f32.gmra.mrb[0].mxu0 %v1867
        %v1938 = vpop.f32.mrb[0].mxu0
        %v1939 = vadd.f32 %v1863, %v1938
        %v1940 = vpop.f32.mrb[0].mxu0
        %1941 = vmatprep.mubr.f32.mxu0 0.0
        %1942 = vmatmul.mubr.f32.gmra.mrb[0].mxu0 %v1870
        %v1943 = vpop.f32.mrb[0].mxu0
        %v1944 = vadd.f32 %v1863, %v1943
        %v1945 = vpop.f32.mrb[0].mxu0
        %1946 = vdwg.mxu0
        %v1947 = vxor.u32 %v1939, 2147483648
        %v1948 = vxor.u32 %v1944, 2147483648
        %v1949 = vmul.f32 %v1947, 1.442695
        %v1950 = vpow.pop %v1949
        %v1951 = vmul.f32 %v1948, 1.442695
        %v1952 = vpow.pop %v1951
        %v1953 = vadd.f32 %v1950, 1.0
        %v1954 = vadd.f32 %v1952, 1.0
        %v1955 = vrcp.pop %v1953
        %v1956 = vmul.f32 1.0, %v1955
        %v1957 = vrcp.pop %v1954
        %v1958 = vmul.f32 1.0, %v1957
        %v1959 = vmul.f32 %v1939, %v1956
        %v1960 = vmul.f32 %v1944, %v1958
        %v1961 = vsel %vm1578, %v1959, 0.0
        %v1962 = vsel %vm1578, %v1960, 0.0
        %v1963 = vadd.f32 %v1961, %v1962
        %v1964 = vrot.slane %v1963, 4
        %v1965 = vadd.f32 %v1963, %v1964
        %v1966 = vrot.slane %v1965, 2
        %v1967 = vadd.f32 %v1965, %v1966
        %v1968 = vrot.slane %v1967, 1
        %v1969 = vadd.f32 %v1967, %v1968
        %v1970 = vmul.f32 %v1969, 0.0625
        %v1971 = vld [vmem:[%s14] sm:$0xff]
        %v1972 = vld [vmem:[%s14 + $0x8] sm:$0xff]
        %v1973 = vld [vmem:[%s14 + $0x10] sm:$0xff]
        %v1974 = vld [vmem:[%s14 + $0x18] sm:$0xff]
        %v1975 = vld [vmem:[%s14 + $0x20] sm:$0xff]
        %v1976 = vld [vmem:[%s14 + $0x28] sm:$0xff]
        %v1977 = vld [vmem:[%s14 + $0x30] sm:$0xff]
        %v1978 = vld [vmem:[%s14 + $0x38] sm:$0xff]
        %v1979 = vld [vmem:[%s14 + $0x40] sm:$0xff]
        %v1980 = vld [vmem:[%s14 + $0x48] sm:$0xff]
        %v1981 = vld [vmem:[%s14 + $0x50] sm:$0xff]
        %v1982 = vld [vmem:[%s14 + $0x58] sm:$0xff]
        %v1983 = vld [vmem:[%s15] sm:$0x1]
        %v1985 = vsel %vm1578, %v1970, 0
        %1987 = vmatprep.subr.mxu0 0.0
        %1988 = vmatpush1.msra.mxu0 %v1971
        %1989 = vmatprep.subr.mxu0 0.0
        %1990 = vmatpush1.msra.mxu0 %v1972
        %1991 = vmatprep.subr.mxu0 0.0
        %1992 = vmatpush1.msra.mxu0 %v1973
        %1993 = vmatprep.subr.mxu0 0.0
        %1994 = vmatpush1.msra.mxu0 %v1974
        %1995 = vmatprep.subr.mxu0 0.0
        %1996 = vmatpush1.msra.mxu0 %v1975
        %1997 = vmatprep.subr.mxu0 0.0
        %1998 = vmatpush1.msra.mxu0 %v1976
        %1999 = vmatprep.subr.mxu0 0.0
        %2000 = vmatpush1.msra.mxu0 %v1977
        %2001 = vmatprep.subr.mxu0 0.0
        %2002 = vmatpush1.msra.mxu0 %v1978
        %2003 = vmatprep.subr.mxu0 0.0
        %2004 = vmatpush1.msra.mxu0 %v1979
        %2005 = vmatprep.subr.mxu0 0.0
        %2006 = vmatpush1.msra.mxu0 %v1980
        %2007 = vmatprep.subr.mxu0 0.0
        %2008 = vmatpush1.msra.mxu0 %v1981
        %2009 = vmatprep.subr.mxu0 0.0
        %2010 = vmatpush1.msra.mxu0 %v1982
        %2011 = vmatprep.subr.mxu0 0.0
        %2012 = vmatpush1.msra.mxu0 0.0
        %2013 = vmatprep.subr.mxu0 0.0
        %2014 = vmatpush1.msra.mxu0 0.0
        %2015 = vmatprep.subr.mxu0 0.0
        %2016 = vmatpush1.msra.mxu0 0.0
        %2017 = vmatprep.subr.mxu0 0.0
        %2018 = vmatpush1.msra.mxu0 0.0
        %2019 = vmatprep.subr.mxu0 0.0
        %2020 = vmatpush1.msra.mxu0 0.0
        %2021 = vmatprep.subr.mxu0 0.0
        %2022 = vmatpush1.msra.mxu0 0.0
        %2023 = vmatprep.subr.mxu0 0.0
        %2024 = vmatpush1.msra.mxu0 0.0
        %2025 = vmatprep.subr.mxu0 0.0
        %2026 = vmatpush1.msra.mxu0 0.0
        %2027 = vmatprep.subr.mxu0 0.0
        %2028 = vmatpush1.msra.mxu0 0.0
        %2029 = vmatprep.subr.mxu0 0.0
        %2030 = vmatpush1.msra.mxu0 0.0
        %2031 = vmatprep.subr.mxu0 0.0
        %2032 = vmatpush1.msra.mxu0 0.0
        %2033 = vmatprep.subr.mxu0 0.0
        %2034 = vmatpush1.msra.mxu0 0.0
        %2035 = vmatprep.subr.mxu0 0.0
        %2036 = vmatpush1.msra.mxu0 0.0
        %2037 = vmatprep.subr.mxu0 0.0
        %2038 = vmatpush1.msra.mxu0 0.0
        %2039 = vmatprep.subr.mxu0 0.0
        %2040 = vmatpush1.msra.mxu0 0.0
        %2041 = vmatprep.subr.mxu0 0.0
        %2042 = vmatpush1.msra.mxu0 0.0
        %2043 = vmatprep.subr.mxu0 0.0
        %2044 = vmatpush1.msra.mxu0 0.0
        %2045 = vmatprep.subr.mxu0 0.0
        %2046 = vmatpush1.msra.mxu0 0.0
        %2047 = vmatprep.subr.mxu0 0.0
        %2048 = vmatpush1.msra.mxu0 0.0
        %2049 = vmatprep.subr.mxu0 0.0
        %2050 = vmatpush1.msra.mxu0 0.0
        %2051 = vmatprep.mubr.f32.mxu0 0.0
        %2052 = vmatmul.mubr.f32.gmra.mrb[0].mxu0 %v1985
        %v2053 = vpop.f32.mrb[0].mxu0
        %v2054 = vadd.f32 %v1983, %v2053
        %v2055 = vpop.f32.mrb[0].mxu0
        %2056 = vdwg.mxu0
        %v2057 = vxor.u32 %v2054, 2147483648
        %v2058 = vmul.f32 %v2057, 1.442695
        %v2059 = vpow.pop %v2058
        %v2060 = vadd.f32 %v2059, 1.0
        %v2061 = vrcp.pop %v2060
        %v2062 = vmul.f32 1.0, %v2061
        %v2063 = vmul.f32 %v2054, %v2062
        %v2064 = vld [vmem:[%s16] sm:$0xff]
        %v2065 = vld [vmem:[%s17] sm:$0x1]
        %v2067 = vsel %vm1290, %v2063, 0
        %2069 = vmatprep.subr.mxu0 0.0
        %2070 = vmatpush1.msra.mxu0 %v2064
        %2071 = vmatprep.subr.mxu0 0.0
        %2072 = vmatpush1.msra.mxu0 0.0
        %2073 = vmatprep.subr.mxu0 0.0
        %2074 = vmatpush1.msra.mxu0 0.0
        %2075 = vmatprep.subr.mxu0 0.0
        %2076 = vmatpush1.msra.mxu0 0.0
        %2077 = vmatprep.subr.mxu0 0.0
        %2078 = vmatpush1.msra.mxu0 0.0
        %2079 = vmatprep.subr.mxu0 0.0
        %2080 = vmatpush1.msra.mxu0 0.0
        %2081 = vmatprep.subr.mxu0 0.0
        %2082 = vmatpush1.msra.mxu0 0.0
        %2083 = vmatprep.subr.mxu0 0.0
        %2084 = vmatpush1.msra.mxu0 0.0
        %2085 = vmatprep.subr.mxu0 0.0
        %2086 = vmatpush1.msra.mxu0 0.0
        %2087 = vmatprep.subr.mxu0 0.0
        %2088 = vmatpush1.msra.mxu0 0.0
        %2089 = vmatprep.subr.mxu0 0.0
        %2090 = vmatpush1.msra.mxu0 0.0
        %2091 = vmatprep.subr.mxu0 0.0
        %2092 = vmatpush1.msra.mxu0 0.0
        %2093 = vmatprep.subr.mxu0 0.0
        %2094 = vmatpush1.msra.mxu0 0.0
        %2095 = vmatprep.subr.mxu0 0.0
        %2096 = vmatpush1.msra.mxu0 0.0
        %2097 = vmatprep.subr.mxu0 0.0
        %2098 = vmatpush1.msra.mxu0 0.0
        %2099 = vmatprep.subr.mxu0 0.0
        %2100 = vmatpush1.msra.mxu0 0.0
        %2101 = vmatprep.subr.mxu0 0.0
        %2102 = vmatpush1.msra.mxu0 0.0
        %2103 = vmatprep.subr.mxu0 0.0
        %2104 = vmatpush1.msra.mxu0 0.0
        %2105 = vmatprep.subr.mxu0 0.0
        %2106 = vmatpush1.msra.mxu0 0.0
        %2107 = vmatprep.subr.mxu0 0.0
        %2108 = vmatpush1.msra.mxu0 0.0
        %2109 = vmatprep.subr.mxu0 0.0
        %2110 = vmatpush1.msra.mxu0 0.0
        %2111 = vmatprep.subr.mxu0 0.0
        %2112 = vmatpush1.msra.mxu0 0.0
        %2113 = vmatprep.subr.mxu0 0.0
        %2114 = vmatpush1.msra.mxu0 0.0
        %2115 = vmatprep.subr.mxu0 0.0
        %2116 = vmatpush1.msra.mxu0 0.0
        %2117 = vmatprep.subr.mxu0 0.0
        %2118 = vmatpush1.msra.mxu0 0.0
        %2119 = vmatprep.subr.mxu0 0.0
        %2120 = vmatpush1.msra.mxu0 0.0
        %2121 = vmatprep.subr.mxu0 0.0
        %2122 = vmatpush1.msra.mxu0 0.0
        %2123 = vmatprep.subr.mxu0 0.0
        %2124 = vmatpush1.msra.mxu0 0.0
        %2125 = vmatprep.subr.mxu0 0.0
        %2126 = vmatpush1.msra.mxu0 0.0
        %2127 = vmatprep.subr.mxu0 0.0
        %2128 = vmatpush1.msra.mxu0 0.0
        %2129 = vmatprep.subr.mxu0 0.0
        %2130 = vmatpush1.msra.mxu0 0.0
        %2131 = vmatprep.subr.mxu0 0.0
        %2132 = vmatpush1.msra.mxu0 0.0
        %2133 = vmatprep.mubr.f32.mxu0 0.0
        %2134 = vmatmul.mubr.f32.gmra.mrb[0].mxu0 %v2067
        %v2135 = vpop.f32.mrb[0].mxu0
        %v2136 = vadd.f32 %v2065, %v2135
        %v2137 = vpop.f32.mrb[0].mxu0
        %2138 = vdwg.mxu0
        %v2139 = vxor.u32 %v2136, 2147483648
        %v2140 = vmul.f32 %v2139, 1.442695
        %v2141 = vpow.pop %v2140
        %v2142 = vadd.f32 %v2141, 1.0
        %v2143 = vrcp.pop %v2142
        %v2144 = vmul.f32 1.0, %v2143
        %v2145 = vlaneseq
        %v2146 = vshrl.u32 %v2145, 7
        %v2147 = vsub.s32 0, %v2146
        %v2148 = vrot.slane %v2144, %v2147
        %v2149 = vmul.f32 %v1959, %v2148
        %v2150 = vmul.f32 %v1960, %v2148
        %v2151 = vld [vmem:[%s18] sm:$0xff]
        %v2152 = vld [vmem:[%s18 + $0x8] sm:$0xff]
        %v2153 = vld [vmem:[%s18 + $0x10] sm:$0xff]
        %v2154 = vld [vmem:[%s18 + $0x18] sm:$0xff]
        %v2155 = vld [vmem:[%s18 + $0x20] sm:$0xff]
        %v2156 = vld [vmem:[%s18 + $0x28] sm:$0xff]
        %v2157 = vld [vmem:[%s18 + $0x30] sm:$0xff]
        %v2158 = vld [vmem:[%s18 + $0x38] sm:$0xff]
        %v2159 = vld [vmem:[%s18 + $0x40] sm:$0xff]
        %v2160 = vld [vmem:[%s18 + $0x48] sm:$0xff]
        %v2161 = vld [vmem:[%s18 + $0x50] sm:$0xff]
        %v2162 = vld [vmem:[%s18 + $0x58] sm:$0xff]
        %v2163 = vld [vmem:[%s19] sm:$0x1]
        %v2165 = vlaneseq
        %v2166 = vshrl.u32 %v2165, 7
        %v2167 = vsub.s32 0, %v2166
        %v2168 = vrot.slane %v2163, %v2167
        %v2171 = vsel %vm1578, %v2149, 0
        %v2174 = vsel %vm1578, %v2150, 0
        %2176 = vmatprep.subr.mxu0 0.0
        %2177 = vmatpush1.msra.mxu0 %v2151
        %2178 = vmatprep.subr.mxu0 0.0
        %2179 = vmatpush1.msra.mxu0 %v2152
        %2180 = vmatprep.subr.mxu0 0.0
        %2181 = vmatpush1.msra.mxu0 %v2153
        %2182 = vmatprep.subr.mxu0 0.0
        %2183 = vmatpush1.msra.mxu0 %v2154
        %2184 = vmatprep.subr.mxu0 0.0
        %2185 = vmatpush1.msra.mxu0 %v2155
        %2186 = vmatprep.subr.mxu0 0.0
        %2187 = vmatpush1.msra.mxu0 %v2156
        %2188 = vmatprep.subr.mxu0 0.0
        %2189 = vmatpush1.msra.mxu0 %v2157
        %2190 = vmatprep.subr.mxu0 0.0
        %2191 = vmatpush1.msra.mxu0 %v2158
        %2192 = vmatprep.subr.mxu0 0.0
        %2193 = vmatpush1.msra.mxu0 %v2159
        %2194 = vmatprep.subr.mxu0 0.0
        %2195 = vmatpush1.msra.mxu0 %v2160
        %2196 = vmatprep.subr.mxu0 0.0
        %2197 = vmatpush1.msra.mxu0 %v2161
        %2198 = vmatprep.subr.mxu0 0.0
        %2199 = vmatpush1.msra.mxu0 %v2162
        %2200 = vmatprep.subr.mxu0 0.0
        %2201 = vmatpush1.msra.mxu0 0.0
        %2202 = vmatprep.subr.mxu0 0.0
        %2203 = vmatpush1.msra.mxu0 0.0
        %2204 = vmatprep.subr.mxu0 0.0
        %2205 = vmatpush1.msra.mxu0 0.0
        %2206 = vmatprep.subr.mxu0 0.0
        %2207 = vmatpush1.msra.mxu0 0.0
        %2208 = vmatprep.subr.mxu0 0.0
        %2209 = vmatpush1.msra.mxu0 0.0
        %2210 = vmatprep.subr.mxu0 0.0
        %2211 = vmatpush1.msra.mxu0 0.0
        %2212 = vmatprep.subr.mxu0 0.0
        %2213 = vmatpush1.msra.mxu0 0.0
        %2214 = vmatprep.subr.mxu0 0.0
        %2215 = vmatpush1.msra.mxu0 0.0
        %2216 = vmatprep.subr.mxu0 0.0
        %2217 = vmatpush1.msra.mxu0 0.0
        %2218 = vmatprep.subr.mxu0 0.0
        %2219 = vmatpush1.msra.mxu0 0.0
        %2220 = vmatprep.subr.mxu0 0.0
        %2221 = vmatpush1.msra.mxu0 0.0
        %2222 = vmatprep.subr.mxu0 0.0
        %2223 = vmatpush1.msra.mxu0 0.0
        %2224 = vmatprep.subr.mxu0 0.0
        %2225 = vmatpush1.msra.mxu0 0.0
        %2226 = vmatprep.subr.mxu0 0.0
        %2227 = vmatpush1.msra.mxu0 0.0
        %2228 = vmatprep.subr.mxu0 0.0
        %2229 = vmatpush1.msra.mxu0 0.0
        %2230 = vmatprep.subr.mxu0 0.0
        %2231 = vmatpush1.msra.mxu0 0.0
        %2232 = vmatprep.subr.mxu0 0.0
        %2233 = vmatpush1.msra.mxu0 0.0
        %2234 = vmatprep.subr.mxu0 0.0
        %2235 = vmatpush1.msra.mxu0 0.0
        %2236 = vmatprep.subr.mxu0 0.0
        %2237 = vmatpush1.msra.mxu0 0.0
        %2238 = vmatprep.subr.mxu0 0.0
        %2239 = vmatpush1.msra.mxu0 0.0
        %2240 = vmatprep.mubr.f32.mxu0 0.0
        %2241 = vmatmul.mubr.f32.gmra.mrb[0].mxu0 %v2171
        %v2242 = vpop.f32.mrb[0].mxu0
        %v2243 = vadd.f32 %v2168, %v2242
        %v2244 = vpop.f32.mrb[0].mxu0
        %2245 = vmatprep.mubr.f32.mxu0 0.0
        %2246 = vmatmul.mubr.f32.gmra.mrb[0].mxu0 %v2174
        %v2247 = vpop.f32.mrb[0].mxu0
        %v2248 = vadd.f32 %v2168, %v2247
        %v2249 = vpop.f32.mrb[0].mxu0
        %2250 = vdwg.mxu0
        %2251 = vst [vmem:[%s622] sm:$0xff] %v2243
        %2252 = vst [vmem:[%s622 + $0x8] sm:$0xff] %v2248
        %s2253 = sand.u32 %s467, 1
        %s2254 = scalar_lea.sflag [#allocation5], %s2253
        %s2255 = sand.u32 %s467, 1
        %s2256 = smul.addr %s2255, 16
        %s2257 = scalar_lea.vmem [#allocation4], %s2256
        // Predicated region
        $region101: #{headmodel_forward.1} parent=99 // pred_check
          %p2258 = pneg %p477
        $region102: #{headmodel_forward.1} parent=99 // pred_check_branch
          %2260 = sbr.rel (%p2258) target = $region104
        $region103: #{headmodel_forward.1} parent=99 // pred_region
          %s2262 = ssub.s32 256, 256
          %2263 = vsyncadd %s2254, %s2262
          %s2264 = smul.addr %s34, 2
          %s2265 = smul.addr %s2264, 128
          %s2266 = scalar_lea.hbm %s20, %s2265
          %s2267 = sshll.u32 %s2257, 4
          %s2268 = int_to_ptr.vmem [resolvable:$true] %s2267
          %2273 = dma.vmem_to_hbm [thread:$0]  %s2268, 256, %s2266, %s2254, 128, 128, 8
        $region104: #{headmodel_forward.1} parent=99 // pred_fallthru
          _
      $region100: #{headmodel_forward.1} parent=5 // pred_fallthru
        _
      %p2274 = scmp.le.s32.totalorder 2, %s29
      // Predicated region
      $region105: #{headmodel_forward.1} parent=5 // pred_check
        %p2275 = pneg %p2274
      $region106: #{headmodel_forward.1} parent=5 // pred_check_branch
        %2277 = sbr.rel (%p2275) target = $region108
      $region107: #{headmodel_forward.1} parent=5 // pred_region
        %s2278 = ssub.s32 %s29, 2
        // Predicated region
        $region109: #{headmodel_forward.1} parent=107 // pred_check
          %p2279 = pneg %p483
        $region110: #{headmodel_forward.1} parent=107 // pred_check_branch
          %2281 = sbr.rel (%p2279) target = $region112
        $region111: #{headmodel_forward.1} parent=107 // pred_region
          %s2282 = sand.u32 %s468, 1
          %s2283 = scalar_lea.sflag [#allocation5], %s2282
          %s2284 = sand.u32 %s468, 1
          %s2285 = smul.addr %s2284, 16
          %s2286 = scalar_lea.vmem [#allocation4], %s2285
          %2287 = dma.done %s2283, 256
        $region112: #{headmodel_forward.1} parent=107 // pred_fallthru
          _
      $region108: #{headmodel_forward.1} parent=5 // pred_fallthru
        _
    $region6: #{headmodel_forward.1} parent=1 // loop_footer
      %s33 = sadd.s32 1, %s29
    $region7: #{headmodel_forward.1} parent=1 // loop_footer_branch
      %28 = sbr.rel target = $region3
    $region8: #{headmodel_forward.1} parent=1 // loop_exit
      _
    %2288 = vsyncpa [#allocation5], 1
    %s2289 = scalar_lea.sflag [#allocation5], 1
    %2290 = vsyncpa %s2289, 1

</llo_original>
